<compile_context>
chip_gen: v7x
topology: tpu7x:2x2x1
jax: 0.10.0
libtpu: 0.0.40
codegen_flags: <defaults>
</compile_context>

<pallas_src>
import math

import jax
import jax.numpy as jnp
from jax import lax
from jax.experimental import pallas as pl
from jax.experimental.pallas import tpu as pltpu

F32 = jnp.float32
BF16 = jnp.bfloat16


# ----------------------------------------------------------------------------
# small helpers
# ----------------------------------------------------------------------------
def _round_up(n, m):
    return ((n + m - 1) // m) * m


def _pad_rows(x, mp):
    m = x.shape[0]
    if m == mp:
        return x
    return jnp.pad(x, ((0, mp - m),) + ((0, 0),) * (x.ndim - 1))


def _ln(x, g, b):
    # TODO(synk): eps=1e-12 follows the ESPnet/FunASR LayerNorm convention
    # (PyTorch nn.LayerNorm default is 1e-5).
    x = x.astype(F32)
    mu = jnp.mean(x, axis=-1, keepdims=True)
    xc = x - mu
    var = jnp.mean(xc * xc, axis=-1, keepdims=True)
    return xc * lax.rsqrt(var + 1e-12) * g + b


# ----------------------------------------------------------------------------
# row-tiled kernels (grid over M = B*T rows, weights resident, bf16 activations)
# ----------------------------------------------------------------------------
def _dense_kernel(x_ref, w_ref, b_ref, o_ref):
    o_ref[...] = (
        jnp.dot(x_ref[...].astype(BF16), w_ref[...], preferred_element_type=F32)
        + b_ref[...]
    ).astype(o_ref.dtype)


def _dense_res_kernel(x_ref, r_ref, w_ref, b_ref, o_ref):
    # residual + x @ w + b  (attention output projection fused with the residual add)
    o_ref[...] = (
        r_ref[...].astype(F32)
        + jnp.dot(x_ref[...].astype(BF16), w_ref[...], preferred_element_type=F32)
        + b_ref[...]
    ).astype(o_ref.dtype)


def _ln_kernel(x_ref, g_ref, b_ref, o_ref):
    o_ref[...] = _ln(x_ref[...], g_ref[...], b_ref[...]).astype(o_ref.dtype)


def _ln_ffn_kernel(x_ref, g_ref, b_ref, w1_ref, b1_ref, w2_ref, b2_ref, o_ref):
    # o = x + relu(ln(x) @ w1 + b1) @ w2 + b2     (pre-LN FFN block, fully fused)
    x = x_ref[...].astype(F32)
    h = _ln(x, g_ref[...], b_ref[...]).astype(BF16)
    h = jnp.dot(h, w1_ref[...], preferred_element_type=F32) + b1_ref[...]
    h = jnp.maximum(h, 0.0).astype(BF16)
    o_ref[...] = (
        x + jnp.dot(h, w2_ref[...], preferred_element_type=F32) + b2_ref[...]
    ).astype(o_ref.dtype)


def _make_ln_qkv_kernel(D, scale):
    def kernel(x_ref, g_ref, b_ref, w_ref, bias_ref, q_ref, k_ref, v_ref):
        # one (tm, D) x (D, 3D) matmul, result sliced into q/k/v (long-N keeps MXU fed)
        h = _ln(x_ref[...], g_ref[...], b_ref[...]).astype(BF16)
        qkv = jnp.dot(h, w_ref[...], preferred_element_type=F32) + bias_ref[...]
        q_ref[...] = (qkv[:, :D] * scale).astype(BF16)   # 1/sqrt(dh) folded into q
        k_ref[...] = qkv[:, D:2 * D].astype(BF16)
        v_ref[...] = qkv[:, 2 * D:].astype(BF16)

    return kernel


def _make_ln_q_kernel(scale):
    def kernel(x_ref, g_ref, b_ref, w_ref, bias_ref, q_ref):
        h = _ln(x_ref[...], g_ref[...], b_ref[...]).astype(BF16)
        q = jnp.dot(h, w_ref[...], preferred_element_type=F32) + bias_ref[...]
        q_ref[...] = (q * scale).astype(BF16)

    return kernel


def _make_kv_kernel(D):
    def kernel(x_ref, w_ref, bias_ref, k_ref, v_ref):
        xb = x_ref[...].astype(BF16)
        kv = jnp.dot(xb, w_ref[...], preferred_element_type=F32) + bias_ref[...]
        k_ref[...] = kv[:, :D].astype(BF16)
        v_ref[...] = kv[:, D:].astype(BF16)

    return kernel


def _row_call(kernel, m, row_ins, full_ins, out_widths, out_dtypes, tm_cap=512):
    """Row-tiled pallas_call: row_ins are [M, *] (tiled over rows), full_ins resident."""
    tm = min(tm_cap, _round_up(m, 16))
    mp = _round_up(m, tm)
    row_ins = [_pad_rows(a, mp) for a in row_ins]

    def tiled_spec(a):
        nd = a.ndim
        return pl.BlockSpec((tm,) + a.shape[1:], lambda i, _nd=nd: (i,) + (0,) * (_nd - 1))

    def full_spec(a):
        nd = a.ndim
        return pl.BlockSpec(a.shape, lambda i, _nd=nd: (0,) * _nd)

    outs = pl.pallas_call(
        kernel,
        grid_spec=pltpu.PrefetchScalarGridSpec(
            num_scalar_prefetch=0,
            grid=(mp // tm,),
            in_specs=[tiled_spec(a) for a in row_ins] + [full_spec(a) for a in full_ins],
            out_specs=[pl.BlockSpec((tm, w), lambda i: (i, 0)) for w in out_widths],
        ),
        out_shape=[jax.ShapeDtypeStruct((mp, w), dt) for w, dt in zip(out_widths, out_dtypes)],
        compiler_params=pltpu.CompilerParams(dimension_semantics=("parallel",)),
    )(*row_ins, *full_ins)
    return [o[:m] for o in outs]


def dense(x2d, w_bf16, b):
    n = w_bf16.shape[1]
    return _row_call(_dense_kernel, x2d.shape[0], [x2d],
                     [w_bf16, b.reshape(1, n)], [n], [BF16])[0]


def dense_residual(x2d, res2d, w_bf16, b):
    n = w_bf16.shape[1]
    return _row_call(_dense_res_kernel, res2d.shape[0], [x2d, res2d],
                     [w_bf16, b.reshape(1, n)], [n], [BF16])[0]


def layernorm(x2d, g, b):
    d = x2d.shape[1]
    return _row_call(_ln_kernel, x2d.shape[0], [x2d],
                     [g.reshape(1, d), b.reshape(1, d)], [d], [BF16])[0]


def ln_ffn(x2d, g, b, w1_bf16, b1, w2_bf16, b2):
    d = x2d.shape[1]
    return _row_call(
        _ln_ffn_kernel, x2d.shape[0], [x2d],
        [g.reshape(1, d), b.reshape(1, d), w1_bf16, b1.reshape(1, -1), w2_bf16, b2.reshape(1, d)],
        [d], [BF16],
    )[0]


def ln_qkv(x2d, g, b, wqkv_bf16, bqkv, scale):
    d = x2d.shape[1]
    q, k, v = _row_call(
        _make_ln_qkv_kernel(d, scale), x2d.shape[0], [x2d],
        [g.reshape(1, d), b.reshape(1, d), wqkv_bf16, bqkv.reshape(1, -1)],
        [d, d, d], [BF16, BF16, BF16],
    )
    return q, k, v


def ln_q(x2d, g, b, wq_bf16, bq, scale):
    d = x2d.shape[1]
    return _row_call(
        _make_ln_q_kernel(scale), x2d.shape[0], [x2d],
        [g.reshape(1, d), b.reshape(1, d), wq_bf16, bq.reshape(1, -1)],
        [d], [BF16],
    )[0]


def kv_proj(x2d, wkv_bf16, bkv):
    d = x2d.shape[1]
    k, v = _row_call(
        _make_kv_kernel(d), x2d.shape[0], [x2d],
        [wkv_bf16, bkv.reshape(1, -1)],
        [d, d], [BF16, BF16],
    )
    return k, v


# ----------------------------------------------------------------------------
# flash-style attention: grid (batch, q-tile, kv-tile), heads handled in-kernel
# ----------------------------------------------------------------------------
def _make_attn_kernel(n_heads, dh):
    def kernel(q_ref, k_ref, v_ref, m_ref, o_ref, m_sc, l_sc, acc_sc):
        kb = pl.program_id(2)

        @pl.when(kb == 0)
        def _():
            m_sc[...] = jnp.full_like(m_sc, -jnp.inf)
            l_sc[...] = jnp.zeros_like(l_sc)
            acc_sc[...] = jnp.zeros_like(acc_sc)

        bias = m_ref[0]                                       # (1, tkb) additive mask
        # TODO(synk): when dh < 128 the acc/o column slices are partial-lane; pairing
        # heads per iteration would make them 128-lane dense (review follow-up).
        for hh in range(n_heads):
            lo = hh * dh
            qh = q_ref[0, :, lo:lo + dh]                      # (tq, dh)  bf16, pre-scaled
            kh = k_ref[0, :, lo:lo + dh]                      # (tkb, dh) bf16
            vh = v_ref[0, :, lo:lo + dh]
            s = lax.dot_general(qh, kh, (((1,), (1,)), ((), ())),
                                preferred_element_type=F32) + bias
            # lane-replicated running stats: (tq, 128) blocks -> dense loads/stores
            m_prev = m_sc[hh]
            m_new = jnp.maximum(m_prev, jnp.max(s, axis=-1, keepdims=True))
            alpha = jnp.exp(m_prev[:, :1] - m_new[:, :1])     # (tq, 1)
            p = jnp.exp(s - m_new[:, :1])
            l_sc[hh] = alpha * l_sc[hh] + jnp.sum(p, axis=-1, keepdims=True)
            acc_sc[:, lo:lo + dh] = alpha * acc_sc[:, lo:lo + dh] + jnp.dot(
                p.astype(BF16), vh, preferred_element_type=F32)
            m_sc[hh] = m_new

        @pl.when(kb == pl.num_programs(2) - 1)
        def _():
            for hh in range(n_heads):
                lo = hh * dh
                inv = pl.reciprocal(l_sc[hh][:, :1], approx=True)
                o_ref[0, :, lo:lo + dh] = (acc_sc[:, lo:lo + dh] * inv).astype(BF16)

    return kernel


def attention(q, k, v, mask_bias, n_heads, q_tile=256, kv_tile=256):
    # q: [B, Tq, D] bf16 (already scaled); k, v: [B, Tk, D] bf16
    # mask_bias: [B, 1, Tk] f32 additive (0 valid / -1e9 pad), indexed per kv block.
    B, Tq, D = q.shape
    Tk = k.shape[1]
    dh = D // n_heads

    tq = min(q_tile, _round_up(Tq, 16))
    Tqp = _round_up(Tq, tq)
    tkb = min(kv_tile, _round_up(Tk, 16))
    Tkp = _round_up(Tk, tkb)

    if Tqp != Tq:
        q = jnp.pad(q, ((0, 0), (0, Tqp - Tq), (0, 0)))
    if Tkp != Tk:
        k = jnp.pad(k, ((0, 0), (0, Tkp - Tk), (0, 0)))
        v = jnp.pad(v, ((0, 0), (0, Tkp - Tk), (0, 0)))
        mask_bias = jnp.pad(mask_bias, ((0, 0), (0, 0), (0, Tkp - Tk)),
                            constant_values=-1e9)

    nq, nk = Tqp // tq, Tkp // tkb
    out = pl.pallas_call(
        _make_attn_kernel(n_heads, dh),
        grid_spec=pltpu.PrefetchScalarGridSpec(
            num_scalar_prefetch=0, grid=(B, nq, nk),
            in_specs=[
                pl.BlockSpec((1, tq, D), lambda bb, qi, kb: (bb, qi, 0)),
                pl.BlockSpec((1, tkb, D), lambda bb, qi, kb: (bb, kb, 0)),
                pl.BlockSpec((1, tkb, D), lambda bb, qi, kb: (bb, kb, 0)),
                pl.BlockSpec((1, 1, tkb), lambda bb, qi, kb: (bb, 0, kb)),
            ],
            out_specs=pl.BlockSpec((1, tq, D), lambda bb, qi, kb: (bb, qi, 0)),
            scratch_shapes=[
                pltpu.VMEM((n_heads, tq, 128), F32),   # running max, lane-replicated
                pltpu.VMEM((n_heads, tq, 128), F32),   # running sum, lane-replicated
                pltpu.VMEM((tq, D), F32),              # output accumulator
            ],
        ),
        out_shape=jax.ShapeDtypeStruct((B, Tqp, D), BF16),
        compiler_params=pltpu.CompilerParams(
            dimension_semantics=("parallel", "parallel", "arbitrary")),
    )(q, k, v, mask_bias)
    return out[:, :Tq]


def self_attn_block(x, mask_bias, pp, n_heads):
    B, T, D = x.shape
    scale = 1.0 / math.sqrt(D // n_heads)
    q, k, v = ln_qkv(x.reshape(B * T, D), pp["ln_g"], pp["ln_b"], pp["wqkv"], pp["bqkv"], scale)
    o = attention(q.reshape(B, T, D), k.reshape(B, T, D), v.reshape(B, T, D),
                  mask_bias, n_heads)
    y = dense_residual(o.reshape(B * T, D), x.reshape(B * T, D), pp["wo"], pp["bo"])
    return y.reshape(B, T, D)


def cross_attn_block(x, enc, mask_bias, pp, n_heads):
    B, L, D = x.shape
    T = enc.shape[1]
    scale = 1.0 / math.sqrt(D // n_heads)
    q = ln_q(x.reshape(B * L, D), pp["ln_g"], pp["ln_b"], pp["wq"], pp["bq"], scale)
    k, v = kv_proj(enc.reshape(B * T, D), pp["wkv"], pp["bkv"])
    o = attention(q.reshape(B, L, D), k.reshape(B, T, D), v.reshape(B, T, D),
                  mask_bias, n_heads)
    y = dense_residual(o.reshape(B * L, D), x.reshape(B * L, D), pp["wo"], pp["bo"])
    return y.reshape(B, L, D)


# ----------------------------------------------------------------------------
# CIF alpha head (conv1d + residual + relu + D->1 + sigmoid), lane-dense output
# ----------------------------------------------------------------------------
def _make_cif_kernel(Kc, T):
    pad = (Kc - 1) // 2

    def kernel(xpad_ref, w_ref, b_ref, wa_ref, ba_ref, m_ref, a_ref):
        D = w_ref.shape[1]
        ctx = xpad_ref[0, pad:pad + T, :]                     # (T, D) f32 residual branch
        acc = jnp.zeros((T, D), F32)
        for kk in range(Kc):                                  # static small kernel width
            win = ctx if kk == pad else xpad_ref[0, kk:kk + T, :]
            acc = acc + jnp.dot(win.astype(BF16), w_ref[kk], preferred_element_type=F32)
        out = jnp.maximum(acc + b_ref[...] + ctx, 0.0)        # (T, D), CIF head kept f32
        # D -> 1 head computed as (1,D) x (T,D)^T so the result lands lane-dense (1, T).
        logit = lax.dot_general(wa_ref[...], out, (((1,), (1,)), ((), ())),
                                preferred_element_type=F32) + ba_ref[...]
        # smooth_factor = 1.0, noise_threshold = 0.0 (CifPredictorV2 defaults)
        a_ref[0] = jnp.maximum(jax.nn.sigmoid(logit), 0.0) * m_ref[0]

    return kernel


def _batch_spec(shape):
    nd = len(shape)
    return pl.BlockSpec((1,) + shape[1:], lambda bb, _nd=nd: (bb,) + (0,) * (_nd - 1))


def _full_spec(shape):
    nd = len(shape)
    return pl.BlockSpec(shape, lambda bb, _nd=nd: (0,) * _nd)


def cif_alphas(enc, mask, conv_w, conv_b, out_w, out_b):
    # TODO(synk): the conv needs a halo so the T axis is not tiled here; fine for
    # moderate T, revisit (halo tiles) for very long utterances on v7x.
    B, T, D = enc.shape
    Kc = conv_w.shape[0]
    pad = (Kc - 1) // 2
    tp = _round_up(T + 2 * pad, 8)
    xpad = jnp.pad(enc.astype(F32), ((0, 0), (pad, tp - T - pad), (0, 0)))
    conv_w_bf = conv_w.astype(BF16)
    alphas = pl.pallas_call(
        _make_cif_kernel(Kc, T),
        grid_spec=pltpu.PrefetchScalarGridSpec(
            num_scalar_prefetch=0, grid=(B,),
            in_specs=[
                _batch_spec((B, tp, D)),
                _full_spec((Kc, D, D)),
                _full_spec((1, D)),
                _full_spec((1, D)),
                _full_spec((1, 1)),
                _batch_spec((B, 1, T)),
            ],
            out_specs=_batch_spec((B, 1, T)),
        ),
        out_shape=jax.ShapeDtypeStruct((B, 1, T), F32),
        compiler_params=pltpu.CompilerParams(dimension_semantics=("parallel",)),
    )(xpad, conv_w_bf, conv_b.reshape(1, D), out_w.reshape(1, D), out_b.reshape(1, 1),
      mask.reshape(B, 1, T))
    return alphas.reshape(B, T)


# ----------------------------------------------------------------------------
# fused output projection + log_softmax (vocab always streamed, online LSE)
# ----------------------------------------------------------------------------
def _proj_lse_kernel(x_ref, w_ref, b_ref, logit_ref, lse_ref, m_sc, l_sc):
    j = pl.program_id(1)

    @pl.when(j == 0)
    def _():
        m_sc[...] = jnp.full_like(m_sc, -jnp.inf)
        l_sc[...] = jnp.zeros_like(l_sc)

    logits = (
        jnp.dot(x_ref[...].astype(BF16), w_ref[...], preferred_element_type=F32) + b_ref[...]
    )
    lb = logits.astype(BF16)          # bf16 intermediate halves the [M,V] HBM traffic
    logit_ref[...] = lb
    lf = lb.astype(F32)               # stats on the rounded values -> exact normalization
    m_new = jnp.maximum(m_sc[...], jnp.max(lf, axis=-1, keepdims=True))
    l_sc[...] = l_sc[...] * jnp.exp(m_sc[...] - m_new) + jnp.sum(
        jnp.exp(lf - m_new[:, :1]), axis=-1, keepdims=True)
    m_sc[...] = m_new

    @pl.when(j == pl.num_programs(1) - 1)
    def _():
        lse_ref[...] = m_sc[:, :1] + jnp.log(l_sc[:, :1])


def _sub_lse_kernel(logit_ref, lse_ref, o_ref):
    o_ref[...] = logit_ref[...].astype(F32) - lse_ref[...]


def proj_log_softmax(x2d, w_bf16, b):
    M, D = x2d.shape
    V = w_bf16.shape[1]
    tm = min(256, _round_up(M, 16))
    mp = _round_up(M, tm)
    xp = _pad_rows(x2d, mp)

    tv = min(512, _round_up(V, 128))
    Vp = _round_up(V, tv)
    nv = Vp // tv
    wp = jnp.pad(w_bf16, ((0, 0), (0, Vp - V))) if Vp != V else w_bf16
    bpad = jnp.pad(b, (0, Vp - V), constant_values=-1e9) if Vp != V else b
    bp = bpad.reshape(1, Vp)

    logits, lse = pl.pallas_call(
        _proj_lse_kernel,
        grid_spec=pltpu.PrefetchScalarGridSpec(
            num_scalar_prefetch=0, grid=(mp // tm, nv),
            in_specs=[pl.BlockSpec((tm, D), lambda i, j: (i, 0)),
                      pl.BlockSpec((D, tv), lambda i, j: (0, j)),
                      pl.BlockSpec((1, tv), lambda i, j: (0, j))],
            out_specs=[pl.BlockSpec((tm, tv), lambda i, j: (i, j)),
                       pl.BlockSpec((tm, 1), lambda i, j: (i, 0))],
            scratch_shapes=[pltpu.VMEM((tm, 128), F32), pltpu.VMEM((tm, 128), F32)],
        ),
        out_shape=[jax.ShapeDtypeStruct((mp, Vp), BF16),
                   jax.ShapeDtypeStruct((mp, 1), F32)],
        compiler_params=pltpu.CompilerParams(dimension_semantics=("parallel", "arbitrary")),
    )(xp, wp, bp)

    out = pl.pallas_call(
        _sub_lse_kernel,
        grid_spec=pltpu.PrefetchScalarGridSpec(
            num_scalar_prefetch=0, grid=(mp // tm, nv),
            in_specs=[pl.BlockSpec((tm, tv), lambda i, j: (i, j)),
                      pl.BlockSpec((tm, 1), lambda i, j: (i, 0))],
            out_specs=pl.BlockSpec((tm, tv), lambda i, j: (i, j)),
        ),
        out_shape=jax.ShapeDtypeStruct((mp, Vp), F32),
        compiler_params=pltpu.CompilerParams(dimension_semantics=("parallel", "parallel")),
    )(logits, lse)
    return out[:M, :V]


# ----------------------------------------------------------------------------
# parameter preparation (concatenated QKV weights, bf16 casts -- folded at trace)
# ----------------------------------------------------------------------------
def _prep_block_attn(ln_g, ln_b, attn):
    return dict(
        ln_g=ln_g, ln_b=ln_b,
        wqkv=jnp.concatenate([attn["wq"], attn["wk"], attn["wv"]], axis=1).astype(BF16),
        bqkv=jnp.concatenate([attn["bq"], attn["bk"], attn["bv"]]),
        wq=attn["wq"].astype(BF16), bq=attn["bq"],
        wkv=jnp.concatenate([attn["wk"], attn["wv"]], axis=1).astype(BF16),
        bkv=jnp.concatenate([attn["bk"], attn["bv"]]),
        wo=attn["wo"].astype(BF16), bo=attn["bo"],
    )


def _prep_encoder(p):
    return dict(
        w_in=p["w_in"].astype(BF16), b_in=p["b_in"],
        attn=_prep_block_attn(p["ln1_g"], p["ln1_b"], p["attn"]),
        ln2_g=p["ln2_g"], ln2_b=p["ln2_b"],
        ffn_w1=p["ffn_w1"].astype(BF16), ffn_b1=p["ffn_b1"],
        ffn_w2=p["ffn_w2"].astype(BF16), ffn_b2=p["ffn_b2"],
        ln3_g=p["ln3_g"], ln3_b=p["ln3_b"],
    )


def _prep_decoder(p):
    return dict(
        self_attn=_prep_block_attn(p["ln1_g"], p["ln1_b"], p["self_attn"]),
        cross_attn=_prep_block_attn(p["ln2_g"], p["ln2_b"], p["cross_attn"]),
        ln3_g=p["ln3_g"], ln3_b=p["ln3_b"],
        ffn_w1=p["ffn_w1"].astype(BF16), ffn_b1=p["ffn_b1"],
        ffn_w2=p["ffn_w2"].astype(BF16), ffn_b2=p["ffn_b2"],
        ln4_g=p["ln4_g"], ln4_b=p["ln4_b"],
        w_out=p["w_out"].astype(BF16), b_out=p["b_out"],
    )


# ----------------------------------------------------------------------------
# Paraformer pieces
# ----------------------------------------------------------------------------
def encoder_forward(speech, enc_bias, p, n_heads):
    # TODO(synk): real SANMEncoder stacks many layers with FSMN memory blocks;
    # a single pre-LN self-attention + FFN layer is used here.
    B, T, Feat = speech.shape
    D = p["b_in"].shape[0]
    x = dense(speech.reshape(B * T, Feat), p["w_in"], p["b_in"]).reshape(B, T, D)
    x = self_attn_block(x, enc_bias, p["attn"], n_heads)
    x = ln_ffn(x.reshape(B * T, D), p["ln2_g"], p["ln2_b"],
               p["ffn_w1"], p["ffn_b1"], p["ffn_w2"], p["ffn_b2"]).reshape(B, T, D)
    x = layernorm(x.reshape(B * T, D), p["ln3_g"], p["ln3_b"]).reshape(B, T, D)
    return x


def cif(hidden, alphas, threshold=1.0):
    # Continuous Integrate-and-Fire (CifPredictorV2.cif) -- sequential recurrence,
    # kept in plain JAX (lax.scan); not a Pallas hot path.
    hidden = hidden.astype(F32)
    B, T, D = hidden.shape

    def step(carry, xs):
        integrate, frame = carry
        alpha, h_t = xs
        dist_comp = 1.0 - integrate
        integrate = integrate + alpha
        fire_rec = integrate
        fired = integrate >= threshold
        integrate = jnp.where(fired, integrate - 1.0, integrate)
        cur = jnp.where(fired, dist_comp, alpha)
        remainds = alpha - cur
        frame = frame + cur[:, None] * h_t
        frame_rec = frame
        frame = jnp.where(fired[:, None], remainds[:, None] * h_t, frame)
        return (integrate, frame), (fire_rec, frame_rec)

    init = (jnp.zeros((B,), F32), jnp.zeros((B, D), F32))
    (_, _), (fires, frames) = lax.scan(
        step, init, (alphas.T, jnp.transpose(hidden, (1, 0, 2)))
    )
    fires = fires.T
    frames = jnp.transpose(frames, (1, 0, 2))

    fired = fires >= threshold
    order = jnp.argsort(jnp.where(fired, 0, 1).astype(jnp.int32), axis=1, stable=True)
    gathered = jnp.take_along_axis(frames, order[:, :, None], axis=1)
    n_fired = jnp.sum(fired.astype(jnp.int32), axis=1)
    valid = (jnp.arange(T)[None, :] < n_fired[:, None])[:, :, None]
    acoustic_embeds = jnp.where(valid, gathered, 0.0)
    return acoustic_embeds, fires


def predictor_forward(enc, mask, p):
    # TODO(synk): tail_threshold handling / target-length alpha rescaling of
    # CifPredictorV2 is omitted (inference-only path).
    alphas = cif_alphas(enc, mask, p["conv_w"], p["conv_b"], p["out_w"], p["out_b"])
    token_num = jnp.sum(alphas, axis=-1)
    acoustic_embeds, fires = cif(enc, alphas, threshold=1.0)
    return acoustic_embeds, token_num, alphas, fires


def decoder_forward(enc, enc_bias, embeds, tok_bias, p, n_heads):
    # TODO(synk): real ParaformerSANMDecoder stacks many SANM layers with FSMN
    # memory; one self-attn + cross-attn + FFN layer is used here.
    B, L, D = embeds.shape
    x = self_attn_block(embeds, tok_bias, p["self_attn"], n_heads)
    x = cross_attn_block(x, enc, enc_bias, p["cross_attn"], n_heads)
    x = ln_ffn(x.reshape(B * L, D), p["ln3_g"], p["ln3_b"],
               p["ffn_w1"], p["ffn_b1"], p["ffn_w2"], p["ffn_b2"]).reshape(B, L, D)
    x = layernorm(x.reshape(B * L, D), p["ln4_g"], p["ln4_b"])
    logp = proj_log_softmax(x, p["w_out"], p["b_out"])
    V = p["b_out"].shape[0]
    return logp.reshape(B, L, V)


def paraformer_forward(params, speech, speech_lengths, n_heads=4):
    B, T, _ = speech.shape
    enc_mask = (jnp.arange(T)[None, :] < speech_lengths[:, None]).astype(F32)  # 1 = valid
    enc_bias = ((enc_mask - 1.0) * 1e9).reshape(B, 1, T)                       # additive mask

    pe = _prep_encoder(params["encoder"])
    pd = _prep_decoder(params["decoder"])
    pp = params["predictor"]                                                   # CIF head stays f32

    enc = encoder_forward(speech, enc_bias, pe, n_heads)                       # bf16 activations

    pre_acoustic_embeds, token_num, alphas, pre_peak_index = predictor_forward(enc, enc_mask, pp)
    pre_token_length = jnp.floor(token_num).astype(jnp.int32)

    L = pre_acoustic_embeds.shape[1]
    tok_mask = (jnp.arange(L)[None, :] < pre_token_length[:, None]).astype(F32)
    tok_bias = ((tok_mask - 1.0) * 1e9).reshape(B, 1, L)

    decoder_out = decoder_forward(enc, enc_bias, pre_acoustic_embeds.astype(BF16),
                                  tok_bias, pd, n_heads)
    return decoder_out, pre_token_length


# ----------------------------------------------------------------------------
# deterministic synthetic parameters
# ----------------------------------------------------------------------------
def init_params(key, feats_dim, d_model, ffn_dim, vocab, kc):
    it = iter(jax.random.split(key, 48))

    def nrm(shape, scale):
        return jax.random.normal(next(it), shape, F32) * scale

    def lin(din, dout):
        return nrm((din, dout), 1.0 / math.sqrt(din))

    def zeros(n):
        return jnp.zeros((n,), F32)

    def ones(n):
        return jnp.ones((n,), F32)

    def attn_block(d):
        return dict(wq=lin(d, d), bq=zeros(d), wk=lin(d, d), bk=zeros(d),
                    wv=lin(d, d), bv=zeros(d), wo=lin(d, d), bo=zeros(d))

    encoder = dict(
        w_in=lin(feats_dim, d_model), b_in=zeros(d_model),
        ln1_g=ones(d_model), ln1_b=zeros(d_model),
        attn=attn_block(d_model),
        ln2_g=ones(d_model), ln2_b=zeros(d_model),
        ffn_w1=lin(d_model, ffn_dim), ffn_b1=zeros(ffn_dim),
        ffn_w2=lin(ffn_dim, d_model), ffn_b2=zeros(d_model),
        ln3_g=ones(d_model), ln3_b=zeros(d_model),
    )
    predictor = dict(
        conv_w=nrm((kc, d_model, d_model), 1.0 / math.sqrt(kc * d_model)),
        conv_b=zeros(d_model),
        out_w=lin(d_model, 1), out_b=zeros(1),
    )
    decoder = dict(
        ln1_g=ones(d_model), ln1_b=zeros(d_model),
        self_attn=attn_block(d_model),
        ln2_g=ones(d_model), ln2_b=zeros(d_model),
        cross_attn=attn_block(d_model),
        ln3_g=ones(d_model), ln3_b=zeros(d_model),
        ffn_w1=lin(d_model, ffn_dim), ffn_b1=zeros(ffn_dim),
        ffn_w2=lin(ffn_dim, d_model), ffn_b2=zeros(d_model),
        ln4_g=ones(d_model), ln4_b=zeros(d_model),
        w_out=lin(d_model, vocab), b_out=zeros(vocab),
    )
    return dict(encoder=encoder, predictor=predictor, decoder=decoder)


# ----------------------------------------------------------------------------
if __name__ == "__main__":
    B, T, FEATS = 2, 16, 32           # small stand-in for (batch, frames, feats_dim=560)
    D_MODEL, HEADS, FFN_DIM, VOCAB, KC = 32, 4, 64, 64, 3

    key = jax.random.PRNGKey(0)
    kp, kx = jax.random.split(key)
    params = init_params(kp, FEATS, D_MODEL, FFN_DIM, VOCAB, KC)

    speech = jax.random.normal(kx, (B, T, FEATS), F32)
    speech_lengths = jnp.array([9, 16], jnp.int32)

    fwd = jax.jit(lambda s, sl: paraformer_forward(params, s, sl, n_heads=HEADS))
    decoder_out, pre_token_length = fwd(speech, speech_lengths)
    jax.block_until_ready((decoder_out, pre_token_length))

    assert decoder_out.shape == (B, T, VOCAB)
    assert decoder_out.dtype == jnp.float32
    assert pre_token_length.shape == (B,)
    assert pre_token_length.dtype == jnp.int32
    # rows of log_softmax must sum to ~1 in prob space
    assert bool(jnp.all(jnp.abs(jnp.sum(jnp.exp(decoder_out), axis=-1) - 1.0) < 1e-3))

    print("KERNEL_OK")
</pallas_src>

<mosaic_0001>
module attributes {stable_mosaic.version = 11 : i64} {
  func.func @kernel(%arg0: i32, %arg1: memref<32x32xbf16, #tpu.memory_space<vmem>>, %arg2: memref<1x32xf32, #tpu.memory_space<vmem>>, %arg3: memref<1x32xf32, #tpu.memory_space<vmem>>, %arg4: memref<32x96xbf16, #tpu.memory_space<vmem>>, %arg5: memref<1x96xf32, #tpu.memory_space<vmem>>, %arg6: memref<32x32xbf16, #tpu.memory_space<vmem>>, %arg7: memref<32x32xbf16, #tpu.memory_space<vmem>>, %arg8: memref<32x32xbf16, #tpu.memory_space<vmem>>) attributes {dimension_semantics = [#tpu.dimension_semantics<parallel>], iteration_bounds = array<i64: 1>, scalar_prefetch = 0 : i64, scratch_operands = 0 : i64, tpu.core_type = #tpu.core_type<tc>, window_params = [{transform_indices = @transform_0, window_bounds = array<i64: 32, 32>}, {pipeline_mode = #tpu.pipeline_mode<synchronous>, transform_indices = @transform_1, window_bounds = array<i64: 1, 32>}, {pipeline_mode = #tpu.pipeline_mode<synchronous>, transform_indices = @transform_2, window_bounds = array<i64: 1, 32>}, {pipeline_mode = #tpu.pipeline_mode<synchronous>, transform_indices = @transform_3, window_bounds = array<i64: 32, 96>}, {pipeline_mode = #tpu.pipeline_mode<synchronous>, transform_indices = @transform_4, window_bounds = array<i64: 1, 96>}, {transform_indices = @transform_5, window_bounds = array<i64: 32, 32>}, {transform_indices = @transform_6, window_bounds = array<i64: 32, 32>}, {transform_indices = @transform_7, window_bounds = array<i64: 32, 32>}]} {
    %c0 = arith.constant 0 : index
    %c0_0 = arith.constant 0 : index
    %0 = vector.load %arg1[%c0, %c0_0] : memref<32x32xbf16, #tpu.memory_space<vmem>>, vector<32x32xbf16>
    %c0_1 = arith.constant 0 : index
    %c0_2 = arith.constant 0 : index
    %1 = vector.load %arg2[%c0_1, %c0_2] : memref<1x32xf32, #tpu.memory_space<vmem>>, vector<1x32xf32>
    %c0_3 = arith.constant 0 : index
    %c0_4 = arith.constant 0 : index
    %2 = vector.load %arg3[%c0_3, %c0_4] : memref<1x32xf32, #tpu.memory_space<vmem>>, vector<1x32xf32>
    %3 = arith.extf %0 : vector<32x32xbf16> to vector<32x32xf32>
    %cst = arith.constant dense<0.000000e+00> : vector<32xf32>
    %4 = vector.multi_reduction <add>, %3, %cst [1] : vector<32x32xf32> to vector<32xf32>
    %5 = vector.shape_cast %4 : vector<32xf32> to vector<32x1xf32>
    %cst_5 = arith.constant 3.200000e+01 : f32
    %6 = vector.broadcast %cst_5 : f32 to vector<32x1xf32>
    %7 = arith.divf %5, %6 : vector<32x1xf32>
    %8 = vector.broadcast %7 : vector<32x1xf32> to vector<32x32xf32>
    %9 = arith.subf %3, %8 : vector<32x32xf32>
    %10 = arith.mulf %9, %9 : vector<32x32xf32>
    %cst_6 = arith.constant dense<0.000000e+00> : vector<32xf32>
    %11 = vector.multi_reduction <add>, %10, %cst_6 [1] : vector<32x32xf32> to vector<32xf32>
    %12 = vector.shape_cast %11 : vector<32xf32> to vector<32x1xf32>
    %cst_7 = arith.constant 3.200000e+01 : f32
    %13 = vector.broadcast %cst_7 : f32 to vector<32x1xf32>
    %14 = arith.divf %12, %13 : vector<32x1xf32>
    %cst_8 = arith.constant 9.99999996E-13 : f32
    %15 = vector.broadcast %cst_8 : f32 to vector<32x1xf32>
    %16 = arith.addf %14, %15 : vector<32x1xf32>
    %17 = math.rsqrt %16 : vector<32x1xf32>
    %18 = vector.broadcast %17 : vector<32x1xf32> to vector<32x32xf32>
    %19 = arith.mulf %9, %18 : vector<32x32xf32>
    %20 = vector.broadcast %1 : vector<1x32xf32> to vector<32x32xf32>
    %21 = arith.mulf %19, %20 : vector<32x32xf32>
    %22 = vector.broadcast %2 : vector<1x32xf32> to vector<32x32xf32>
    %23 = arith.addf %21, %22 : vector<32x32xf32>
    %24 = arith.truncf %23 : vector<32x32xf32> to vector<32x32xbf16>
    %c0_9 = arith.constant 0 : index
    %c0_10 = arith.constant 0 : index
    %25 = vector.load %arg4[%c0_9, %c0_10] : memref<32x96xbf16, #tpu.memory_space<vmem>>, vector<32x96xbf16>
    %cst_11 = arith.constant dense<0.000000e+00> : vector<32x96xf32>
    %26 = tpu.matmul %24, %25, %cst_11 {dimension_numbers = #tpu.dot_dimension_numbers<[1], [0], [0], [1], [0, 0, 1, 1], [], []>} : vector<32x32xbf16>, vector<32x96xbf16>, vector<32x96xf32> -> vector<32x96xf32>
    %c0_12 = arith.constant 0 : index
    %c0_13 = arith.constant 0 : index
    %27 = vector.load %arg5[%c0_12, %c0_13] : memref<1x96xf32, #tpu.memory_space<vmem>>, vector<1x96xf32>
    %28 = vector.broadcast %27 : vector<1x96xf32> to vector<32x96xf32>
    %29 = arith.addf %26, %28 : vector<32x96xf32>
    %30 = vector.extract_strided_slice %29 {offsets = [0, 0], sizes = [32, 32], strides = [1, 1]} : vector<32x96xf32> to vector<32x32xf32>
    %cst_14 = arith.constant 0.353553385 : f32
    %31 = vector.broadcast %cst_14 : f32 to vector<32x32xf32>
    %32 = arith.mulf %30, %31 : vector<32x32xf32>
    %33 = arith.truncf %32 : vector<32x32xf32> to vector<32x32xbf16>
    %c0_15 = arith.constant 0 : index
    %c0_16 = arith.constant 0 : index
    %34 = vector.load %arg6[%c0_15, %c0_16] : memref<32x32xbf16, #tpu.memory_space<vmem>>, vector<32x32xbf16>
    tpu.vector_store %arg6[%c0_15, %c0_16], %33 {strides = array<i32>} : memref<32x32xbf16, #tpu.memory_space<vmem>>, vector<32x32xbf16>,
    %35 = vector.extract_strided_slice %29 {offsets = [0, 32], sizes = [32, 32], strides = [1, 1]} : vector<32x96xf32> to vector<32x32xf32>
    %36 = arith.truncf %35 : vector<32x32xf32> to vector<32x32xbf16>
    %c0_17 = arith.constant 0 : index
    %c0_18 = arith.constant 0 : index
    %37 = vector.load %arg7[%c0_17, %c0_18] : memref<32x32xbf16, #tpu.memory_space<vmem>>, vector<32x32xbf16>
    tpu.vector_store %arg7[%c0_17, %c0_18], %36 {strides = array<i32>} : memref<32x32xbf16, #tpu.memory_space<vmem>>, vector<32x32xbf16>,
    %38 = vector.extract_strided_slice %29 {offsets = [0, 64], sizes = [32, 32], strides = [1, 1]} : vector<32x96xf32> to vector<32x32xf32>
    %39 = arith.truncf %38 : vector<32x32xf32> to vector<32x32xbf16>
    %c0_19 = arith.constant 0 : index
    %c0_20 = arith.constant 0 : index
    %40 = vector.load %arg8[%c0_19, %c0_20] : memref<32x32xbf16, #tpu.memory_space<vmem>>, vector<32x32xbf16>
    tpu.vector_store %arg8[%c0_19, %c0_20], %39 {strides = array<i32>} : memref<32x32xbf16, #tpu.memory_space<vmem>>, vector<32x32xbf16>,
    return
  }
  func.func @transform_0(%arg0: i32) -> (i32, i32) {
    %c0_i32 = arith.constant 0 : i32
    %c0_i32_0 = arith.constant 0 : i32
    return %arg0, %c0_i32 : i32, i32
  }
  func.func @transform_1(%arg0: i32) -> (i32, i32) {
    %c0_i32 = arith.constant 0 : i32
    %c0_i32_0 = arith.constant 0 : i32
    %c0_i32_1 = arith.constant 0 : i32
    return %c0_i32, %c0_i32_0 : i32, i32
  }
  func.func @transform_2(%arg0: i32) -> (i32, i32) {
    %c0_i32 = arith.constant 0 : i32
    %c0_i32_0 = arith.constant 0 : i32
    %c0_i32_1 = arith.constant 0 : i32
    return %c0_i32, %c0_i32_0 : i32, i32
  }
  func.func @transform_3(%arg0: i32) -> (i32, i32) {
    %c0_i32 = arith.constant 0 : i32
    %c0_i32_0 = arith.constant 0 : i32
    %c0_i32_1 = arith.constant 0 : i32
    return %c0_i32, %c0_i32_0 : i32, i32
  }
  func.func @transform_4(%arg0: i32) -> (i32, i32) {
    %c0_i32 = arith.constant 0 : i32
    %c0_i32_0 = arith.constant 0 : i32
    %c0_i32_1 = arith.constant 0 : i32
    return %c0_i32, %c0_i32_0 : i32, i32
  }
  func.func @transform_5(%arg0: i32) -> (i32, i32) {
    %c0_i32 = arith.constant 0 : i32
    %c0_i32_0 = arith.constant 0 : i32
    return %arg0, %c0_i32 : i32, i32
  }
  func.func @transform_6(%arg0: i32) -> (i32, i32) {
    %c0_i32 = arith.constant 0 : i32
    %c0_i32_0 = arith.constant 0 : i32
    return %arg0, %c0_i32 : i32, i32
  }
  func.func @transform_7(%arg0: i32) -> (i32, i32) {
    %c0_i32 = arith.constant 0 : i32
    %c0_i32_0 = arith.constant 0 : i32
    return %arg0, %c0_i32 : i32, i32
  }
}

module attributes {stable_mosaic.version = 11 : i64} {
  func.func @_dense_kernel(%arg0: i32, %arg1: memref<32x32xf32, #tpu.memory_space<vmem>>, %arg2: memref<32x32xbf16, #tpu.memory_space<vmem>>, %arg3: memref<1x32xf32, #tpu.memory_space<vmem>>, %arg4: memref<32x32xbf16, #tpu.memory_space<vmem>>) attributes {dimension_semantics = [#tpu.dimension_semantics<parallel>], iteration_bounds = array<i64: 1>, scalar_prefetch = 0 : i64, scratch_operands = 0 : i64, tpu.core_type = #tpu.core_type<tc>, window_params = [{transform_indices = @transform_0, window_bounds = array<i64: 32, 32>}, {pipeline_mode = #tpu.pipeline_mode<synchronous>, transform_indices = @transform_1, window_bounds = array<i64: 32, 32>}, {pipeline_mode = #tpu.pipeline_mode<synchronous>, transform_indices = @transform_2, window_bounds = array<i64: 1, 32>}, {transform_indices = @transform_3, window_bounds = array<i64: 32, 32>}]} {
    %c0 = arith.constant 0 : index
    %c0_0 = arith.constant 0 : index
    %0 = vector.load %arg1[%c0, %c0_0] : memref<32x32xf32, #tpu.memory_space<vmem>>, vector<32x32xf32>
    %1 = arith.truncf %0 : vector<32x32xf32> to vector<32x32xbf16>
    %c0_1 = arith.constant 0 : index
    %c0_2 = arith.constant 0 : index
    %2 = vector.load %arg2[%c0_1, %c0_2] : memref<32x32xbf16, #tpu.memory_space<vmem>>, vector<32x32xbf16>
    %cst = arith.constant dense<0.000000e+00> : vector<32x32xf32>
    %3 = tpu.matmul %1, %2, %cst {dimension_numbers = #tpu.dot_dimension_numbers<[1], [0], [0], [1], [0, 0, 1, 1], [], []>} : vector<32x32xbf16>, vector<32x32xbf16>, vector<32x32xf32> -> vector<32x32xf32>
    %c0_3 = arith.constant 0 : index
    %c0_4 = arith.constant 0 : index
    %4 = vector.load %arg3[%c0_3, %c0_4] : memref<1x32xf32, #tpu.memory_space<vmem>>, vector<1x32xf32>
    %5 = vector.broadcast %4 : vector<1x32xf32> to vector<32x32xf32>
    %6 = arith.addf %3, %5 : vector<32x32xf32>
    %7 = arith.truncf %6 : vector<32x32xf32> to vector<32x32xbf16>
    %c0_5 = arith.constant 0 : index
    %c0_6 = arith.constant 0 : index
    %8 = vector.load %arg4[%c0_5, %c0_6] : memref<32x32xbf16, #tpu.memory_space<vmem>>, vector<32x32xbf16>
    tpu.vector_store %arg4[%c0_5, %c0_6], %7 {strides = array<i32>} : memref<32x32xbf16, #tpu.memory_space<vmem>>, vector<32x32xbf16>,
    return
  }
  func.func @transform_0(%arg0: i32) -> (i32, i32) {
    %c0_i32 = arith.constant 0 : i32
    %c0_i32_0 = arith.constant 0 : i32
    return %arg0, %c0_i32 : i32, i32
  }
  func.func @transform_1(%arg0: i32) -> (i32, i32) {
    %c0_i32 = arith.constant 0 : i32
    %c0_i32_0 = arith.constant 0 : i32
    %c0_i32_1 = arith.constant 0 : i32
    return %c0_i32, %c0_i32_0 : i32, i32
  }
  func.func @transform_2(%arg0: i32) -> (i32, i32) {
    %c0_i32 = arith.constant 0 : i32
    %c0_i32_0 = arith.constant 0 : i32
    %c0_i32_1 = arith.constant 0 : i32
    return %c0_i32, %c0_i32_0 : i32, i32
  }
  func.func @transform_3(%arg0: i32) -> (i32, i32) {
    %c0_i32 = arith.constant 0 : i32
    %c0_i32_0 = arith.constant 0 : i32
    return %arg0, %c0_i32 : i32, i32
  }
}

module attributes {stable_mosaic.version = 11 : i64} {
  func.func @_dense_res_kernel(%arg0: i32, %arg1: memref<32x32xbf16, #tpu.memory_space<vmem>>, %arg2: memref<32x32xbf16, #tpu.memory_space<vmem>>, %arg3: memref<32x32xbf16, #tpu.memory_space<vmem>>, %arg4: memref<1x32xf32, #tpu.memory_space<vmem>>, %arg5: memref<32x32xbf16, #tpu.memory_space<vmem>>) attributes {dimension_semantics = [#tpu.dimension_semantics<parallel>], iteration_bounds = array<i64: 1>, scalar_prefetch = 0 : i64, scratch_operands = 0 : i64, tpu.core_type = #tpu.core_type<tc>, window_params = [{transform_indices = @transform_0, window_bounds = array<i64: 32, 32>}, {transform_indices = @transform_1, window_bounds = array<i64: 32, 32>}, {pipeline_mode = #tpu.pipeline_mode<synchronous>, transform_indices = @transform_2, window_bounds = array<i64: 32, 32>}, {pipeline_mode = #tpu.pipeline_mode<synchronous>, transform_indices = @transform_3, window_bounds = array<i64: 1, 32>}, {transform_indices = @transform_4, window_bounds = array<i64: 32, 32>}]} {
    %c0 = arith.constant 0 : index
    %c0_0 = arith.constant 0 : index
    %0 = vector.load %arg2[%c0, %c0_0] : memref<32x32xbf16, #tpu.memory_space<vmem>>, vector<32x32xbf16>
    %1 = arith.extf %0 : vector<32x32xbf16> to vector<32x32xf32>
    %c0_1 = arith.constant 0 : index
    %c0_2 = arith.constant 0 : index
    %2 = vector.load %arg1[%c0_1, %c0_2] : memref<32x32xbf16, #tpu.memory_space<vmem>>, vector<32x32xbf16>
    %c0_3 = arith.constant 0 : index
    %c0_4 = arith.constant 0 : index
    %3 = vector.load %arg3[%c0_3, %c0_4] : memref<32x32xbf16, #tpu.memory_space<vmem>>, vector<32x32xbf16>
    %cst = arith.constant dense<0.000000e+00> : vector<32x32xf32>
    %4 = tpu.matmul %2, %3, %cst {dimension_numbers = #tpu.dot_dimension_numbers<[1], [0], [0], [1], [0, 0, 1, 1], [], []>} : vector<32x32xbf16>, vector<32x32xbf16>, vector<32x32xf32> -> vector<32x32xf32>
    %5 = arith.addf %1, %4 : vector<32x32xf32>
    %c0_5 = arith.constant 0 : index
    %c0_6 = arith.constant 0 : index
    %6 = vector.load %arg4[%c0_5, %c0_6] : memref<1x32xf32, #tpu.memory_space<vmem>>, vector<1x32xf32>
    %7 = vector.broadcast %6 : vector<1x32xf32> to vector<32x32xf32>
    %8 = arith.addf %5, %7 : vector<32x32xf32>
    %9 = arith.truncf %8 : vector<32x32xf32> to vector<32x32xbf16>
    %c0_7 = arith.constant 0 : index
    %c0_8 = arith.constant 0 : index
    %10 = vector.load %arg5[%c0_7, %c0_8] : memref<32x32xbf16, #tpu.memory_space<vmem>>, vector<32x32xbf16>
    tpu.vector_store %arg5[%c0_7, %c0_8], %9 {strides = array<i32>} : memref<32x32xbf16, #tpu.memory_space<vmem>>, vector<32x32xbf16>,
    return
  }
  func.func @transform_0(%arg0: i32) -> (i32, i32) {
    %c0_i32 = arith.constant 0 : i32
    %c0_i32_0 = arith.constant 0 : i32
    return %arg0, %c0_i32 : i32, i32
  }
  func.func @transform_1(%arg0: i32) -> (i32, i32) {
    %c0_i32 = arith.constant 0 : i32
    %c0_i32_0 = arith.constant 0 : i32
    return %arg0, %c0_i32 : i32, i32
  }
  func.func @transform_2(%arg0: i32) -> (i32, i32) {
    %c0_i32 = arith.constant 0 : i32
    %c0_i32_0 = arith.constant 0 : i32
    %c0_i32_1 = arith.constant 0 : i32
    return %c0_i32, %c0_i32_0 : i32, i32
  }
  func.func @transform_3(%arg0: i32) -> (i32, i32) {
    %c0_i32 = arith.constant 0 : i32
    %c0_i32_0 = arith.constant 0 : i32
    %c0_i32_1 = arith.constant 0 : i32
    return %c0_i32, %c0_i32_0 : i32, i32
  }
  func.func @transform_4(%arg0: i32) -> (i32, i32) {
    %c0_i32 = arith.constant 0 : i32
    %c0_i32_0 = arith.constant 0 : i32
    return %arg0, %c0_i32 : i32, i32
  }
}

module attributes {stable_mosaic.version = 11 : i64} {
  func.func @kernel(%arg0: i32, %arg1: i32, %arg2: i32, %arg3: memref<1x16x32xbf16, #tpu.memory_space<vmem>>, %arg4: memref<1x16x32xbf16, #tpu.memory_space<vmem>>, %arg5: memref<1x16x32xbf16, #tpu.memory_space<vmem>>, %arg6: memref<1x1x16xf32, #tpu.memory_space<vmem>>, %arg7: memref<1x16x32xbf16, #tpu.memory_space<vmem>>, %arg8: memref<4x16x128xf32, #tpu.memory_space<vmem>>, %arg9: memref<4x16x128xf32, #tpu.memory_space<vmem>>, %arg10: memref<16x32xf32, #tpu.memory_space<vmem>>) attributes {dimension_semantics = [#tpu.dimension_semantics<parallel>, #tpu.dimension_semantics<parallel>, #tpu.dimension_semantics<arbitrary>], iteration_bounds = array<i64: 2, 1, 1>, scalar_prefetch = 0 : i64, scratch_operands = 3 : i64, tpu.core_type = #tpu.core_type<tc>, window_params = [{transform_indices = @transform_0, window_bounds = array<i64: 1, 16, 32>}, {transform_indices = @transform_1, window_bounds = array<i64: 1, 16, 32>}, {transform_indices = @transform_2, window_bounds = array<i64: 1, 16, 32>}, {transform_indices = @transform_3, window_bounds = array<i64: 1, 1, 16>}, {transform_indices = @transform_4, window_bounds = array<i64: 1, 16, 32>}]} {
    %c0_i32 = arith.constant 0 : i32
    %0 = arith.cmpi eq, %arg2, %c0_i32 : i32
    %1 = arith.extui %0 : i1 to i32
    %c0_i32_0 = arith.constant 0 : i32
    %2 = arith.cmpi ne, %1, %c0_i32_0 : i32
    scf.if %2 {
      %cst_114 = arith.constant 0xFF800000 : f32
      %184 = vector.broadcast %cst_114 : f32 to vector<4x16x128xf32>
      %c0_115 = arith.constant 0 : index
      %c0_116 = arith.constant 0 : index
      %c0_117 = arith.constant 0 : index
      %185 = vector.load %arg8[%c0_115, %c0_116, %c0_117] : memref<4x16x128xf32, #tpu.memory_space<vmem>>, vector<4x16x128xf32>
      tpu.vector_store %arg8[%c0_115, %c0_116, %c0_117], %184 {strides = array<i32>} : memref<4x16x128xf32, #tpu.memory_space<vmem>>, vector<4x16x128xf32>,
      %cst_118 = arith.constant 0.000000e+00 : f32
      %186 = vector.broadcast %cst_118 : f32 to vector<4x16x128xf32>
      %c0_119 = arith.constant 0 : index
      %c0_120 = arith.constant 0 : index
      %c0_121 = arith.constant 0 : index
      %187 = vector.load %arg9[%c0_119, %c0_120, %c0_121] : memref<4x16x128xf32, #tpu.memory_space<vmem>>, vector<4x16x128xf32>
      tpu.vector_store %arg9[%c0_119, %c0_120, %c0_121], %186 {strides = array<i32>} : memref<4x16x128xf32, #tpu.memory_space<vmem>>, vector<4x16x128xf32>,
      %cst_122 = arith.constant 0.000000e+00 : f32
      %188 = vector.broadcast %cst_122 : f32 to vector<16x32xf32>
      %c0_123 = arith.constant 0 : index
      %c0_124 = arith.constant 0 : index
      %189 = vector.load %arg10[%c0_123, %c0_124] : memref<16x32xf32, #tpu.memory_space<vmem>>, vector<16x32xf32>
      tpu.vector_store %arg10[%c0_123, %c0_124], %188 {strides = array<i32>} : memref<16x32xf32, #tpu.memory_space<vmem>>, vector<16x32xf32>,
    } else {
    }
    %c0 = arith.constant 0 : index
    %c0_1 = arith.constant 0 : index
    %c0_2 = arith.constant 0 : index
    %3 = vector.load %arg6[%c0, %c0_1, %c0_2] : memref<1x1x16xf32, #tpu.memory_space<vmem>>, vector<1x1x16xf32>
    %4 = vector.shape_cast %3 : vector<1x1x16xf32> to vector<1x16xf32>
    %c0_3 = arith.constant 0 : index
    %c0_4 = arith.constant 0 : index
    %c0_5 = arith.constant 0 : index
    %5 = vector.load %arg3[%c0_3, %c0_4, %c0_5] : memref<1x16x32xbf16, #tpu.memory_space<vmem>>, vector<1x16x8xbf16>
    %6 = vector.shape_cast %5 : vector<1x16x8xbf16> to vector<16x8xbf16>
    %c0_6 = arith.constant 0 : index
    %c0_7 = arith.constant 0 : index
    %c0_8 = arith.constant 0 : index
    %7 = vector.load %arg4[%c0_6, %c0_7, %c0_8] : memref<1x16x32xbf16, #tpu.memory_space<vmem>>, vector<1x16x8xbf16>
    %8 = vector.shape_cast %7 : vector<1x16x8xbf16> to vector<16x8xbf16>
    %c0_9 = arith.constant 0 : index
    %c0_10 = arith.constant 0 : index
    %c0_11 = arith.constant 0 : index
    %9 = vector.load %arg5[%c0_9, %c0_10, %c0_11] : memref<1x16x32xbf16, #tpu.memory_space<vmem>>, vector<1x16x8xbf16>
    %10 = vector.shape_cast %9 : vector<1x16x8xbf16> to vector<16x8xbf16>
    %cst = arith.constant dense<0.000000e+00> : vector<16x16xf32>
    %11 = tpu.matmul %6, %8, %cst {dimension_numbers = #tpu.dot_dimension_numbers<[1], [1], [0], [0], [0, 0, 1, 0], [], []>} : vector<16x8xbf16>, vector<16x8xbf16>, vector<16x16xf32> -> vector<16x16xf32>
    %12 = vector.broadcast %4 : vector<1x16xf32> to vector<16x16xf32>
    %13 = arith.addf %11, %12 : vector<16x16xf32>
    %c0_12 = arith.constant 0 : index
    %c0_13 = arith.constant 0 : index
    %c0_14 = arith.constant 0 : index
    %14 = vector.load %arg8[%c0_12, %c0_13, %c0_14] : memref<4x16x128xf32, #tpu.memory_space<vmem>>, vector<1x16x128xf32>
    %15 = vector.shape_cast %14 : vector<1x16x128xf32> to vector<16x128xf32>
    %cst_15 = arith.constant dense<0xFF800000> : vector<16xf32>
    %16 = vector.multi_reduction <maximumf>, %13, %cst_15 [1] : vector<16x16xf32> to vector<16xf32>
    %17 = vector.shape_cast %16 : vector<16xf32> to vector<16x1xf32>
    %18 = vector.broadcast %17 : vector<16x1xf32> to vector<16x128xf32>
    %19 = arith.maximumf %15, %18 : vector<16x128xf32>
    %20 = vector.extract_strided_slice %15 {offsets = [0, 0], sizes = [16, 1], strides = [1, 1]} : vector<16x128xf32> to vector<16x1xf32>
    %21 = vector.extract_strided_slice %19 {offsets = [0, 0], sizes = [16, 1], strides = [1, 1]} : vector<16x128xf32> to vector<16x1xf32>
    %22 = arith.subf %20, %21 : vector<16x1xf32>
    %23 = math.exp %22 : vector<16x1xf32>
    %24 = vector.extract_strided_slice %19 {offsets = [0, 0], sizes = [16, 1], strides = [1, 1]} : vector<16x128xf32> to vector<16x1xf32>
    %25 = vector.broadcast %24 : vector<16x1xf32> to vector<16x16xf32>
    %26 = arith.subf %13, %25 : vector<16x16xf32>
    %27 = math.exp %26 : vector<16x16xf32>
    %c0_16 = arith.constant 0 : index
    %c0_17 = arith.constant 0 : index
    %c0_18 = arith.constant 0 : index
    %28 = vector.load %arg9[%c0_16, %c0_17, %c0_18] : memref<4x16x128xf32, #tpu.memory_space<vmem>>, vector<1x16x128xf32>
    %29 = vector.shape_cast %28 : vector<1x16x128xf32> to vector<16x128xf32>
    %30 = vector.broadcast %23 : vector<16x1xf32> to vector<16x128xf32>
    %31 = arith.mulf %30, %29 : vector<16x128xf32>
    %cst_19 = arith.constant dense<0.000000e+00> : vector<16xf32>
    %32 = vector.multi_reduction <add>, %27, %cst_19 [1] : vector<16x16xf32> to vector<16xf32>
    %33 = vector.shape_cast %32 : vector<16xf32> to vector<16x1xf32>
    %34 = vector.broadcast %33 : vector<16x1xf32> to vector<16x128xf32>
    %35 = arith.addf %31, %34 : vector<16x128xf32>
    %c0_20 = arith.constant 0 : index
    %c0_21 = arith.constant 0 : index
    %c0_22 = arith.constant 0 : index
    %36 = vector.load %arg9[%c0_20, %c0_21, %c0_22] : memref<4x16x128xf32, #tpu.memory_space<vmem>>, vector<1x16x128xf32>
    %37 = vector.shape_cast %36 : vector<1x16x128xf32> to vector<16x128xf32>
    %38 = vector.shape_cast %35 : vector<16x128xf32> to vector<1x16x128xf32>
    tpu.vector_store %arg9[%c0_20, %c0_21, %c0_22], %38 {strides = array<i32>} : memref<4x16x128xf32, #tpu.memory_space<vmem>>, vector<1x16x128xf32>,
    %c0_23 = arith.constant 0 : index
    %c0_24 = arith.constant 0 : index
    %39 = vector.load %arg10[%c0_23, %c0_24] : memref<16x32xf32, #tpu.memory_space<vmem>>, vector<16x8xf32>
    %40 = vector.broadcast %23 : vector<16x1xf32> to vector<16x8xf32>
    %41 = arith.mulf %40, %39 : vector<16x8xf32>
    %42 = arith.truncf %27 : vector<16x16xf32> to vector<16x16xbf16>
    %cst_25 = arith.constant dense<0.000000e+00> : vector<16x8xf32>
    %43 = tpu.matmul %42, %10, %cst_25 {dimension_numbers = #tpu.dot_dimension_numbers<[1], [0], [0], [1], [0, 0, 1, 1], [], []>} : vector<16x16xbf16>, vector<16x8xbf16>, vector<16x8xf32> -> vector<16x8xf32>
    %44 = arith.addf %41, %43 : vector<16x8xf32>
    %c0_26 = arith.constant 0 : index
    %c0_27 = arith.constant 0 : index
    %45 = vector.load %arg10[%c0_26, %c0_27] : memref<16x32xf32, #tpu.memory_space<vmem>>, vector<16x8xf32>
    tpu.vector_store %arg10[%c0_26, %c0_27], %44 {strides = array<i32>} : memref<16x32xf32, #tpu.memory_space<vmem>>, vector<16x8xf32>,
    %c0_28 = arith.constant 0 : index
    %c0_29 = arith.constant 0 : index
    %c0_30 = arith.constant 0 : index
    %46 = vector.load %arg8[%c0_28, %c0_29, %c0_30] : memref<4x16x128xf32, #tpu.memory_space<vmem>>, vector<1x16x128xf32>
    %47 = vector.shape_cast %46 : vector<1x16x128xf32> to vector<16x128xf32>
    %48 = vector.shape_cast %19 : vector<16x128xf32> to vector<1x16x128xf32>
    tpu.vector_store %arg8[%c0_28, %c0_29, %c0_30], %48 {strides = array<i32>} : memref<4x16x128xf32, #tpu.memory_space<vmem>>, vector<1x16x128xf32>,
    %c0_31 = arith.constant 0 : index
    %c0_32 = arith.constant 0 : index
    %c8 = arith.constant 8 : index
    %49 = vector.load %arg3[%c0_31, %c0_32, %c8] : memref<1x16x32xbf16, #tpu.memory_space<vmem>>, vector<1x16x8xbf16>
    %50 = vector.shape_cast %49 : vector<1x16x8xbf16> to vector<16x8xbf16>
    %c0_33 = arith.constant 0 : index
    %c0_34 = arith.constant 0 : index
    %c8_35 = arith.constant 8 : index
    %51 = vector.load %arg4[%c0_33, %c0_34, %c8_35] : memref<1x16x32xbf16, #tpu.memory_space<vmem>>, vector<1x16x8xbf16>
    %52 = vector.shape_cast %51 : vector<1x16x8xbf16> to vector<16x8xbf16>
    %c0_36 = arith.constant 0 : index
    %c0_37 = arith.constant 0 : index
    %c8_38 = arith.constant 8 : index
    %53 = vector.load %arg5[%c0_36, %c0_37, %c8_38] : memref<1x16x32xbf16, #tpu.memory_space<vmem>>, vector<1x16x8xbf16>
    %54 = vector.shape_cast %53 : vector<1x16x8xbf16> to vector<16x8xbf16>
    %cst_39 = arith.constant dense<0.000000e+00> : vector<16x16xf32>
    %55 = tpu.matmul %50, %52, %cst_39 {dimension_numbers = #tpu.dot_dimension_numbers<[1], [1], [0], [0], [0, 0, 1, 0], [], []>} : vector<16x8xbf16>, vector<16x8xbf16>, vector<16x16xf32> -> vector<16x16xf32>
    %56 = vector.broadcast %4 : vector<1x16xf32> to vector<16x16xf32>
    %57 = arith.addf %55, %56 : vector<16x16xf32>
    %c1 = arith.constant 1 : index
    %c0_40 = arith.constant 0 : index
    %c0_41 = arith.constant 0 : index
    %58 = vector.load %arg8[%c1, %c0_40, %c0_41] : memref<4x16x128xf32, #tpu.memory_space<vmem>>, vector<1x16x128xf32>
    %59 = vector.shape_cast %58 : vector<1x16x128xf32> to vector<16x128xf32>
    %cst_42 = arith.constant dense<0xFF800000> : vector<16xf32>
    %60 = vector.multi_reduction <maximumf>, %57, %cst_42 [1] : vector<16x16xf32> to vector<16xf32>
    %61 = vector.shape_cast %60 : vector<16xf32> to vector<16x1xf32>
    %62 = vector.broadcast %61 : vector<16x1xf32> to vector<16x128xf32>
    %63 = arith.maximumf %59, %62 : vector<16x128xf32>
    %64 = vector.extract_strided_slice %59 {offsets = [0, 0], sizes = [16, 1], strides = [1, 1]} : vector<16x128xf32> to vector<16x1xf32>
    %65 = vector.extract_strided_slice %63 {offsets = [0, 0], sizes = [16, 1], strides = [1, 1]} : vector<16x128xf32> to vector<16x1xf32>
    %66 = arith.subf %64, %65 : vector<16x1xf32>
    %67 = math.exp %66 : vector<16x1xf32>
    %68 = vector.extract_strided_slice %63 {offsets = [0, 0], sizes = [16, 1], strides = [1, 1]} : vector<16x128xf32> to vector<16x1xf32>
    %69 = vector.broadcast %68 : vector<16x1xf32> to vector<16x16xf32>
    %70 = arith.subf %57, %69 : vector<16x16xf32>
    %71 = math.exp %70 : vector<16x16xf32>
    %c1_43 = arith.constant 1 : index
    %c0_44 = arith.constant 0 : index
    %c0_45 = arith.constant 0 : index
    %72 = vector.load %arg9[%c1_43, %c0_44, %c0_45] : memref<4x16x128xf32, #tpu.memory_space<vmem>>, vector<1x16x128xf32>
    %73 = vector.shape_cast %72 : vector<1x16x128xf32> to vector<16x128xf32>
    %74 = vector.broadcast %67 : vector<16x1xf32> to vector<16x128xf32>
    %75 = arith.mulf %74, %73 : vector<16x128xf32>
    %cst_46 = arith.constant dense<0.000000e+00> : vector<16xf32>
    %76 = vector.multi_reduction <add>, %71, %cst_46 [1] : vector<16x16xf32> to vector<16xf32>
    %77 = vector.shape_cast %76 : vector<16xf32> to vector<16x1xf32>
    %78 = vector.broadcast %77 : vector<16x1xf32> to vector<16x128xf32>
    %79 = arith.addf %75, %78 : vector<16x128xf32>
    %c1_47 = arith.constant 1 : index
    %c0_48 = arith.constant 0 : index
    %c0_49 = arith.constant 0 : index
    %80 = vector.load %arg9[%c1_47, %c0_48, %c0_49] : memref<4x16x128xf32, #tpu.memory_space<vmem>>, vector<1x16x128xf32>
    %81 = vector.shape_cast %80 : vector<1x16x128xf32> to vector<16x128xf32>
    %82 = vector.shape_cast %79 : vector<16x128xf32> to vector<1x16x128xf32>
    tpu.vector_store %arg9[%c1_47, %c0_48, %c0_49], %82 {strides = array<i32>} : memref<4x16x128xf32, #tpu.memory_space<vmem>>, vector<1x16x128xf32>,
    %c0_50 = arith.constant 0 : index
    %c8_51 = arith.constant 8 : index
    %83 = vector.load %arg10[%c0_50, %c8_51] : memref<16x32xf32, #tpu.memory_space<vmem>>, vector<16x8xf32>
    %84 = vector.broadcast %67 : vector<16x1xf32> to vector<16x8xf32>
    %85 = arith.mulf %84, %83 : vector<16x8xf32>
    %86 = arith.truncf %71 : vector<16x16xf32> to vector<16x16xbf16>
    %cst_52 = arith.constant dense<0.000000e+00> : vector<16x8xf32>
    %87 = tpu.matmul %86, %54, %cst_52 {dimension_numbers = #tpu.dot_dimension_numbers<[1], [0], [0], [1], [0, 0, 1, 1], [], []>} : vector<16x16xbf16>, vector<16x8xbf16>, vector<16x8xf32> -> vector<16x8xf32>
    %88 = arith.addf %85, %87 : vector<16x8xf32>
    %c0_53 = arith.constant 0 : index
    %c8_54 = arith.constant 8 : index
    %89 = vector.load %arg10[%c0_53, %c8_54] : memref<16x32xf32, #tpu.memory_space<vmem>>, vector<16x8xf32>
    tpu.vector_store %arg10[%c0_53, %c8_54], %88 {strides = array<i32>} : memref<16x32xf32, #tpu.memory_space<vmem>>, vector<16x8xf32>,
    %c1_55 = arith.constant 1 : index
    %c0_56 = arith.constant 0 : index
    %c0_57 = arith.constant 0 : index
    %90 = vector.load %arg8[%c1_55, %c0_56, %c0_57] : memref<4x16x128xf32, #tpu.memory_space<vmem>>, vector<1x16x128xf32>
    %91 = vector.shape_cast %90 : vector<1x16x128xf32> to vector<16x128xf32>
    %92 = vector.shape_cast %63 : vector<16x128xf32> to vector<1x16x128xf32>
    tpu.vector_store %arg8[%c1_55, %c0_56, %c0_57], %92 {strides = array<i32>} : memref<4x16x128xf32, #tpu.memory_space<vmem>>, vector<1x16x128xf32>,
    %c0_58 = arith.constant 0 : index
    %c0_59 = arith.constant 0 : index
    %c16 = arith.constant 16 : index
    %93 = vector.load %arg3[%c0_58, %c0_59, %c16] : memref<1x16x32xbf16, #tpu.memory_space<vmem>>, vector<1x16x8xbf16>
    %94 = vector.shape_cast %93 : vector<1x16x8xbf16> to vector<16x8xbf16>
    %c0_60 = arith.constant 0 : index
    %c0_61 = arith.constant 0 : index
    %c16_62 = arith.constant 16 : index
    %95 = vector.load %arg4[%c0_60, %c0_61, %c16_62] : memref<1x16x32xbf16, #tpu.memory_space<vmem>>, vector<1x16x8xbf16>
    %96 = vector.shape_cast %95 : vector<1x16x8xbf16> to vector<16x8xbf16>
    %c0_63 = arith.constant 0 : index
    %c0_64 = arith.constant 0 : index
    %c16_65 = arith.constant 16 : index
    %97 = vector.load %arg5[%c0_63, %c0_64, %c16_65] : memref<1x16x32xbf16, #tpu.memory_space<vmem>>, vector<1x16x8xbf16>
    %98 = vector.shape_cast %97 : vector<1x16x8xbf16> to vector<16x8xbf16>
    %cst_66 = arith.constant dense<0.000000e+00> : vector<16x16xf32>
    %99 = tpu.matmul %94, %96, %cst_66 {dimension_numbers = #tpu.dot_dimension_numbers<[1], [1], [0], [0], [0, 0, 1, 0], [], []>} : vector<16x8xbf16>, vector<16x8xbf16>, vector<16x16xf32> -> vector<16x16xf32>
    %100 = vector.broadcast %4 : vector<1x16xf32> to vector<16x16xf32>
    %101 = arith.addf %99, %100 : vector<16x16xf32>
    %c2 = arith.constant 2 : index
    %c0_67 = arith.constant 0 : index
    %c0_68 = arith.constant 0 : index
    %102 = vector.load %arg8[%c2, %c0_67, %c0_68] : memref<4x16x128xf32, #tpu.memory_space<vmem>>, vector<1x16x128xf32>
    %103 = vector.shape_cast %102 : vector<1x16x128xf32> to vector<16x128xf32>
    %cst_69 = arith.constant dense<0xFF800000> : vector<16xf32>
    %104 = vector.multi_reduction <maximumf>, %101, %cst_69 [1] : vector<16x16xf32> to vector<16xf32>
    %105 = vector.shape_cast %104 : vector<16xf32> to vector<16x1xf32>
    %106 = vector.broadcast %105 : vector<16x1xf32> to vector<16x128xf32>
    %107 = arith.maximumf %103, %106 : vector<16x128xf32>
    %108 = vector.extract_strided_slice %103 {offsets = [0, 0], sizes = [16, 1], strides = [1, 1]} : vector<16x128xf32> to vector<16x1xf32>
    %109 = vector.extract_strided_slice %107 {offsets = [0, 0], sizes = [16, 1], strides = [1, 1]} : vector<16x128xf32> to vector<16x1xf32>
    %110 = arith.subf %108, %109 : vector<16x1xf32>
    %111 = math.exp %110 : vector<16x1xf32>
    %112 = vector.extract_strided_slice %107 {offsets = [0, 0], sizes = [16, 1], strides = [1, 1]} : vector<16x128xf32> to vector<16x1xf32>
    %113 = vector.broadcast %112 : vector<16x1xf32> to vector<16x16xf32>
    %114 = arith.subf %101, %113 : vector<16x16xf32>
    %115 = math.exp %114 : vector<16x16xf32>
    %c2_70 = arith.constant 2 : index
    %c0_71 = arith.constant 0 : index
    %c0_72 = arith.constant 0 : index
    %116 = vector.load %arg9[%c2_70, %c0_71, %c0_72] : memref<4x16x128xf32, #tpu.memory_space<vmem>>, vector<1x16x128xf32>
    %117 = vector.shape_cast %116 : vector<1x16x128xf32> to vector<16x128xf32>
    %118 = vector.broadcast %111 : vector<16x1xf32> to vector<16x128xf32>
    %119 = arith.mulf %118, %117 : vector<16x128xf32>
    %cst_73 = arith.constant dense<0.000000e+00> : vector<16xf32>
    %120 = vector.multi_reduction <add>, %115, %cst_73 [1] : vector<16x16xf32> to vector<16xf32>
    %121 = vector.shape_cast %120 : vector<16xf32> to vector<16x1xf32>
    %122 = vector.broadcast %121 : vector<16x1xf32> to vector<16x128xf32>
    %123 = arith.addf %119, %122 : vector<16x128xf32>
    %c2_74 = arith.constant 2 : index
    %c0_75 = arith.constant 0 : index
    %c0_76 = arith.constant 0 : index
    %124 = vector.load %arg9[%c2_74, %c0_75, %c0_76] : memref<4x16x128xf32, #tpu.memory_space<vmem>>, vector<1x16x128xf32>
    %125 = vector.shape_cast %124 : vector<1x16x128xf32> to vector<16x128xf32>
    %126 = vector.shape_cast %123 : vector<16x128xf32> to vector<1x16x128xf32>
    tpu.vector_store %arg9[%c2_74, %c0_75, %c0_76], %126 {strides = array<i32>} : memref<4x16x128xf32, #tpu.memory_space<vmem>>, vector<1x16x128xf32>,
    %c0_77 = arith.constant 0 : index
    %c16_78 = arith.constant 16 : index
    %127 = vector.load %arg10[%c0_77, %c16_78] : memref<16x32xf32, #tpu.memory_space<vmem>>, vector<16x8xf32>
    %128 = vector.broadcast %111 : vector<16x1xf32> to vector<16x8xf32>
    %129 = arith.mulf %128, %127 : vector<16x8xf32>
    %130 = arith.truncf %115 : vector<16x16xf32> to vector<16x16xbf16>
    %cst_79 = arith.constant dense<0.000000e+00> : vector<16x8xf32>
    %131 = tpu.matmul %130, %98, %cst_79 {dimension_numbers = #tpu.dot_dimension_numbers<[1], [0], [0], [1], [0, 0, 1, 1], [], []>} : vector<16x16xbf16>, vector<16x8xbf16>, vector<16x8xf32> -> vector<16x8xf32>
    %132 = arith.addf %129, %131 : vector<16x8xf32>
    %c0_80 = arith.constant 0 : index
    %c16_81 = arith.constant 16 : index
    %133 = vector.load %arg10[%c0_80, %c16_81] : memref<16x32xf32, #tpu.memory_space<vmem>>, vector<16x8xf32>
    tpu.vector_store %arg10[%c0_80, %c16_81], %132 {strides = array<i32>} : memref<16x32xf32, #tpu.memory_space<vmem>>, vector<16x8xf32>,
    %c2_82 = arith.constant 2 : index
    %c0_83 = arith.constant 0 : index
    %c0_84 = arith.constant 0 : index
    %134 = vector.load %arg8[%c2_82, %c0_83, %c0_84] : memref<4x16x128xf32, #tpu.memory_space<vmem>>, vector<1x16x128xf32>
    %135 = vector.shape_cast %134 : vector<1x16x128xf32> to vector<16x128xf32>
    %136 = vector.shape_cast %107 : vector<16x128xf32> to vector<1x16x128xf32>
    tpu.vector_store %arg8[%c2_82, %c0_83, %c0_84], %136 {strides = array<i32>} : memref<4x16x128xf32, #tpu.memory_space<vmem>>, vector<1x16x128xf32>,
    %c0_85 = arith.constant 0 : index
    %c0_86 = arith.constant 0 : index
    %c24 = arith.constant 24 : index
    %137 = vector.load %arg3[%c0_85, %c0_86, %c24] : memref<1x16x32xbf16, #tpu.memory_space<vmem>>, vector<1x16x8xbf16>
    %138 = vector.shape_cast %137 : vector<1x16x8xbf16> to vector<16x8xbf16>
    %c0_87 = arith.constant 0 : index
    %c0_88 = arith.constant 0 : index
    %c24_89 = arith.constant 24 : index
    %139 = vector.load %arg4[%c0_87, %c0_88, %c24_89] : memref<1x16x32xbf16, #tpu.memory_space<vmem>>, vector<1x16x8xbf16>
    %140 = vector.shape_cast %139 : vector<1x16x8xbf16> to vector<16x8xbf16>
    %c0_90 = arith.constant 0 : index
    %c0_91 = arith.constant 0 : index
    %c24_92 = arith.constant 24 : index
    %141 = vector.load %arg5[%c0_90, %c0_91, %c24_92] : memref<1x16x32xbf16, #tpu.memory_space<vmem>>, vector<1x16x8xbf16>
    %142 = vector.shape_cast %141 : vector<1x16x8xbf16> to vector<16x8xbf16>
    %cst_93 = arith.constant dense<0.000000e+00> : vector<16x16xf32>
    %143 = tpu.matmul %138, %140, %cst_93 {dimension_numbers = #tpu.dot_dimension_numbers<[1], [1], [0], [0], [0, 0, 1, 0], [], []>} : vector<16x8xbf16>, vector<16x8xbf16>, vector<16x16xf32> -> vector<16x16xf32>
    %144 = vector.broadcast %4 : vector<1x16xf32> to vector<16x16xf32>
    %145 = arith.addf %143, %144 : vector<16x16xf32>
    %c3 = arith.constant 3 : index
    %c0_94 = arith.constant 0 : index
    %c0_95 = arith.constant 0 : index
    %146 = vector.load %arg8[%c3, %c0_94, %c0_95] : memref<4x16x128xf32, #tpu.memory_space<vmem>>, vector<1x16x128xf32>
    %147 = vector.shape_cast %146 : vector<1x16x128xf32> to vector<16x128xf32>
    %cst_96 = arith.constant dense<0xFF800000> : vector<16xf32>
    %148 = vector.multi_reduction <maximumf>, %145, %cst_96 [1] : vector<16x16xf32> to vector<16xf32>
    %149 = vector.shape_cast %148 : vector<16xf32> to vector<16x1xf32>
    %150 = vector.broadcast %149 : vector<16x1xf32> to vector<16x128xf32>
    %151 = arith.maximumf %147, %150 : vector<16x128xf32>
    %152 = vector.extract_strided_slice %147 {offsets = [0, 0], sizes = [16, 1], strides = [1, 1]} : vector<16x128xf32> to vector<16x1xf32>
    %153 = vector.extract_strided_slice %151 {offsets = [0, 0], sizes = [16, 1], strides = [1, 1]} : vector<16x128xf32> to vector<16x1xf32>
    %154 = arith.subf %152, %153 : vector<16x1xf32>
    %155 = math.exp %154 : vector<16x1xf32>
    %156 = vector.extract_strided_slice %151 {offsets = [0, 0], sizes = [16, 1], strides = [1, 1]} : vector<16x128xf32> to vector<16x1xf32>
    %157 = vector.broadcast %156 : vector<16x1xf32> to vector<16x16xf32>
    %158 = arith.subf %145, %157 : vector<16x16xf32>
    %159 = math.exp %158 : vector<16x16xf32>
    %c3_97 = arith.constant 3 : index
    %c0_98 = arith.constant 0 : index
    %c0_99 = arith.constant 0 : index
    %160 = vector.load %arg9[%c3_97, %c0_98, %c0_99] : memref<4x16x128xf32, #tpu.memory_space<vmem>>, vector<1x16x128xf32>
    %161 = vector.shape_cast %160 : vector<1x16x128xf32> to vector<16x128xf32>
    %162 = vector.broadcast %155 : vector<16x1xf32> to vector<16x128xf32>
    %163 = arith.mulf %162, %161 : vector<16x128xf32>
    %cst_100 = arith.constant dense<0.000000e+00> : vector<16xf32>
    %164 = vector.multi_reduction <add>, %159, %cst_100 [1] : vector<16x16xf32> to vector<16xf32>
    %165 = vector.shape_cast %164 : vector<16xf32> to vector<16x1xf32>
    %166 = vector.broadcast %165 : vector<16x1xf32> to vector<16x128xf32>
    %167 = arith.addf %163, %166 : vector<16x128xf32>
    %c3_101 = arith.constant 3 : index
    %c0_102 = arith.constant 0 : index
    %c0_103 = arith.constant 0 : index
    %168 = vector.load %arg9[%c3_101, %c0_102, %c0_103] : memref<4x16x128xf32, #tpu.memory_space<vmem>>, vector<1x16x128xf32>
    %169 = vector.shape_cast %168 : vector<1x16x128xf32> to vector<16x128xf32>
    %170 = vector.shape_cast %167 : vector<16x128xf32> to vector<1x16x128xf32>
    tpu.vector_store %arg9[%c3_101, %c0_102, %c0_103], %170 {strides = array<i32>} : memref<4x16x128xf32, #tpu.memory_space<vmem>>, vector<1x16x128xf32>,
    %c0_104 = arith.constant 0 : index
    %c24_105 = arith.constant 24 : index
    %171 = vector.load %arg10[%c0_104, %c24_105] : memref<16x32xf32, #tpu.memory_space<vmem>>, vector<16x8xf32>
    %172 = vector.broadcast %155 : vector<16x1xf32> to vector<16x8xf32>
    %173 = arith.mulf %172, %171 : vector<16x8xf32>
    %174 = arith.truncf %159 : vector<16x16xf32> to vector<16x16xbf16>
    %cst_106 = arith.constant dense<0.000000e+00> : vector<16x8xf32>
    %175 = tpu.matmul %174, %142, %cst_106 {dimension_numbers = #tpu.dot_dimension_numbers<[1], [0], [0], [1], [0, 0, 1, 1], [], []>} : vector<16x16xbf16>, vector<16x8xbf16>, vector<16x8xf32> -> vector<16x8xf32>
    %176 = arith.addf %173, %175 : vector<16x8xf32>
    %c0_107 = arith.constant 0 : index
    %c24_108 = arith.constant 24 : index
    %177 = vector.load %arg10[%c0_107, %c24_108] : memref<16x32xf32, #tpu.memory_space<vmem>>, vector<16x8xf32>
    tpu.vector_store %arg10[%c0_107, %c24_108], %176 {strides = array<i32>} : memref<16x32xf32, #tpu.memory_space<vmem>>, vector<16x8xf32>,
    %c3_109 = arith.constant 3 : index
    %c0_110 = arith.constant 0 : index
    %c0_111 = arith.constant 0 : index
    %178 = vector.load %arg8[%c3_109, %c0_110, %c0_111] : memref<4x16x128xf32, #tpu.memory_space<vmem>>, vector<1x16x128xf32>
    %179 = vector.shape_cast %178 : vector<1x16x128xf32> to vector<16x128xf32>
    %180 = vector.shape_cast %151 : vector<16x128xf32> to vector<1x16x128xf32>
    tpu.vector_store %arg8[%c3_109, %c0_110, %c0_111], %180 {strides = array<i32>} : memref<4x16x128xf32, #tpu.memory_space<vmem>>, vector<1x16x128xf32>,
    %c0_i32_112 = arith.constant 0 : i32
    %181 = arith.cmpi eq, %arg2, %c0_i32_112 : i32
    %182 = arith.extui %181 : i1 to i32
    %c0_i32_113 = arith.constant 0 : i32
    %183 = arith.cmpi ne, %182, %c0_i32_113 : i32
    scf.if %183 {
      %c0_114 = arith.constant 0 : index
      %c0_115 = arith.constant 0 : index
      %c0_116 = arith.constant 0 : index
      %184 = vector.load %arg9[%c0_114, %c0_115, %c0_116] : memref<4x16x128xf32, #tpu.memory_space<vmem>>, vector<1x16x128xf32>
      %185 = vector.shape_cast %184 : vector<1x16x128xf32> to vector<16x128xf32>
      %186 = vector.extract_strided_slice %185 {offsets = [0, 0], sizes = [16, 1], strides = [1, 1]} : vector<16x128xf32> to vector<16x1xf32>
      %187 = tpu.reciprocal %186 {approx = true} : vector<16x1xf32> -> vector<16x1xf32>
      %c0_117 = arith.constant 0 : index
      %c0_118 = arith.constant 0 : index
      %188 = vector.load %arg10[%c0_117, %c0_118] : memref<16x32xf32, #tpu.memory_space<vmem>>, vector<16x8xf32>
      %189 = vector.broadcast %187 : vector<16x1xf32> to vector<16x8xf32>
      %190 = arith.mulf %188, %189 : vector<16x8xf32>
      %191 = arith.truncf %190 : vector<16x8xf32> to vector<16x8xbf16>
      %c0_119 = arith.constant 0 : index
      %c0_120 = arith.constant 0 : index
      %c0_121 = arith.constant 0 : index
      %192 = vector.load %arg7[%c0_119, %c0_120, %c0_121] : memref<1x16x32xbf16, #tpu.memory_space<vmem>>, vector<1x16x8xbf16>
      %193 = vector.shape_cast %192 : vector<1x16x8xbf16> to vector<16x8xbf16>
      %194 = vector.shape_cast %191 : vector<16x8xbf16> to vector<1x16x8xbf16>
      tpu.vector_store %arg7[%c0_119, %c0_120, %c0_121], %194 {strides = array<i32>} : memref<1x16x32xbf16, #tpu.memory_space<vmem>>, vector<1x16x8xbf16>,
      %c1_122 = arith.constant 1 : index
      %c0_123 = arith.constant 0 : index
      %c0_124 = arith.constant 0 : index
      %195 = vector.load %arg9[%c1_122, %c0_123, %c0_124] : memref<4x16x128xf32, #tpu.memory_space<vmem>>, vector<1x16x128xf32>
      %196 = vector.shape_cast %195 : vector<1x16x128xf32> to vector<16x128xf32>
      %197 = vector.extract_strided_slice %196 {offsets = [0, 0], sizes = [16, 1], strides = [1, 1]} : vector<16x128xf32> to vector<16x1xf32>
      %198 = tpu.reciprocal %197 {approx = true} : vector<16x1xf32> -> vector<16x1xf32>
      %c0_125 = arith.constant 0 : index
      %c8_126 = arith.constant 8 : index
      %199 = vector.load %arg10[%c0_125, %c8_126] : memref<16x32xf32, #tpu.memory_space<vmem>>, vector<16x8xf32>
      %200 = vector.broadcast %198 : vector<16x1xf32> to vector<16x8xf32>
      %201 = arith.mulf %199, %200 : vector<16x8xf32>
      %202 = arith.truncf %201 : vector<16x8xf32> to vector<16x8xbf16>
      %c0_127 = arith.constant 0 : index
      %c0_128 = arith.constant 0 : index
      %c8_129 = arith.constant 8 : index
      %203 = vector.load %arg7[%c0_127, %c0_128, %c8_129] : memref<1x16x32xbf16, #tpu.memory_space<vmem>>, vector<1x16x8xbf16>
      %204 = vector.shape_cast %203 : vector<1x16x8xbf16> to vector<16x8xbf16>
      %205 = vector.shape_cast %202 : vector<16x8xbf16> to vector<1x16x8xbf16>
      tpu.vector_store %arg7[%c0_127, %c0_128, %c8_129], %205 {strides = array<i32>} : memref<1x16x32xbf16, #tpu.memory_space<vmem>>, vector<1x16x8xbf16>,
      %c2_130 = arith.constant 2 : index
      %c0_131 = arith.constant 0 : index
      %c0_132 = arith.constant 0 : index
      %206 = vector.load %arg9[%c2_130, %c0_131, %c0_132] : memref<4x16x128xf32, #tpu.memory_space<vmem>>, vector<1x16x128xf32>
      %207 = vector.shape_cast %206 : vector<1x16x128xf32> to vector<16x128xf32>
      %208 = vector.extract_strided_slice %207 {offsets = [0, 0], sizes = [16, 1], strides = [1, 1]} : vector<16x128xf32> to vector<16x1xf32>
      %209 = tpu.reciprocal %208 {approx = true} : vector<16x1xf32> -> vector<16x1xf32>
      %c0_133 = arith.constant 0 : index
      %c16_134 = arith.constant 16 : index
      %210 = vector.load %arg10[%c0_133, %c16_134] : memref<16x32xf32, #tpu.memory_space<vmem>>, vector<16x8xf32>
      %211 = vector.broadcast %209 : vector<16x1xf32> to vector<16x8xf32>
      %212 = arith.mulf %210, %211 : vector<16x8xf32>
      %213 = arith.truncf %212 : vector<16x8xf32> to vector<16x8xbf16>
      %c0_135 = arith.constant 0 : index
      %c0_136 = arith.constant 0 : index
      %c16_137 = arith.constant 16 : index
      %214 = vector.load %arg7[%c0_135, %c0_136, %c16_137] : memref<1x16x32xbf16, #tpu.memory_space<vmem>>, vector<1x16x8xbf16>
      %215 = vector.shape_cast %214 : vector<1x16x8xbf16> to vector<16x8xbf16>
      %216 = vector.shape_cast %213 : vector<16x8xbf16> to vector<1x16x8xbf16>
      tpu.vector_store %arg7[%c0_135, %c0_136, %c16_137], %216 {strides = array<i32>} : memref<1x16x32xbf16, #tpu.memory_space<vmem>>, vector<1x16x8xbf16>,
      %c3_138 = arith.constant 3 : index
      %c0_139 = arith.constant 0 : index
      %c0_140 = arith.constant 0 : index
      %217 = vector.load %arg9[%c3_138, %c0_139, %c0_140] : memref<4x16x128xf32, #tpu.memory_space<vmem>>, vector<1x16x128xf32>
      %218 = vector.shape_cast %217 : vector<1x16x128xf32> to vector<16x128xf32>
      %219 = vector.extract_strided_slice %218 {offsets = [0, 0], sizes = [16, 1], strides = [1, 1]} : vector<16x128xf32> to vector<16x1xf32>
      %220 = tpu.reciprocal %219 {approx = true} : vector<16x1xf32> -> vector<16x1xf32>
      %c0_141 = arith.constant 0 : index
      %c24_142 = arith.constant 24 : index
      %221 = vector.load %arg10[%c0_141, %c24_142] : memref<16x32xf32, #tpu.memory_space<vmem>>, vector<16x8xf32>
      %222 = vector.broadcast %220 : vector<16x1xf32> to vector<16x8xf32>
      %223 = arith.mulf %221, %222 : vector<16x8xf32>
      %224 = arith.truncf %223 : vector<16x8xf32> to vector<16x8xbf16>
      %c0_143 = arith.constant 0 : index
      %c0_144 = arith.constant 0 : index
      %c24_145 = arith.constant 24 : index
      %225 = vector.load %arg7[%c0_143, %c0_144, %c24_145] : memref<1x16x32xbf16, #tpu.memory_space<vmem>>, vector<1x16x8xbf16>
      %226 = vector.shape_cast %225 : vector<1x16x8xbf16> to vector<16x8xbf16>
      %227 = vector.shape_cast %224 : vector<16x8xbf16> to vector<1x16x8xbf16>
      tpu.vector_store %arg7[%c0_143, %c0_144, %c24_145], %227 {strides = array<i32>} : memref<1x16x32xbf16, #tpu.memory_space<vmem>>, vector<1x16x8xbf16>,
    } else {
    }
    return
  }
  func.func @transform_0(%arg0: i32, %arg1: i32, %arg2: i32) -> (i32, i32, i32) {
    %c0_i32 = arith.constant 0 : i32
    %c0_i32_0 = arith.constant 0 : i32
    return %arg0, %arg1, %c0_i32 : i32, i32, i32
  }
  func.func @transform_1(%arg0: i32, %arg1: i32, %arg2: i32) -> (i32, i32, i32) {
    %c0_i32 = arith.constant 0 : i32
    %c0_i32_0 = arith.constant 0 : i32
    return %arg0, %arg2, %c0_i32 : i32, i32, i32
  }
  func.func @transform_2(%arg0: i32, %arg1: i32, %arg2: i32) -> (i32, i32, i32) {
    %c0_i32 = arith.constant 0 : i32
    %c0_i32_0 = arith.constant 0 : i32
    return %arg0, %arg2, %c0_i32 : i32, i32, i32
  }
  func.func @transform_3(%arg0: i32, %arg1: i32, %arg2: i32) -> (i32, i32, i32) {
    %c0_i32 = arith.constant 0 : i32
    %c0_i32_0 = arith.constant 0 : i32
    return %arg0, %c0_i32, %arg2 : i32, i32, i32
  }
  func.func @transform_4(%arg0: i32, %arg1: i32, %arg2: i32) -> (i32, i32, i32) {
    %c0_i32 = arith.constant 0 : i32
    %c0_i32_0 = arith.constant 0 : i32
    return %arg0, %arg1, %c0_i32 : i32, i32, i32
  }
}

module attributes {stable_mosaic.version = 11 : i64} {
  func.func @_ln_kernel(%arg0: i32, %arg1: memref<32x32xbf16, #tpu.memory_space<vmem>>, %arg2: memref<1x32xf32, #tpu.memory_space<vmem>>, %arg3: memref<1x32xf32, #tpu.memory_space<vmem>>, %arg4: memref<32x32xbf16, #tpu.memory_space<vmem>>) attributes {dimension_semantics = [#tpu.dimension_semantics<parallel>], iteration_bounds = array<i64: 1>, scalar_prefetch = 0 : i64, scratch_operands = 0 : i64, tpu.core_type = #tpu.core_type<tc>, window_params = [{transform_indices = @transform_0, window_bounds = array<i64: 32, 32>}, {pipeline_mode = #tpu.pipeline_mode<synchronous>, transform_indices = @transform_1, window_bounds = array<i64: 1, 32>}, {pipeline_mode = #tpu.pipeline_mode<synchronous>, transform_indices = @transform_2, window_bounds = array<i64: 1, 32>}, {transform_indices = @transform_3, window_bounds = array<i64: 32, 32>}]} {
    %c0 = arith.constant 0 : index
    %c0_0 = arith.constant 0 : index
    %0 = vector.load %arg1[%c0, %c0_0] : memref<32x32xbf16, #tpu.memory_space<vmem>>, vector<32x32xbf16>
    %c0_1 = arith.constant 0 : index
    %c0_2 = arith.constant 0 : index
    %1 = vector.load %arg2[%c0_1, %c0_2] : memref<1x32xf32, #tpu.memory_space<vmem>>, vector<1x32xf32>
    %c0_3 = arith.constant 0 : index
    %c0_4 = arith.constant 0 : index
    %2 = vector.load %arg3[%c0_3, %c0_4] : memref<1x32xf32, #tpu.memory_space<vmem>>, vector<1x32xf32>
    %3 = arith.extf %0 : vector<32x32xbf16> to vector<32x32xf32>
    %cst = arith.constant dense<0.000000e+00> : vector<32xf32>
    %4 = vector.multi_reduction <add>, %3, %cst [1] : vector<32x32xf32> to vector<32xf32>
    %5 = vector.shape_cast %4 : vector<32xf32> to vector<32x1xf32>
    %cst_5 = arith.constant 3.200000e+01 : f32
    %6 = vector.broadcast %cst_5 : f32 to vector<32x1xf32>
    %7 = arith.divf %5, %6 : vector<32x1xf32>
    %8 = vector.broadcast %7 : vector<32x1xf32> to vector<32x32xf32>
    %9 = arith.subf %3, %8 : vector<32x32xf32>
    %10 = arith.mulf %9, %9 : vector<32x32xf32>
    %cst_6 = arith.constant dense<0.000000e+00> : vector<32xf32>
    %11 = vector.multi_reduction <add>, %10, %cst_6 [1] : vector<32x32xf32> to vector<32xf32>
    %12 = vector.shape_cast %11 : vector<32xf32> to vector<32x1xf32>
    %cst_7 = arith.constant 3.200000e+01 : f32
    %13 = vector.broadcast %cst_7 : f32 to vector<32x1xf32>
    %14 = arith.divf %12, %13 : vector<32x1xf32>
    %cst_8 = arith.constant 9.99999996E-13 : f32
    %15 = vector.broadcast %cst_8 : f32 to vector<32x1xf32>
    %16 = arith.addf %14, %15 : vector<32x1xf32>
    %17 = math.rsqrt %16 : vector<32x1xf32>
    %18 = vector.broadcast %17 : vector<32x1xf32> to vector<32x32xf32>
    %19 = arith.mulf %9, %18 : vector<32x32xf32>
    %20 = vector.broadcast %1 : vector<1x32xf32> to vector<32x32xf32>
    %21 = arith.mulf %19, %20 : vector<32x32xf32>
    %22 = vector.broadcast %2 : vector<1x32xf32> to vector<32x32xf32>
    %23 = arith.addf %21, %22 : vector<32x32xf32>
    %24 = arith.truncf %23 : vector<32x32xf32> to vector<32x32xbf16>
    %c0_9 = arith.constant 0 : index
    %c0_10 = arith.constant 0 : index
    %25 = vector.load %arg4[%c0_9, %c0_10] : memref<32x32xbf16, #tpu.memory_space<vmem>>, vector<32x32xbf16>
    tpu.vector_store %arg4[%c0_9, %c0_10], %24 {strides = array<i32>} : memref<32x32xbf16, #tpu.memory_space<vmem>>, vector<32x32xbf16>,
    return
  }
  func.func @transform_0(%arg0: i32) -> (i32, i32) {
    %c0_i32 = arith.constant 0 : i32
    %c0_i32_0 = arith.constant 0 : i32
    return %arg0, %c0_i32 : i32, i32
  }
  func.func @transform_1(%arg0: i32) -> (i32, i32) {
    %c0_i32 = arith.constant 0 : i32
    %c0_i32_0 = arith.constant 0 : i32
    %c0_i32_1 = arith.constant 0 : i32
    return %c0_i32, %c0_i32_0 : i32, i32
  }
  func.func @transform_2(%arg0: i32) -> (i32, i32) {
    %c0_i32 = arith.constant 0 : i32
    %c0_i32_0 = arith.constant 0 : i32
    %c0_i32_1 = arith.constant 0 : i32
    return %c0_i32, %c0_i32_0 : i32, i32
  }
  func.func @transform_3(%arg0: i32) -> (i32, i32) {
    %c0_i32 = arith.constant 0 : i32
    %c0_i32_0 = arith.constant 0 : i32
    return %arg0, %c0_i32 : i32, i32
  }
}

module attributes {stable_mosaic.version = 11 : i64} {
  func.func @kernel(%arg0: i32, %arg1: memref<1x24x32xf32, #tpu.memory_space<vmem>>, %arg2: memref<3x32x32xbf16, #tpu.memory_space<vmem>>, %arg3: memref<1x32xf32, #tpu.memory_space<vmem>>, %arg4: memref<1x32xf32, #tpu.memory_space<vmem>>, %arg5: memref<1x1xf32, #tpu.memory_space<vmem>>, %arg6: memref<1x1x16xf32, #tpu.memory_space<vmem>>, %arg7: memref<1x1x16xf32, #tpu.memory_space<vmem>>) attributes {dimension_semantics = [#tpu.dimension_semantics<parallel>], iteration_bounds = array<i64: 2>, scalar_prefetch = 0 : i64, scratch_operands = 0 : i64, tpu.core_type = #tpu.core_type<tc>, window_params = [{transform_indices = @transform_0, window_bounds = array<i64: 1, 24, 32>}, {pipeline_mode = #tpu.pipeline_mode<synchronous>, transform_indices = @transform_1, window_bounds = array<i64: 3, 32, 32>}, {pipeline_mode = #tpu.pipeline_mode<synchronous>, transform_indices = @transform_2, window_bounds = array<i64: 1, 32>}, {pipeline_mode = #tpu.pipeline_mode<synchronous>, transform_indices = @transform_3, window_bounds = array<i64: 1, 32>}, {pipeline_mode = #tpu.pipeline_mode<synchronous>, transform_indices = @transform_4, window_bounds = array<i64: 1, 1>}, {transform_indices = @transform_5, window_bounds = array<i64: 1, 1, 16>}, {transform_indices = @transform_6, window_bounds = array<i64: 1, 1, 16>}]} {
    %c0 = arith.constant 0 : index
    %c1 = arith.constant 1 : index
    %c0_0 = arith.constant 0 : index
    %0 = vector.load %arg1[%c0, %c1, %c0_0] : memref<1x24x32xf32, #tpu.memory_space<vmem>>, vector<1x16x32xf32>
    %1 = vector.shape_cast %0 : vector<1x16x32xf32> to vector<16x32xf32>
    %cst = arith.constant 0.000000e+00 : f32
    %2 = vector.broadcast %cst : f32 to vector<16x32xf32>
    %c0_1 = arith.constant 0 : index
    %c0_2 = arith.constant 0 : index
    %c0_3 = arith.constant 0 : index
    %3 = vector.load %arg1[%c0_1, %c0_2, %c0_3] : memref<1x24x32xf32, #tpu.memory_space<vmem>>, vector<1x16x32xf32>
    %4 = vector.shape_cast %3 : vector<1x16x32xf32> to vector<16x32xf32>
    %5 = arith.truncf %4 : vector<16x32xf32> to vector<16x32xbf16>
    %c0_4 = arith.constant 0 : index
    %c0_5 = arith.constant 0 : index
    %c0_6 = arith.constant 0 : index
    %6 = vector.load %arg2[%c0_4, %c0_5, %c0_6] : memref<3x32x32xbf16, #tpu.memory_space<vmem>>, vector<1x32x32xbf16>
    %7 = vector.shape_cast %6 : vector<1x32x32xbf16> to vector<32x32xbf16>
    %cst_7 = arith.constant dense<0.000000e+00> : vector<16x32xf32>
    %8 = tpu.matmul %5, %7, %cst_7 {dimension_numbers = #tpu.dot_dimension_numbers<[1], [0], [0], [1], [0, 0, 1, 1], [], []>} : vector<16x32xbf16>, vector<32x32xbf16>, vector<16x32xf32> -> vector<16x32xf32>
    %9 = arith.addf %2, %8 : vector<16x32xf32>
    %10 = arith.truncf %1 : vector<16x32xf32> to vector<16x32xbf16>
    %c1_8 = arith.constant 1 : index
    %c0_9 = arith.constant 0 : index
    %c0_10 = arith.constant 0 : index
    %11 = vector.load %arg2[%c1_8, %c0_9, %c0_10] : memref<3x32x32xbf16, #tpu.memory_space<vmem>>, vector<1x32x32xbf16>
    %12 = vector.shape_cast %11 : vector<1x32x32xbf16> to vector<32x32xbf16>
    %cst_11 = arith.constant dense<0.000000e+00> : vector<16x32xf32>
    %13 = tpu.matmul %10, %12, %cst_11 {dimension_numbers = #tpu.dot_dimension_numbers<[1], [0], [0], [1], [0, 0, 1, 1], [], []>} : vector<16x32xbf16>, vector<32x32xbf16>, vector<16x32xf32> -> vector<16x32xf32>
    %14 = arith.addf %9, %13 : vector<16x32xf32>
    %c0_12 = arith.constant 0 : index
    %c2 = arith.constant 2 : index
    %c0_13 = arith.constant 0 : index
    %15 = vector.load %arg1[%c0_12, %c2, %c0_13] : memref<1x24x32xf32, #tpu.memory_space<vmem>>, vector<1x16x32xf32>
    %16 = vector.shape_cast %15 : vector<1x16x32xf32> to vector<16x32xf32>
    %17 = arith.truncf %16 : vector<16x32xf32> to vector<16x32xbf16>
    %c2_14 = arith.constant 2 : index
    %c0_15 = arith.constant 0 : index
    %c0_16 = arith.constant 0 : index
    %18 = vector.load %arg2[%c2_14, %c0_15, %c0_16] : memref<3x32x32xbf16, #tpu.memory_space<vmem>>, vector<1x32x32xbf16>
    %19 = vector.shape_cast %18 : vector<1x32x32xbf16> to vector<32x32xbf16>
    %cst_17 = arith.constant dense<0.000000e+00> : vector<16x32xf32>
    %20 = tpu.matmul %17, %19, %cst_17 {dimension_numbers = #tpu.dot_dimension_numbers<[1], [0], [0], [1], [0, 0, 1, 1], [], []>} : vector<16x32xbf16>, vector<32x32xbf16>, vector<16x32xf32> -> vector<16x32xf32>
    %21 = arith.addf %14, %20 : vector<16x32xf32>
    %c0_18 = arith.constant 0 : index
    %c0_19 = arith.constant 0 : index
    %22 = vector.load %arg3[%c0_18, %c0_19] : memref<1x32xf32, #tpu.memory_space<vmem>>, vector<1x32xf32>
    %23 = vector.broadcast %22 : vector<1x32xf32> to vector<16x32xf32>
    %24 = arith.addf %21, %23 : vector<16x32xf32>
    %25 = arith.addf %24, %1 : vector<16x32xf32>
    %cst_20 = arith.constant 0.000000e+00 : f32
    %26 = vector.broadcast %cst_20 : f32 to vector<16x32xf32>
    %27 = arith.maximumf %25, %26 : vector<16x32xf32>
    %c0_21 = arith.constant 0 : index
    %c0_22 = arith.constant 0 : index
    %28 = vector.load %arg4[%c0_21, %c0_22] : memref<1x32xf32, #tpu.memory_space<vmem>>, vector<1x32xf32>
    %cst_23 = arith.constant dense<0.000000e+00> : vector<1x16xf32>
    %29 = tpu.matmul %28, %27, %cst_23 {dimension_numbers = #tpu.dot_dimension_numbers<[1], [1], [0], [0], [0, 0, 1, 0], [], []>} : vector<1x32xf32>, vector<16x32xf32>, vector<1x16xf32> -> vector<1x16xf32>
    %c0_24 = arith.constant 0 : index
    %c0_25 = arith.constant 0 : index
    %30 = vector.load %arg5[%c0_24, %c0_25] : memref<1x1xf32, #tpu.memory_space<vmem>>, vector<1x1xf32>
    %31 = vector.broadcast %30 : vector<1x1xf32> to vector<1x16xf32>
    %32 = arith.addf %29, %31 : vector<1x16xf32>
    %33 = arith.negf %32 : vector<1x16xf32>
    %34 = math.exp %33 : vector<1x16xf32>
    %cst_26 = arith.constant 1.000000e+00 : f32
    %35 = vector.broadcast %cst_26 : f32 to vector<1x16xf32>
    %36 = arith.addf %35, %34 : vector<1x16xf32>
    %37 = arith.divf %35, %36 : vector<1x16xf32>
    %cst_27 = arith.constant 0.000000e+00 : f32
    %38 = vector.broadcast %cst_27 : f32 to vector<1x16xf32>
    %39 = arith.maximumf %37, %38 : vector<1x16xf32>
    %c0_28 = arith.constant 0 : index
    %c0_29 = arith.constant 0 : index
    %c0_30 = arith.constant 0 : index
    %40 = vector.load %arg6[%c0_28, %c0_29, %c0_30] : memref<1x1x16xf32, #tpu.memory_space<vmem>>, vector<1x1x16xf32>
    %41 = vector.shape_cast %40 : vector<1x1x16xf32> to vector<1x16xf32>
    %42 = arith.mulf %39, %41 : vector<1x16xf32>
    %c0_31 = arith.constant 0 : index
    %c0_32 = arith.constant 0 : index
    %c0_33 = arith.constant 0 : index
    %43 = vector.load %arg7[%c0_31, %c0_32, %c0_33] : memref<1x1x16xf32, #tpu.memory_space<vmem>>, vector<1x1x16xf32>
    %44 = vector.shape_cast %43 : vector<1x1x16xf32> to vector<1x16xf32>
    %45 = vector.shape_cast %42 : vector<1x16xf32> to vector<1x1x16xf32>
    tpu.vector_store %arg7[%c0_31, %c0_32, %c0_33], %45 {strides = array<i32>} : memref<1x1x16xf32, #tpu.memory_space<vmem>>, vector<1x1x16xf32>,
    return
  }
  func.func @transform_0(%arg0: i32) -> (i32, i32, i32) {
    %c0_i32 = arith.constant 0 : i32
    %c0_i32_0 = arith.constant 0 : i32
    %c0_i32_1 = arith.constant 0 : i32
    return %arg0, %c0_i32, %c0_i32_0 : i32, i32, i32
  }
  func.func @transform_1(%arg0: i32) -> (i32, i32, i32) {
    %c0_i32 = arith.constant 0 : i32
    %c0_i32_0 = arith.constant 0 : i32
    %c0_i32_1 = arith.constant 0 : i32
    %c0_i32_2 = arith.constant 0 : i32
    return %c0_i32, %c0_i32_0, %c0_i32_1 : i32, i32, i32
  }
  func.func @transform_2(%arg0: i32) -> (i32, i32) {
    %c0_i32 = arith.constant 0 : i32
    %c0_i32_0 = arith.constant 0 : i32
    %c0_i32_1 = arith.constant 0 : i32
    return %c0_i32, %c0_i32_0 : i32, i32
  }
  func.func @transform_3(%arg0: i32) -> (i32, i32) {
    %c0_i32 = arith.constant 0 : i32
    %c0_i32_0 = arith.constant 0 : i32
    %c0_i32_1 = arith.constant 0 : i32
    return %c0_i32, %c0_i32_0 : i32, i32
  }
  func.func @transform_4(%arg0: i32) -> (i32, i32) {
    %c0_i32 = arith.constant 0 : i32
    %c0_i32_0 = arith.constant 0 : i32
    %c0_i32_1 = arith.constant 0 : i32
    return %c0_i32, %c0_i32_0 : i32, i32
  }
  func.func @transform_5(%arg0: i32) -> (i32, i32, i32) {
    %c0_i32 = arith.constant 0 : i32
    %c0_i32_0 = arith.constant 0 : i32
    %c0_i32_1 = arith.constant 0 : i32
    return %arg0, %c0_i32, %c0_i32_0 : i32, i32, i32
  }
  func.func @transform_6(%arg0: i32) -> (i32, i32, i32) {
    %c0_i32 = arith.constant 0 : i32
    %c0_i32_0 = arith.constant 0 : i32
    %c0_i32_1 = arith.constant 0 : i32
    return %arg0, %c0_i32, %c0_i32_0 : i32, i32, i32
  }
}

module attributes {stable_mosaic.version = 11 : i64} {
  func.func @_ln_ffn_kernel(%arg0: i32, %arg1: memref<32x32xbf16, #tpu.memory_space<vmem>>, %arg2: memref<1x32xf32, #tpu.memory_space<vmem>>, %arg3: memref<1x32xf32, #tpu.memory_space<vmem>>, %arg4: memref<32x64xbf16, #tpu.memory_space<vmem>>, %arg5: memref<1x64xf32, #tpu.memory_space<vmem>>, %arg6: memref<64x32xbf16, #tpu.memory_space<vmem>>, %arg7: memref<1x32xf32, #tpu.memory_space<vmem>>, %arg8: memref<32x32xbf16, #tpu.memory_space<vmem>>) attributes {dimension_semantics = [#tpu.dimension_semantics<parallel>], iteration_bounds = array<i64: 1>, scalar_prefetch = 0 : i64, scratch_operands = 0 : i64, tpu.core_type = #tpu.core_type<tc>, window_params = [{transform_indices = @transform_0, window_bounds = array<i64: 32, 32>}, {pipeline_mode = #tpu.pipeline_mode<synchronous>, transform_indices = @transform_1, window_bounds = array<i64: 1, 32>}, {pipeline_mode = #tpu.pipeline_mode<synchronous>, transform_indices = @transform_2, window_bounds = array<i64: 1, 32>}, {pipeline_mode = #tpu.pipeline_mode<synchronous>, transform_indices = @transform_3, window_bounds = array<i64: 32, 64>}, {pipeline_mode = #tpu.pipeline_mode<synchronous>, transform_indices = @transform_4, window_bounds = array<i64: 1, 64>}, {pipeline_mode = #tpu.pipeline_mode<synchronous>, transform_indices = @transform_5, window_bounds = array<i64: 64, 32>}, {pipeline_mode = #tpu.pipeline_mode<synchronous>, transform_indices = @transform_6, window_bounds = array<i64: 1, 32>}, {transform_indices = @transform_7, window_bounds = array<i64: 32, 32>}]} {
    %c0 = arith.constant 0 : index
    %c0_0 = arith.constant 0 : index
    %0 = vector.load %arg1[%c0, %c0_0] : memref<32x32xbf16, #tpu.memory_space<vmem>>, vector<32x32xbf16>
    %1 = arith.extf %0 : vector<32x32xbf16> to vector<32x32xf32>
    %c0_1 = arith.constant 0 : index
    %c0_2 = arith.constant 0 : index
    %2 = vector.load %arg2[%c0_1, %c0_2] : memref<1x32xf32, #tpu.memory_space<vmem>>, vector<1x32xf32>
    %c0_3 = arith.constant 0 : index
    %c0_4 = arith.constant 0 : index
    %3 = vector.load %arg3[%c0_3, %c0_4] : memref<1x32xf32, #tpu.memory_space<vmem>>, vector<1x32xf32>
    %cst = arith.constant dense<0.000000e+00> : vector<32xf32>
    %4 = vector.multi_reduction <add>, %1, %cst [1] : vector<32x32xf32> to vector<32xf32>
    %5 = vector.shape_cast %4 : vector<32xf32> to vector<32x1xf32>
    %cst_5 = arith.constant 3.200000e+01 : f32
    %6 = vector.broadcast %cst_5 : f32 to vector<32x1xf32>
    %7 = arith.divf %5, %6 : vector<32x1xf32>
    %8 = vector.broadcast %7 : vector<32x1xf32> to vector<32x32xf32>
    %9 = arith.subf %1, %8 : vector<32x32xf32>
    %10 = arith.mulf %9, %9 : vector<32x32xf32>
    %cst_6 = arith.constant dense<0.000000e+00> : vector<32xf32>
    %11 = vector.multi_reduction <add>, %10, %cst_6 [1] : vector<32x32xf32> to vector<32xf32>
    %12 = vector.shape_cast %11 : vector<32xf32> to vector<32x1xf32>
    %cst_7 = arith.constant 3.200000e+01 : f32
    %13 = vector.broadcast %cst_7 : f32 to vector<32x1xf32>
    %14 = arith.divf %12, %13 : vector<32x1xf32>
    %cst_8 = arith.constant 9.99999996E-13 : f32
    %15 = vector.broadcast %cst_8 : f32 to vector<32x1xf32>
    %16 = arith.addf %14, %15 : vector<32x1xf32>
    %17 = math.rsqrt %16 : vector<32x1xf32>
    %18 = vector.broadcast %17 : vector<32x1xf32> to vector<32x32xf32>
    %19 = arith.mulf %9, %18 : vector<32x32xf32>
    %20 = vector.broadcast %2 : vector<1x32xf32> to vector<32x32xf32>
    %21 = arith.mulf %19, %20 : vector<32x32xf32>
    %22 = vector.broadcast %3 : vector<1x32xf32> to vector<32x32xf32>
    %23 = arith.addf %21, %22 : vector<32x32xf32>
    %24 = arith.truncf %23 : vector<32x32xf32> to vector<32x32xbf16>
    %c0_9 = arith.constant 0 : index
    %c0_10 = arith.constant 0 : index
    %25 = vector.load %arg4[%c0_9, %c0_10] : memref<32x64xbf16, #tpu.memory_space<vmem>>, vector<32x64xbf16>
    %cst_11 = arith.constant dense<0.000000e+00> : vector<32x64xf32>
    %26 = tpu.matmul %24, %25, %cst_11 {dimension_numbers = #tpu.dot_dimension_numbers<[1], [0], [0], [1], [0, 0, 1, 1], [], []>} : vector<32x32xbf16>, vector<32x64xbf16>, vector<32x64xf32> -> vector<32x64xf32>
    %c0_12 = arith.constant 0 : index
    %c0_13 = arith.constant 0 : index
    %27 = vector.load %arg5[%c0_12, %c0_13] : memref<1x64xf32, #tpu.memory_space<vmem>>, vector<1x64xf32>
    %28 = vector.broadcast %27 : vector<1x64xf32> to vector<32x64xf32>
    %29 = arith.addf %26, %28 : vector<32x64xf32>
    %cst_14 = arith.constant 0.000000e+00 : f32
    %30 = vector.broadcast %cst_14 : f32 to vector<32x64xf32>
    %31 = arith.maximumf %29, %30 : vector<32x64xf32>
    %32 = arith.truncf %31 : vector<32x64xf32> to vector<32x64xbf16>
    %c0_15 = arith.constant 0 : index
    %c0_16 = arith.constant 0 : index
    %33 = vector.load %arg6[%c0_15, %c0_16] : memref<64x32xbf16, #tpu.memory_space<vmem>>, vector<64x32xbf16>
    %cst_17 = arith.constant dense<0.000000e+00> : vector<32x32xf32>
    %34 = tpu.matmul %32, %33, %cst_17 {dimension_numbers = #tpu.dot_dimension_numbers<[1], [0], [0], [1], [0, 0, 1, 1], [], []>} : vector<32x64xbf16>, vector<64x32xbf16>, vector<32x32xf32> -> vector<32x32xf32>
    %35 = arith.addf %1, %34 : vector<32x32xf32>
    %c0_18 = arith.constant 0 : index
    %c0_19 = arith.constant 0 : index
    %36 = vector.load %arg7[%c0_18, %c0_19] : memref<1x32xf32, #tpu.memory_space<vmem>>, vector<1x32xf32>
    %37 = vector.broadcast %36 : vector<1x32xf32> to vector<32x32xf32>
    %38 = arith.addf %35, %37 : vector<32x32xf32>
    %39 = arith.truncf %38 : vector<32x32xf32> to vector<32x32xbf16>
    %c0_20 = arith.constant 0 : index
    %c0_21 = arith.constant 0 : index
    %40 = vector.load %arg8[%c0_20, %c0_21] : memref<32x32xbf16, #tpu.memory_space<vmem>>, vector<32x32xbf16>
    tpu.vector_store %arg8[%c0_20, %c0_21], %39 {strides = array<i32>} : memref<32x32xbf16, #tpu.memory_space<vmem>>, vector<32x32xbf16>,
    return
  }
  func.func @transform_0(%arg0: i32) -> (i32, i32) {
    %c0_i32 = arith.constant 0 : i32
    %c0_i32_0 = arith.constant 0 : i32
    return %arg0, %c0_i32 : i32, i32
  }
  func.func @transform_1(%arg0: i32) -> (i32, i32) {
    %c0_i32 = arith.constant 0 : i32
    %c0_i32_0 = arith.constant 0 : i32
    %c0_i32_1 = arith.constant 0 : i32
    return %c0_i32, %c0_i32_0 : i32, i32
  }
  func.func @transform_2(%arg0: i32) -> (i32, i32) {
    %c0_i32 = arith.constant 0 : i32
    %c0_i32_0 = arith.constant 0 : i32
    %c0_i32_1 = arith.constant 0 : i32
    return %c0_i32, %c0_i32_0 : i32, i32
  }
  func.func @transform_3(%arg0: i32) -> (i32, i32) {
    %c0_i32 = arith.constant 0 : i32
    %c0_i32_0 = arith.constant 0 : i32
    %c0_i32_1 = arith.constant 0 : i32
    return %c0_i32, %c0_i32_0 : i32, i32
  }
  func.func @transform_4(%arg0: i32) -> (i32, i32) {
    %c0_i32 = arith.constant 0 : i32
    %c0_i32_0 = arith.constant 0 : i32
    %c0_i32_1 = arith.constant 0 : i32
    return %c0_i32, %c0_i32_0 : i32, i32
  }
  func.func @transform_5(%arg0: i32) -> (i32, i32) {
    %c0_i32 = arith.constant 0 : i32
    %c0_i32_0 = arith.constant 0 : i32
    %c0_i32_1 = arith.constant 0 : i32
    return %c0_i32, %c0_i32_0 : i32, i32
  }
  func.func @transform_6(%arg0: i32) -> (i32, i32) {
    %c0_i32 = arith.constant 0 : i32
    %c0_i32_0 = arith.constant 0 : i32
    %c0_i32_1 = arith.constant 0 : i32
    return %c0_i32, %c0_i32_0 : i32, i32
  }
  func.func @transform_7(%arg0: i32) -> (i32, i32) {
    %c0_i32 = arith.constant 0 : i32
    %c0_i32_0 = arith.constant 0 : i32
    return %arg0, %c0_i32 : i32, i32
  }
}

module attributes {stable_mosaic.version = 11 : i64} {
  func.func @_proj_lse_kernel(%arg0: i32, %arg1: i32, %arg2: memref<32x32xbf16, #tpu.memory_space<vmem>>, %arg3: memref<32x128xbf16, #tpu.memory_space<vmem>>, %arg4: memref<1x128xf32, #tpu.memory_space<vmem>>, %arg5: memref<32x128xbf16, #tpu.memory_space<vmem>>, %arg6: memref<32x1xf32, #tpu.memory_space<vmem>>, %arg7: memref<32x128xf32, #tpu.memory_space<vmem>>, %arg8: memref<32x128xf32, #tpu.memory_space<vmem>>) attributes {dimension_semantics = [#tpu.dimension_semantics<parallel>, #tpu.dimension_semantics<arbitrary>], iteration_bounds = array<i64: 1, 1>, scalar_prefetch = 0 : i64, scratch_operands = 2 : i64, tpu.core_type = #tpu.core_type<tc>, window_params = [{transform_indices = @transform_0, window_bounds = array<i64: 32, 32>}, {transform_indices = @transform_1, window_bounds = array<i64: 32, 128>}, {transform_indices = @transform_2, window_bounds = array<i64: 1, 128>}, {transform_indices = @transform_3, window_bounds = array<i64: 32, 128>}, {transform_indices = @transform_4, window_bounds = array<i64: 32, 1>}]} {
    %c0_i32 = arith.constant 0 : i32
    %0 = arith.cmpi eq, %arg1, %c0_i32 : i32
    %1 = arith.extui %0 : i1 to i32
    %c0_i32_0 = arith.constant 0 : i32
    %2 = arith.cmpi ne, %1, %c0_i32_0 : i32
    scf.if %2 {
      %cst_22 = arith.constant 0xFF800000 : f32
      %35 = vector.broadcast %cst_22 : f32 to vector<32x128xf32>
      %c0_23 = arith.constant 0 : index
      %c0_24 = arith.constant 0 : index
      %36 = vector.load %arg7[%c0_23, %c0_24] : memref<32x128xf32, #tpu.memory_space<vmem>>, vector<32x128xf32>
      tpu.vector_store %arg7[%c0_23, %c0_24], %35 {strides = array<i32>} : memref<32x128xf32, #tpu.memory_space<vmem>>, vector<32x128xf32>,
      %cst_25 = arith.constant 0.000000e+00 : f32
      %37 = vector.broadcast %cst_25 : f32 to vector<32x128xf32>
      %c0_26 = arith.constant 0 : index
      %c0_27 = arith.constant 0 : index
      %38 = vector.load %arg8[%c0_26, %c0_27] : memref<32x128xf32, #tpu.memory_space<vmem>>, vector<32x128xf32>
      tpu.vector_store %arg8[%c0_26, %c0_27], %37 {strides = array<i32>} : memref<32x128xf32, #tpu.memory_space<vmem>>, vector<32x128xf32>,
    } else {
    }
    %c0 = arith.constant 0 : index
    %c0_1 = arith.constant 0 : index
    %3 = vector.load %arg2[%c0, %c0_1] : memref<32x32xbf16, #tpu.memory_space<vmem>>, vector<32x32xbf16>
    %c0_2 = arith.constant 0 : index
    %c0_3 = arith.constant 0 : index
    %4 = vector.load %arg3[%c0_2, %c0_3] : memref<32x128xbf16, #tpu.memory_space<vmem>>, vector<32x128xbf16>
    %cst = arith.constant dense<0.000000e+00> : vector<32x128xf32>
    %5 = tpu.matmul %3, %4, %cst {dimension_numbers = #tpu.dot_dimension_numbers<[1], [0], [0], [1], [0, 0, 1, 1], [], []>} : vector<32x32xbf16>, vector<32x128xbf16>, vector<32x128xf32> -> vector<32x128xf32>
    %c0_4 = arith.constant 0 : index
    %c0_5 = arith.constant 0 : index
    %6 = vector.load %arg4[%c0_4, %c0_5] : memref<1x128xf32, #tpu.memory_space<vmem>>, vector<1x128xf32>
    %7 = vector.broadcast %6 : vector<1x128xf32> to vector<32x128xf32>
    %8 = arith.addf %5, %7 : vector<32x128xf32>
    %9 = arith.truncf %8 : vector<32x128xf32> to vector<32x128xbf16>
    %c0_6 = arith.constant 0 : index
    %c0_7 = arith.constant 0 : index
    %10 = vector.load %arg5[%c0_6, %c0_7] : memref<32x128xbf16, #tpu.memory_space<vmem>>, vector<32x128xbf16>
    tpu.vector_store %arg5[%c0_6, %c0_7], %9 {strides = array<i32>} : memref<32x128xbf16, #tpu.memory_space<vmem>>, vector<32x128xbf16>,
    %11 = arith.extf %9 : vector<32x128xbf16> to vector<32x128xf32>
    %c0_8 = arith.constant 0 : index
    %c0_9 = arith.constant 0 : index
    %12 = vector.load %arg7[%c0_8, %c0_9] : memref<32x128xf32, #tpu.memory_space<vmem>>, vector<32x128xf32>
    %cst_10 = arith.constant dense<0xFF800000> : vector<32xf32>
    %13 = vector.multi_reduction <maximumf>, %11, %cst_10 [1] : vector<32x128xf32> to vector<32xf32>
    %14 = vector.shape_cast %13 : vector<32xf32> to vector<32x1xf32>
    %15 = vector.broadcast %14 : vector<32x1xf32> to vector<32x128xf32>
    %16 = arith.maximumf %12, %15 : vector<32x128xf32>
    %c0_11 = arith.constant 0 : index
    %c0_12 = arith.constant 0 : index
    %17 = vector.load %arg8[%c0_11, %c0_12] : memref<32x128xf32, #tpu.memory_space<vmem>>, vector<32x128xf32>
    %c0_13 = arith.constant 0 : index
    %c0_14 = arith.constant 0 : index
    %18 = vector.load %arg7[%c0_13, %c0_14] : memref<32x128xf32, #tpu.memory_space<vmem>>, vector<32x128xf32>
    %19 = arith.subf %18, %16 : vector<32x128xf32>
    %20 = math.exp %19 : vector<32x128xf32>
    %21 = arith.mulf %17, %20 : vector<32x128xf32>
    %22 = vector.extract_strided_slice %16 {offsets = [0, 0], sizes = [32, 1], strides = [1, 1]} : vector<32x128xf32> to vector<32x1xf32>
    %23 = vector.broadcast %22 : vector<32x1xf32> to vector<32x128xf32>
    %24 = arith.subf %11, %23 : vector<32x128xf32>
    %25 = math.exp %24 : vector<32x128xf32>
    %cst_15 = arith.constant dense<0.000000e+00> : vector<32xf32>
    %26 = vector.multi_reduction <add>, %25, %cst_15 [1] : vector<32x128xf32> to vector<32xf32>
    %27 = vector.shape_cast %26 : vector<32xf32> to vector<32x1xf32>
    %28 = vector.broadcast %27 : vector<32x1xf32> to vector<32x128xf32>
    %29 = arith.addf %21, %28 : vector<32x128xf32>
    %c0_16 = arith.constant 0 : index
    %c0_17 = arith.constant 0 : index
    %30 = vector.load %arg8[%c0_16, %c0_17] : memref<32x128xf32, #tpu.memory_space<vmem>>, vector<32x128xf32>
    tpu.vector_store %arg8[%c0_16, %c0_17], %29 {strides = array<i32>} : memref<32x128xf32, #tpu.memory_space<vmem>>, vector<32x128xf32>,
    %c0_18 = arith.constant 0 : index
    %c0_19 = arith.constant 0 : index
    %31 = vector.load %arg7[%c0_18, %c0_19] : memref<32x128xf32, #tpu.memory_space<vmem>>, vector<32x128xf32>
    tpu.vector_store %arg7[%c0_18, %c0_19], %16 {strides = array<i32>} : memref<32x128xf32, #tpu.memory_space<vmem>>, vector<32x128xf32>,
    %c0_i32_20 = arith.constant 0 : i32
    %32 = arith.cmpi eq, %arg1, %c0_i32_20 : i32
    %33 = arith.extui %32 : i1 to i32
    %c0_i32_21 = arith.constant 0 : i32
    %34 = arith.cmpi ne, %33, %c0_i32_21 : i32
    scf.if %34 {
      %c0_22 = arith.constant 0 : index
      %c0_23 = arith.constant 0 : index
      %35 = vector.load %arg7[%c0_22, %c0_23] : memref<32x128xf32, #tpu.memory_space<vmem>>, vector<32x1xf32>
      %c0_24 = arith.constant 0 : index
      %c0_25 = arith.constant 0 : index
      %36 = vector.load %arg8[%c0_24, %c0_25] : memref<32x128xf32, #tpu.memory_space<vmem>>, vector<32x1xf32>
      %37 = math.log %36 : vector<32x1xf32>
      %38 = arith.addf %35, %37 : vector<32x1xf32>
      %c0_26 = arith.constant 0 : index
      %c0_27 = arith.constant 0 : index
      %39 = vector.load %arg6[%c0_26, %c0_27] : memref<32x1xf32, #tpu.memory_space<vmem>>, vector<32x1xf32>
      tpu.vector_store %arg6[%c0_26, %c0_27], %38 {strides = array<i32>} : memref<32x1xf32, #tpu.memory_space<vmem>>, vector<32x1xf32>,
    } else {
    }
    return
  }
  func.func @transform_0(%arg0: i32, %arg1: i32) -> (i32, i32) {
    %c0_i32 = arith.constant 0 : i32
    %c0_i32_0 = arith.constant 0 : i32
    return %arg0, %c0_i32 : i32, i32
  }
  func.func @transform_1(%arg0: i32, %arg1: i32) -> (i32, i32) {
    %c0_i32 = arith.constant 0 : i32
    %c0_i32_0 = arith.constant 0 : i32
    return %c0_i32, %arg1 : i32, i32
  }
  func.func @transform_2(%arg0: i32, %arg1: i32) -> (i32, i32) {
    %c0_i32 = arith.constant 0 : i32
    %c0_i32_0 = arith.constant 0 : i32
    return %c0_i32, %arg1 : i32, i32
  }
  func.func @transform_3(%arg0: i32, %arg1: i32) -> (i32, i32) {
    %c0_i32 = arith.constant 0 : i32
    return %arg0, %arg1 : i32, i32
  }
  func.func @transform_4(%arg0: i32, %arg1: i32) -> (i32, i32) {
    %c0_i32 = arith.constant 0 : i32
    %c0_i32_0 = arith.constant 0 : i32
    return %arg0, %c0_i32 : i32, i32
  }
}

module attributes {stable_mosaic.version = 11 : i64} {
  func.func @kernel(%arg0: i32, %arg1: memref<32x32xbf16, #tpu.memory_space<vmem>>, %arg2: memref<1x32xf32, #tpu.memory_space<vmem>>, %arg3: memref<1x32xf32, #tpu.memory_space<vmem>>, %arg4: memref<32x32xbf16, #tpu.memory_space<vmem>>, %arg5: memref<1x32xf32, #tpu.memory_space<vmem>>, %arg6: memref<32x32xbf16, #tpu.memory_space<vmem>>) attributes {dimension_semantics = [#tpu.dimension_semantics<parallel>], iteration_bounds = array<i64: 1>, scalar_prefetch = 0 : i64, scratch_operands = 0 : i64, tpu.core_type = #tpu.core_type<tc>, window_params = [{transform_indices = @transform_0, window_bounds = array<i64: 32, 32>}, {pipeline_mode = #tpu.pipeline_mode<synchronous>, transform_indices = @transform_1, window_bounds = array<i64: 1, 32>}, {pipeline_mode = #tpu.pipeline_mode<synchronous>, transform_indices = @transform_2, window_bounds = array<i64: 1, 32>}, {pipeline_mode = #tpu.pipeline_mode<synchronous>, transform_indices = @transform_3, window_bounds = array<i64: 32, 32>}, {pipeline_mode = #tpu.pipeline_mode<synchronous>, transform_indices = @transform_4, window_bounds = array<i64: 1, 32>}, {transform_indices = @transform_5, window_bounds = array<i64: 32, 32>}]} {
    %c0 = arith.constant 0 : index
    %c0_0 = arith.constant 0 : index
    %0 = vector.load %arg1[%c0, %c0_0] : memref<32x32xbf16, #tpu.memory_space<vmem>>, vector<32x32xbf16>
    %c0_1 = arith.constant 0 : index
    %c0_2 = arith.constant 0 : index
    %1 = vector.load %arg2[%c0_1, %c0_2] : memref<1x32xf32, #tpu.memory_space<vmem>>, vector<1x32xf32>
    %c0_3 = arith.constant 0 : index
    %c0_4 = arith.constant 0 : index
    %2 = vector.load %arg3[%c0_3, %c0_4] : memref<1x32xf32, #tpu.memory_space<vmem>>, vector<1x32xf32>
    %3 = arith.extf %0 : vector<32x32xbf16> to vector<32x32xf32>
    %cst = arith.constant dense<0.000000e+00> : vector<32xf32>
    %4 = vector.multi_reduction <add>, %3, %cst [1] : vector<32x32xf32> to vector<32xf32>
    %5 = vector.shape_cast %4 : vector<32xf32> to vector<32x1xf32>
    %cst_5 = arith.constant 3.200000e+01 : f32
    %6 = vector.broadcast %cst_5 : f32 to vector<32x1xf32>
    %7 = arith.divf %5, %6 : vector<32x1xf32>
    %8 = vector.broadcast %7 : vector<32x1xf32> to vector<32x32xf32>
    %9 = arith.subf %3, %8 : vector<32x32xf32>
    %10 = arith.mulf %9, %9 : vector<32x32xf32>
    %cst_6 = arith.constant dense<0.000000e+00> : vector<32xf32>
    %11 = vector.multi_reduction <add>, %10, %cst_6 [1] : vector<32x32xf32> to vector<32xf32>
    %12 = vector.shape_cast %11 : vector<32xf32> to vector<32x1xf32>
    %cst_7 = arith.constant 3.200000e+01 : f32
    %13 = vector.broadcast %cst_7 : f32 to vector<32x1xf32>
    %14 = arith.divf %12, %13 : vector<32x1xf32>
    %cst_8 = arith.constant 9.99999996E-13 : f32
    %15 = vector.broadcast %cst_8 : f32 to vector<32x1xf32>
    %16 = arith.addf %14, %15 : vector<32x1xf32>
    %17 = math.rsqrt %16 : vector<32x1xf32>
    %18 = vector.broadcast %17 : vector<32x1xf32> to vector<32x32xf32>
    %19 = arith.mulf %9, %18 : vector<32x32xf32>
    %20 = vector.broadcast %1 : vector<1x32xf32> to vector<32x32xf32>
    %21 = arith.mulf %19, %20 : vector<32x32xf32>
    %22 = vector.broadcast %2 : vector<1x32xf32> to vector<32x32xf32>
    %23 = arith.addf %21, %22 : vector<32x32xf32>
    %24 = arith.truncf %23 : vector<32x32xf32> to vector<32x32xbf16>
    %c0_9 = arith.constant 0 : index
    %c0_10 = arith.constant 0 : index
    %25 = vector.load %arg4[%c0_9, %c0_10] : memref<32x32xbf16, #tpu.memory_space<vmem>>, vector<32x32xbf16>
    %cst_11 = arith.constant dense<0.000000e+00> : vector<32x32xf32>
    %26 = tpu.matmul %24, %25, %cst_11 {dimension_numbers = #tpu.dot_dimension_numbers<[1], [0], [0], [1], [0, 0, 1, 1], [], []>} : vector<32x32xbf16>, vector<32x32xbf16>, vector<32x32xf32> -> vector<32x32xf32>
    %c0_12 = arith.constant 0 : index
    %c0_13 = arith.constant 0 : index
    %27 = vector.load %arg5[%c0_12, %c0_13] : memref<1x32xf32, #tpu.memory_space<vmem>>, vector<1x32xf32>
    %28 = vector.broadcast %27 : vector<1x32xf32> to vector<32x32xf32>
    %29 = arith.addf %26, %28 : vector<32x32xf32>
    %cst_14 = arith.constant 0.353553385 : f32
    %30 = vector.broadcast %cst_14 : f32 to vector<32x32xf32>
    %31 = arith.mulf %29, %30 : vector<32x32xf32>
    %32 = arith.truncf %31 : vector<32x32xf32> to vector<32x32xbf16>
    %c0_15 = arith.constant 0 : index
    %c0_16 = arith.constant 0 : index
    %33 = vector.load %arg6[%c0_15, %c0_16] : memref<32x32xbf16, #tpu.memory_space<vmem>>, vector<32x32xbf16>
    tpu.vector_store %arg6[%c0_15, %c0_16], %32 {strides = array<i32>} : memref<32x32xbf16, #tpu.memory_space<vmem>>, vector<32x32xbf16>,
    return
  }
  func.func @transform_0(%arg0: i32) -> (i32, i32) {
    %c0_i32 = arith.constant 0 : i32
    %c0_i32_0 = arith.constant 0 : i32
    return %arg0, %c0_i32 : i32, i32
  }
  func.func @transform_1(%arg0: i32) -> (i32, i32) {
    %c0_i32 = arith.constant 0 : i32
    %c0_i32_0 = arith.constant 0 : i32
    %c0_i32_1 = arith.constant 0 : i32
    return %c0_i32, %c0_i32_0 : i32, i32
  }
  func.func @transform_2(%arg0: i32) -> (i32, i32) {
    %c0_i32 = arith.constant 0 : i32
    %c0_i32_0 = arith.constant 0 : i32
    %c0_i32_1 = arith.constant 0 : i32
    return %c0_i32, %c0_i32_0 : i32, i32
  }
  func.func @transform_3(%arg0: i32) -> (i32, i32) {
    %c0_i32 = arith.constant 0 : i32
    %c0_i32_0 = arith.constant 0 : i32
    %c0_i32_1 = arith.constant 0 : i32
    return %c0_i32, %c0_i32_0 : i32, i32
  }
  func.func @transform_4(%arg0: i32) -> (i32, i32) {
    %c0_i32 = arith.constant 0 : i32
    %c0_i32_0 = arith.constant 0 : i32
    %c0_i32_1 = arith.constant 0 : i32
    return %c0_i32, %c0_i32_0 : i32, i32
  }
  func.func @transform_5(%arg0: i32) -> (i32, i32) {
    %c0_i32 = arith.constant 0 : i32
    %c0_i32_0 = arith.constant 0 : i32
    return %arg0, %c0_i32 : i32, i32
  }
}

module attributes {stable_mosaic.version = 11 : i64} {
  func.func @_sub_lse_kernel(%arg0: i32, %arg1: i32, %arg2: memref<32x128xbf16, #tpu.memory_space<vmem>>, %arg3: memref<32x1xf32, #tpu.memory_space<vmem>>, %arg4: memref<32x128xf32, #tpu.memory_space<vmem>>) attributes {dimension_semantics = [#tpu.dimension_semantics<parallel>, #tpu.dimension_semantics<parallel>], iteration_bounds = array<i64: 1, 1>, scalar_prefetch = 0 : i64, scratch_operands = 0 : i64, tpu.core_type = #tpu.core_type<tc>, window_params = [{transform_indices = @transform_0, window_bounds = array<i64: 32, 128>}, {transform_indices = @transform_1, window_bounds = array<i64: 32, 1>}, {transform_indices = @transform_2, window_bounds = array<i64: 32, 128>}]} {
    %c0 = arith.constant 0 : index
    %c0_0 = arith.constant 0 : index
    %0 = vector.load %arg2[%c0, %c0_0] : memref<32x128xbf16, #tpu.memory_space<vmem>>, vector<32x128xbf16>
    %1 = arith.extf %0 : vector<32x128xbf16> to vector<32x128xf32>
    %c0_1 = arith.constant 0 : index
    %c0_2 = arith.constant 0 : index
    %2 = vector.load %arg3[%c0_1, %c0_2] : memref<32x1xf32, #tpu.memory_space<vmem>>, vector<32x1xf32>
    %3 = vector.broadcast %2 : vector<32x1xf32> to vector<32x128xf32>
    %4 = arith.subf %1, %3 : vector<32x128xf32>
    %c0_3 = arith.constant 0 : index
    %c0_4 = arith.constant 0 : index
    %5 = vector.load %arg4[%c0_3, %c0_4] : memref<32x128xf32, #tpu.memory_space<vmem>>, vector<32x128xf32>
    tpu.vector_store %arg4[%c0_3, %c0_4], %4 {strides = array<i32>} : memref<32x128xf32, #tpu.memory_space<vmem>>, vector<32x128xf32>,
    return
  }
  func.func @transform_0(%arg0: i32, %arg1: i32) -> (i32, i32) {
    %c0_i32 = arith.constant 0 : i32
    return %arg0, %arg1 : i32, i32
  }
  func.func @transform_1(%arg0: i32, %arg1: i32) -> (i32, i32) {
    %c0_i32 = arith.constant 0 : i32
    %c0_i32_0 = arith.constant 0 : i32
    return %arg0, %c0_i32 : i32, i32
  }
  func.func @transform_2(%arg0: i32, %arg1: i32) -> (i32, i32) {
    %c0_i32 = arith.constant 0 : i32
    return %arg0, %arg1 : i32, i32
  }
}

module attributes {stable_mosaic.version = 11 : i64} {
  func.func @kernel(%arg0: i32, %arg1: memref<32x32xbf16, #tpu.memory_space<vmem>>, %arg2: memref<32x64xbf16, #tpu.memory_space<vmem>>, %arg3: memref<1x64xf32, #tpu.memory_space<vmem>>, %arg4: memref<32x32xbf16, #tpu.memory_space<vmem>>, %arg5: memref<32x32xbf16, #tpu.memory_space<vmem>>) attributes {dimension_semantics = [#tpu.dimension_semantics<parallel>], iteration_bounds = array<i64: 1>, scalar_prefetch = 0 : i64, scratch_operands = 0 : i64, tpu.core_type = #tpu.core_type<tc>, window_params = [{transform_indices = @transform_0, window_bounds = array<i64: 32, 32>}, {pipeline_mode = #tpu.pipeline_mode<synchronous>, transform_indices = @transform_1, window_bounds = array<i64: 32, 64>}, {pipeline_mode = #tpu.pipeline_mode<synchronous>, transform_indices = @transform_2, window_bounds = array<i64: 1, 64>}, {transform_indices = @transform_3, window_bounds = array<i64: 32, 32>}, {transform_indices = @transform_4, window_bounds = array<i64: 32, 32>}]} {
    %c0 = arith.constant 0 : index
    %c0_0 = arith.constant 0 : index
    %0 = vector.load %arg1[%c0, %c0_0] : memref<32x32xbf16, #tpu.memory_space<vmem>>, vector<32x32xbf16>
    %c0_1 = arith.constant 0 : index
    %c0_2 = arith.constant 0 : index
    %1 = vector.load %arg2[%c0_1, %c0_2] : memref<32x64xbf16, #tpu.memory_space<vmem>>, vector<32x64xbf16>
    %cst = arith.constant dense<0.000000e+00> : vector<32x64xf32>
    %2 = tpu.matmul %0, %1, %cst {dimension_numbers = #tpu.dot_dimension_numbers<[1], [0], [0], [1], [0, 0, 1, 1], [], []>} : vector<32x32xbf16>, vector<32x64xbf16>, vector<32x64xf32> -> vector<32x64xf32>
    %c0_3 = arith.constant 0 : index
    %c0_4 = arith.constant 0 : index
    %3 = vector.load %arg3[%c0_3, %c0_4] : memref<1x64xf32, #tpu.memory_space<vmem>>, vector<1x64xf32>
    %4 = vector.broadcast %3 : vector<1x64xf32> to vector<32x64xf32>
    %5 = arith.addf %2, %4 : vector<32x64xf32>
    %6 = vector.extract_strided_slice %5 {offsets = [0, 0], sizes = [32, 32], strides = [1, 1]} : vector<32x64xf32> to vector<32x32xf32>
    %7 = arith.truncf %6 : vector<32x32xf32> to vector<32x32xbf16>
    %c0_5 = arith.constant 0 : index
    %c0_6 = arith.constant 0 : index
    %8 = vector.load %arg4[%c0_5, %c0_6] : memref<32x32xbf16, #tpu.memory_space<vmem>>, vector<32x32xbf16>
    tpu.vector_store %arg4[%c0_5, %c0_6], %7 {strides = array<i32>} : memref<32x32xbf16, #tpu.memory_space<vmem>>, vector<32x32xbf16>,
    %9 = vector.extract_strided_slice %5 {offsets = [0, 32], sizes = [32, 32], strides = [1, 1]} : vector<32x64xf32> to vector<32x32xf32>
    %10 = arith.truncf %9 : vector<32x32xf32> to vector<32x32xbf16>
    %c0_7 = arith.constant 0 : index
    %c0_8 = arith.constant 0 : index
    %11 = vector.load %arg5[%c0_7, %c0_8] : memref<32x32xbf16, #tpu.memory_space<vmem>>, vector<32x32xbf16>
    tpu.vector_store %arg5[%c0_7, %c0_8], %10 {strides = array<i32>} : memref<32x32xbf16, #tpu.memory_space<vmem>>, vector<32x32xbf16>,
    return
  }
  func.func @transform_0(%arg0: i32) -> (i32, i32) {
    %c0_i32 = arith.constant 0 : i32
    %c0_i32_0 = arith.constant 0 : i32
    return %arg0, %c0_i32 : i32, i32
  }
  func.func @transform_1(%arg0: i32) -> (i32, i32) {
    %c0_i32 = arith.constant 0 : i32
    %c0_i32_0 = arith.constant 0 : i32
    %c0_i32_1 = arith.constant 0 : i32
    return %c0_i32, %c0_i32_0 : i32, i32
  }
  func.func @transform_2(%arg0: i32) -> (i32, i32) {
    %c0_i32 = arith.constant 0 : i32
    %c0_i32_0 = arith.constant 0 : i32
    %c0_i32_1 = arith.constant 0 : i32
    return %c0_i32, %c0_i32_0 : i32, i32
  }
  func.func @transform_3(%arg0: i32) -> (i32, i32) {
    %c0_i32 = arith.constant 0 : i32
    %c0_i32_0 = arith.constant 0 : i32
    return %arg0, %c0_i32 : i32, i32
  }
  func.func @transform_4(%arg0: i32) -> (i32, i32) {
    %c0_i32 = arith.constant 0 : i32
    %c0_i32_0 = arith.constant 0 : i32
    return %arg0, %c0_i32 : i32, i32
  }
}

</mosaic_0001>

<llo_original>
// kernel: _lambda_.18
$region0: #{_lambda_.18}
  #allocation0 [shape = 'u32[]', space=smem, size = 0x4, offset = 0x4, fixed_abs, tag = 'smem constant byte address 0x4 - core index']
  #allocation1 [shape = 'u32[144,128]{1,0:T(1,128)}', space=vmem, size = 0x12000, scoped, tag = 'internal scratch']
  %s0 = inlined_call_operand.hbm [shape: f32[32,32], index: 0, kind: input, shape index: {}]
  %s1 = inlined_call_operand.vmem [shape: bf16[32,32], index: 1, kind: input, shape index: {}]
  %s2 = inlined_call_operand.vmem [shape: f32[1,32], index: 2, kind: input, shape index: {}]
  %s3 = inlined_call_operand.vmem [shape: bf16[32,32], index: 3, kind: output, shape index: {}]
  %s4 = sld [smem:[#allocation0]]
  $region26: #{_lambda_.18} parent=0
    _
  %s6 = ssub.s32 1, %s4
  %s7 = scalar_select 0, %s6, %s4
  $region1: #{_lambda_.18} parent=0
    #allocation2 [shape = 'u8[16384]{0}', space=vmem, size = 0x4000, scoped, tag = 'input window, operand 0, single buffered']
    #allocation3 [shape = 's32[1]{0}', space=sflag, size = 0x4, scoped, tag = 'scoped memory for _lambda_.18']
    %8 = vsyncpa [#allocation3], 0
    // Predicated region
    $region2: #{_lambda_.18} parent=1 // pred_check
      _
    $region3: #{_lambda_.18} parent=1 // pred_check_branch
      %10 = sbr.rel (0) target = $region5
    $region4: #{_lambda_.18} parent=1 // pred_region
      %s12 = ssub.s32 512, 512
      %13 = vsyncadd [#allocation3], %s12
      %s14 = sshll.u32 [#allocation2], 4
      %s15 = int_to_ptr.vmem [resolvable:$true] %s14
      %20 = dma.hbm_to_vmem [thread:$0]  %s0, 512, %s15, [#allocation3], 128, 128, 8
    $region5: #{_lambda_.18} parent=1 // pred_fallthru
      _
    // Predicated region
    $region6: #{_lambda_.18} parent=1 // pred_check
      _
    $region7: #{_lambda_.18} parent=1 // pred_check_branch
      %22 = sbr.rel (0) target = $region9
    $region8: #{_lambda_.18} parent=1 // pred_region
      _
    $region9: #{_lambda_.18} parent=1 // pred_fallthru
      _
    // Predicated region
    $region10: #{_lambda_.18} parent=1 // pred_check
      _
    $region11: #{_lambda_.18} parent=1 // pred_check_branch
      %24 = sbr.rel (0) target = $region13
    $region12: #{_lambda_.18} parent=1 // pred_region
      _
    $region13: #{_lambda_.18} parent=1 // pred_fallthru
      _
    // Predicated region
    $region14: #{_lambda_.18} parent=1 // pred_check
      _
    $region15: #{_lambda_.18} parent=1 // pred_check_branch
      %26 = sbr.rel (0) target = $region17
    $region16: #{_lambda_.18} parent=1 // pred_region
      %27 = dma.done [#allocation3], 512
    $region17: #{_lambda_.18} parent=1 // pred_fallthru
      _
    %v29 = vld [vmem:[#allocation2] sm:$0xff]
    %v30 = vld [vmem:[#allocation2 + $0x8] sm:$0xff]
    %v31 = vld [vmem:[#allocation2 + $0x10] sm:$0xff]
    %v32 = vld [vmem:[#allocation2 + $0x18] sm:$0xff]
    %v33 = vpack.c.bf16 %v30, %v29
    %v34 = vpack.c.bf16 %v32, %v31
    %v35 = vld [vmem:[%s1] sm:$0xf]
    %v36 = vld [vmem:[%s1 + $0x4] sm:$0xf]
    %v37 = vld [vmem:[%s1 + $0x8] sm:$0xf]
    %v38 = vld [vmem:[%s1 + $0xc] sm:$0xf]
    %v39 = vld [vmem:[%s2] sm:$0x1]
    %v41 = vlaneseq
    %v42 = vshrl.u32 %v41, 7
    %v43 = vsub.s32 0, %v42
    %v44 = vrot.slane %v39, %v43
    %v50 = vunpack.c.l.b16 %v35
    %v51 = vunpack.c.l.b16 %v36
    %v52 = vunpack.c.l.b16 %v37
    %v53 = vunpack.c.l.b16 %v38
    %v54 = vpack.c.b16 %v51, %v50
    %v55 = vpack.c.b16 %v53, %v52
    %vm58 = vcmask 261120
    %v60 = vsel %vm58, %v33, 0
    %v63 = vsel %vm58, %v34, 0
    %65 = vmatprep.subr.bf16.mxu0 0
    %66 = vmatpush1.bf16.msra.mxu0 %v54
    %67 = vmatprep.subr.bf16.mxu0 0
    %68 = vmatpush1.bf16.msra.mxu0 %v55
    %69 = vmatprep.subr.bf16.mxu0 0
    %70 = vmatpush1.bf16.msra.mxu0 0
    %71 = vmatprep.subr.bf16.mxu0 0
    %72 = vmatpush1.bf16.msra.mxu0 0
    %73 = vmatprep.subr.bf16.mxu0 0
    %74 = vmatpush1.bf16.msra.mxu0 0
    %75 = vmatprep.subr.bf16.mxu0 0
    %76 = vmatpush1.bf16.msra.mxu0 0
    %77 = vmatprep.subr.bf16.mxu0 0
    %78 = vmatpush1.bf16.msra.mxu0 0
    %79 = vmatprep.subr.bf16.mxu0 0
    %80 = vmatpush1.bf16.msra.mxu0 0
    %81 = vmatprep.subr.bf16.mxu0 0
    %82 = vmatpush1.bf16.msra.mxu0 0
    %83 = vmatprep.subr.bf16.mxu0 0
    %84 = vmatpush1.bf16.msra.mxu0 0
    %85 = vmatprep.subr.bf16.mxu0 0
    %86 = vmatpush1.bf16.msra.mxu0 0
    %87 = vmatprep.subr.bf16.mxu0 0
    %88 = vmatpush1.bf16.msra.mxu0 0
    %89 = vmatprep.subr.bf16.mxu0 0
    %90 = vmatpush1.bf16.msra.mxu0 0
    %91 = vmatprep.subr.bf16.mxu0 0
    %92 = vmatpush1.bf16.msra.mxu0 0
    %93 = vmatprep.subr.bf16.mxu0 0
    %94 = vmatpush1.bf16.msra.mxu0 0
    %95 = vmatprep.subr.bf16.mxu0 0
    %96 = vmatpush1.bf16.msra.mxu0 0
    %97 = vmatprep.mubr.bf16.mxu0 0
    %98 = vmatmul.mubr.bf16.gmra.mrb[0].mxu0 %v60
    %v99 = vpop.f32.mrb[0].mxu0
    %v100 = vadd.f32 %v44, %v99
    %v101 = vpop.f32.mrb[0].mxu0
    %v102 = vpop.f32.mrb[0].mxu0
    %v103 = vadd.f32 %v44, %v102
    %v104 = vpop.f32.mrb[0].mxu0
    %105 = vmatprep.mubr.bf16.mxu0 0
    %106 = vmatmul.mubr.bf16.gmra.mrb[0].mxu0 %v63
    %v107 = vpop.f32.mrb[0].mxu0
    %v108 = vadd.f32 %v44, %v107
    %v109 = vpop.f32.mrb[0].mxu0
    %v110 = vpop.f32.mrb[0].mxu0
    %v111 = vadd.f32 %v44, %v110
    %v112 = vpop.f32.mrb[0].mxu0
    %113 = vdwg.mxu0
    %v114 = vpack.c.bf16 %v103, %v100
    %v115 = vpack.c.bf16 %v111, %v108
    %v118 = vunpack.c.l.b16 %v114
    %v119 = vunpack.c.h.b16 %v114
    %v120 = vunpack.c.l.b16 %v115
    %v121 = vunpack.c.h.b16 %v115
    %v122 = vpack.c.b16 %v118, %v118
    %v123 = vpack.c.b16 %v119, %v119
    %v124 = vpack.c.b16 %v120, %v120
    %v125 = vpack.c.b16 %v121, %v121
    %vm130 = vcmask 257024
    %131 = vst.msk [vmem:[%s3] sm:$0xf] %vm130, %v122
    %132 = vst.msk [vmem:[%s3 + $0x4] sm:$0xf] %vm130, %v123
    %133 = vst.msk [vmem:[%s3 + $0x8] sm:$0xf] %vm130, %v124
    %134 = vst.msk [vmem:[%s3 + $0xc] sm:$0xf] %vm130, %v125
    // Predicated region
    $region18: #{_lambda_.18} parent=1 // pred_check
      _
    $region19: #{_lambda_.18} parent=1 // pred_check_branch
      %136 = sbr.rel (0) target = $region21
    $region20: #{_lambda_.18} parent=1 // pred_region
      _
    $region21: #{_lambda_.18} parent=1 // pred_fallthru
      _
    // Predicated region
    $region22: #{_lambda_.18} parent=1 // pred_check
      _
    $region23: #{_lambda_.18} parent=1 // pred_check_branch
      %138 = sbr.rel (0) target = $region25
    $region24: #{_lambda_.18} parent=1 // pred_region
      _
    $region25: #{_lambda_.18} parent=1 // pred_fallthru
      _
    %139 = vsyncpa [#allocation3], 1

// kernel: _lambda_.19
$region0: #{_lambda_.19}
  #allocation0 [shape = 'u32[]', space=smem, size = 0x4, offset = 0x4, fixed_abs, tag = 'smem constant byte address 0x4 - core index']
  #allocation1 [shape = 'u32[144,128]{1,0:T(1,128)}', space=vmem, size = 0x12000, scoped, tag = 'internal scratch']
  %s0 = inlined_call_operand.vmem [shape: bf16[32,32], index: 0, kind: input, shape index: {}]
  %s1 = inlined_call_operand.vmem [shape: f32[1,32], index: 1, kind: input, shape index: {}]
  %s2 = inlined_call_operand.vmem [shape: f32[1,32], index: 2, kind: input, shape index: {}]
  %s3 = inlined_call_operand.vmem [shape: bf16[32,96], index: 3, kind: input, shape index: {}]
  %s4 = inlined_call_operand.vmem [shape: f32[1,96], index: 4, kind: input, shape index: {}]
  %s5 = inlined_call_operand.vmem [shape: bf16[32,32], index: 5, kind: output, shape index: {0}]
  %s6 = inlined_call_operand.vmem [shape: bf16[32,32], index: 6, kind: output, shape index: {1}]
  %s7 = inlined_call_operand.vmem [shape: bf16[32,32], index: 7, kind: output, shape index: {2}]
  %8 = xla_tuple %s5, %s6, %s7
  %s9 = sld [smem:[#allocation0]]
  $region46: #{_lambda_.19} parent=0
    _
  %s11 = ssub.s32 1, %s9
  %s12 = scalar_select 0, %s11, %s9
  // Predicated region
  $region2: #{_lambda_.19} parent=0 // pred_check
    _
  $region3: #{_lambda_.19} parent=0 // pred_check_branch
    %14 = sbr.rel (0) target = $region5
  $region4: #{_lambda_.19} parent=0 // pred_region
    _
  $region5: #{_lambda_.19} parent=0 // pred_fallthru
    _
  // Predicated region
  $region6: #{_lambda_.19} parent=0 // pred_check
    _
  $region7: #{_lambda_.19} parent=0 // pred_check_branch
    %16 = sbr.rel (0) target = $region9
  $region8: #{_lambda_.19} parent=0 // pred_region
    _
  $region9: #{_lambda_.19} parent=0 // pred_fallthru
    _
  // Predicated region
  $region10: #{_lambda_.19} parent=0 // pred_check
    _
  $region11: #{_lambda_.19} parent=0 // pred_check_branch
    %18 = sbr.rel (0) target = $region13
  $region12: #{_lambda_.19} parent=0 // pred_region
    _
  $region13: #{_lambda_.19} parent=0 // pred_fallthru
    _
  // Predicated region
  $region14: #{_lambda_.19} parent=0 // pred_check
    _
  $region15: #{_lambda_.19} parent=0 // pred_check_branch
    %20 = sbr.rel (0) target = $region17
  $region16: #{_lambda_.19} parent=0 // pred_region
    _
  $region17: #{_lambda_.19} parent=0 // pred_fallthru
    _
  // Predicated region
  $region18: #{_lambda_.19} parent=0 // pred_check
    _
  $region19: #{_lambda_.19} parent=0 // pred_check_branch
    %22 = sbr.rel (0) target = $region21
  $region20: #{_lambda_.19} parent=0 // pred_region
    _
  $region21: #{_lambda_.19} parent=0 // pred_fallthru
    _
  %v24 = vld [vmem:[%s0] sm:$0xf]
  %v25 = vld [vmem:[%s0 + $0x4] sm:$0xf]
  %v26 = vld [vmem:[%s0 + $0x8] sm:$0xf]
  %v27 = vld [vmem:[%s0 + $0xc] sm:$0xf]
  %v28 = vld [vmem:[%s1] sm:$0x1]
  %v29 = vld [vmem:[%s2] sm:$0x1]
  %v30 = vunpack.c.l.bf16 %v24
  %v31 = vunpack.c.l.bf16 %v25
  %v32 = vunpack.c.l.bf16 %v26
  %v33 = vunpack.c.l.bf16 %v27
  %vm34 = vcmask 261120
  %v35 = vsel %vm34, %v30, 0.0
  %36 = vadd.xlane.f32.xlu0 %v35
  %v37 = vpop.xlane.xlu0 %36
  %v38 = vsel %vm34, %v31, 0.0
  %39 = vadd.xlane.f32.xlu0 %v38
  %v40 = vpop.xlane.xlu0 %39
  %v41 = vsel %vm34, %v32, 0.0
  %42 = vadd.xlane.f32.xlu0 %v41
  %v43 = vpop.xlane.xlu0 %42
  %v44 = vsel %vm34, %v33, 0.0
  %45 = vadd.xlane.f32.xlu0 %v44
  %v46 = vpop.xlane.xlu0 %45
  %v47 = vrcp.pop 32.0
  %v48 = vmul.f32 %v37, %v47
  %v49 = vmul.f32 %v40, %v47
  %v50 = vmul.f32 %v43, %v47
  %v51 = vmul.f32 %v46, %v47
  %v52 = vsub.f32 %v30, %v48
  %v53 = vsub.f32 %v31, %v49
  %v54 = vsub.f32 %v32, %v50
  %v55 = vsub.f32 %v33, %v51
  %v56 = vmul.f32 %v52, %v52
  %v57 = vmul.f32 %v53, %v53
  %v58 = vmul.f32 %v54, %v54
  %v59 = vmul.f32 %v55, %v55
  %v60 = vsel %vm34, %v56, 0.0
  %61 = vadd.xlane.f32.xlu0 %v60
  %v62 = vpop.xlane.xlu0 %61
  %v63 = vsel %vm34, %v57, 0.0
  %64 = vadd.xlane.f32.xlu0 %v63
  %v65 = vpop.xlane.xlu0 %64
  %v66 = vsel %vm34, %v58, 0.0
  %67 = vadd.xlane.f32.xlu0 %v66
  %v68 = vpop.xlane.xlu0 %67
  %v69 = vsel %vm34, %v59, 0.0
  %70 = vadd.xlane.f32.xlu0 %v69
  %v71 = vpop.xlane.xlu0 %70
  %v72 = vmul.f32 %v62, %v47
  %v73 = vmul.f32 %v65, %v47
  %v74 = vmul.f32 %v68, %v47
  %v75 = vmul.f32 %v71, %v47
  %v76 = vadd.f32 %v72, 1e-12
  %v77 = vadd.f32 %v73, 1e-12
  %v78 = vadd.f32 %v74, 1e-12
  %v79 = vadd.f32 %v75, 1e-12
  %v80 = vrsqrt.pop %v76
  %v81 = vrsqrt.pop %v77
  %v82 = vrsqrt.pop %v78
  %v83 = vrsqrt.pop %v79
  %v84 = vmul.f32 %v52, %v80
  %v85 = vmul.f32 %v53, %v81
  %v86 = vmul.f32 %v54, %v82
  %v87 = vmul.f32 %v55, %v83
  %v89 = vlaneseq
  %v90 = vshrl.u32 %v89, 7
  %v91 = vsub.s32 0, %v90
  %v92 = vrot.slane %v28, %v91
  %v94 = vmul.f32 %v84, %v92
  %v95 = vmul.f32 %v85, %v92
  %v96 = vmul.f32 %v86, %v92
  %v97 = vmul.f32 %v87, %v92
  %v99 = vlaneseq
  %v100 = vshrl.u32 %v99, 7
  %v101 = vsub.s32 0, %v100
  %v102 = vrot.slane %v29, %v101
  %v104 = vadd.f32 %v94, %v102
  %v105 = vadd.f32 %v95, %v102
  %v106 = vadd.f32 %v96, %v102
  %v107 = vadd.f32 %v97, %v102
  %v108 = vpack.c.bf16 %v105, %v104
  %v109 = vpack.c.bf16 %v107, %v106
  %v110 = vld [vmem:[%s3] sm:$0xf]
  %v111 = vld [vmem:[%s3 + $0x4] sm:$0xf]
  %v112 = vld [vmem:[%s3 + $0x8] sm:$0xf]
  %v113 = vld [vmem:[%s3 + $0xc] sm:$0xf]
  %v114 = vld [vmem:[%s4] sm:$0x1]
  %v116 = vlaneseq
  %v117 = vshrl.u32 %v116, 7
  %v118 = vsub.s32 0, %v117
  %v119 = vrot.slane %v114, %v118
  %v125 = vunpack.c.l.b16 %v110
  %v126 = vunpack.c.l.b16 %v111
  %v127 = vunpack.c.l.b16 %v112
  %v128 = vunpack.c.l.b16 %v113
  %v129 = vpack.c.b16 %v126, %v125
  %v130 = vpack.c.b16 %v128, %v127
  %v134 = vsel %vm34, %v108, 0
  %v137 = vsel %vm34, %v109, 0
  %139 = vmatprep.subr.bf16.mxu0 0
  %140 = vmatpush1.bf16.msra.mxu0 %v129
  %141 = vmatprep.subr.bf16.mxu0 0
  %142 = vmatpush1.bf16.msra.mxu0 %v130
  %143 = vmatprep.subr.bf16.mxu0 0
  %144 = vmatpush1.bf16.msra.mxu0 0
  %145 = vmatprep.subr.bf16.mxu0 0
  %146 = vmatpush1.bf16.msra.mxu0 0
  %147 = vmatprep.subr.bf16.mxu0 0
  %148 = vmatpush1.bf16.msra.mxu0 0
  %149 = vmatprep.subr.bf16.mxu0 0
  %150 = vmatpush1.bf16.msra.mxu0 0
  %151 = vmatprep.subr.bf16.mxu0 0
  %152 = vmatpush1.bf16.msra.mxu0 0
  %153 = vmatprep.subr.bf16.mxu0 0
  %154 = vmatpush1.bf16.msra.mxu0 0
  %155 = vmatprep.subr.bf16.mxu0 0
  %156 = vmatpush1.bf16.msra.mxu0 0
  %157 = vmatprep.subr.bf16.mxu0 0
  %158 = vmatpush1.bf16.msra.mxu0 0
  %159 = vmatprep.subr.bf16.mxu0 0
  %160 = vmatpush1.bf16.msra.mxu0 0
  %161 = vmatprep.subr.bf16.mxu0 0
  %162 = vmatpush1.bf16.msra.mxu0 0
  %163 = vmatprep.subr.bf16.mxu0 0
  %164 = vmatpush1.bf16.msra.mxu0 0
  %165 = vmatprep.subr.bf16.mxu0 0
  %166 = vmatpush1.bf16.msra.mxu0 0
  %167 = vmatprep.subr.bf16.mxu0 0
  %168 = vmatpush1.bf16.msra.mxu0 0
  %169 = vmatprep.subr.bf16.mxu0 0
  %170 = vmatpush1.bf16.msra.mxu0 0
  %171 = vmatprep.mubr.bf16.mxu0 0
  %172 = vmatmul.mubr.bf16.gmra.mrb[0].mxu0 %v134
  %v173 = vpop.f32.mrb[0].mxu0
  %v174 = vadd.f32 %v119, %v173
  %v175 = vpop.f32.mrb[0].mxu0
  %v176 = vpop.f32.mrb[0].mxu0
  %v177 = vadd.f32 %v119, %v176
  %v178 = vpop.f32.mrb[0].mxu0
  %179 = vmatprep.mubr.bf16.mxu0 0
  %180 = vmatmul.mubr.bf16.gmra.mrb[0].mxu0 %v137
  %v181 = vpop.f32.mrb[0].mxu0
  %v182 = vadd.f32 %v119, %v181
  %v183 = vpop.f32.mrb[0].mxu0
  %v184 = vpop.f32.mrb[0].mxu0
  %v185 = vadd.f32 %v119, %v184
  %v186 = vpop.f32.mrb[0].mxu0
  %187 = vdwg.mxu0
  %v188 = vmul.f32 %v174, 0.35355338
  %v189 = vmul.f32 %v177, 0.35355338
  %v190 = vmul.f32 %v182, 0.35355338
  %v191 = vmul.f32 %v185, 0.35355338
  %v192 = vpack.c.bf16 %v189, %v188
  %v193 = vpack.c.bf16 %v191, %v190
  %v196 = vunpack.c.l.b16 %v192
  %v197 = vunpack.c.h.b16 %v192
  %v198 = vunpack.c.l.b16 %v193
  %v199 = vunpack.c.h.b16 %v193
  %v200 = vpack.c.b16 %v196, %v196
  %v201 = vpack.c.b16 %v197, %v197
  %v202 = vpack.c.b16 %v198, %v198
  %v203 = vpack.c.b16 %v199, %v199
  %vm208 = vcmask 257024
  %209 = vst.msk [vmem:[%s5] sm:$0xf] %vm208, %v200
  %210 = vst.msk [vmem:[%s5 + $0x4] sm:$0xf] %vm208, %v201
  %211 = vst.msk [vmem:[%s5 + $0x8] sm:$0xf] %vm208, %v202
  %212 = vst.msk [vmem:[%s5 + $0xc] sm:$0xf] %vm208, %v203
  %v213 = vpack.c.bf16 %v177, %v174
  %v214 = vpack.c.bf16 %v185, %v182
  %v217 = vunpack.c.l.b16 %v213
  %v218 = vunpack.c.h.b16 %v213
  %v219 = vunpack.c.l.b16 %v214
  %v220 = vunpack.c.h.b16 %v214
  %v221 = vpack.c.b16 %v217, %v217
  %v222 = vpack.c.b16 %v218, %v218
  %v223 = vpack.c.b16 %v219, %v219
  %v224 = vpack.c.b16 %v220, %v220
  %225 = vrot.lane.b32.xlu0 %v221, 96
  %v226 = vpop.permute.xlu0 %225
  %227 = vrot.lane.b32.xlu0 %v222, 96
  %v228 = vpop.permute.xlu0 %227
  %229 = vrot.lane.b32.xlu0 %v223, 96
  %v230 = vpop.permute.xlu0 %229
  %231 = vrot.lane.b32.xlu0 %v224, 96
  %v232 = vpop.permute.xlu0 %231
  %237 = vst.msk [vmem:[%s6] sm:$0xf] %vm208, %v226
  %238 = vst.msk [vmem:[%s6 + $0x4] sm:$0xf] %vm208, %v228
  %239 = vst.msk [vmem:[%s6 + $0x8] sm:$0xf] %vm208, %v230
  %240 = vst.msk [vmem:[%s6 + $0xc] sm:$0xf] %vm208, %v232
  %241 = vrot.lane.b32.xlu0 %v221, 64
  %v242 = vpop.permute.xlu0 %241
  %243 = vrot.lane.b32.xlu0 %v222, 64
  %v244 = vpop.permute.xlu0 %243
  %245 = vrot.lane.b32.xlu0 %v223, 64
  %v246 = vpop.permute.xlu0 %245
  %247 = vrot.lane.b32.xlu0 %v224, 64
  %v248 = vpop.permute.xlu0 %247
  %253 = vst.msk [vmem:[%s7] sm:$0xf] %vm208, %v242
  %254 = vst.msk [vmem:[%s7 + $0x4] sm:$0xf] %vm208, %v244
  %255 = vst.msk [vmem:[%s7 + $0x8] sm:$0xf] %vm208, %v246
  %256 = vst.msk [vmem:[%s7 + $0xc] sm:$0xf] %vm208, %v248
  // Predicated region
  $region22: #{_lambda_.19} parent=0 // pred_check
    _
  $region23: #{_lambda_.19} parent=0 // pred_check_branch
    %258 = sbr.rel (0) target = $region25
  $region24: #{_lambda_.19} parent=0 // pred_region
    _
  $region25: #{_lambda_.19} parent=0 // pred_fallthru
    _
  // Predicated region
  $region26: #{_lambda_.19} parent=0 // pred_check
    _
  $region27: #{_lambda_.19} parent=0 // pred_check_branch
    %260 = sbr.rel (0) target = $region29
  $region28: #{_lambda_.19} parent=0 // pred_region
    _
  $region29: #{_lambda_.19} parent=0 // pred_fallthru
    _
  // Predicated region
  $region30: #{_lambda_.19} parent=0 // pred_check
    _
  $region31: #{_lambda_.19} parent=0 // pred_check_branch
    %262 = sbr.rel (0) target = $region33
  $region32: #{_lambda_.19} parent=0 // pred_region
    _
  $region33: #{_lambda_.19} parent=0 // pred_fallthru
    _
  // Predicated region
  $region34: #{_lambda_.19} parent=0 // pred_check
    _
  $region35: #{_lambda_.19} parent=0 // pred_check_branch
    %264 = sbr.rel (0) target = $region37
  $region36: #{_lambda_.19} parent=0 // pred_region
    _
  $region37: #{_lambda_.19} parent=0 // pred_fallthru
    _
  // Predicated region
  $region38: #{_lambda_.19} parent=0 // pred_check
    _
  $region39: #{_lambda_.19} parent=0 // pred_check_branch
    %266 = sbr.rel (0) target = $region41
  $region40: #{_lambda_.19} parent=0 // pred_region
    _
  $region41: #{_lambda_.19} parent=0 // pred_fallthru
    _
  // Predicated region
  $region42: #{_lambda_.19} parent=0 // pred_check
    _
  $region43: #{_lambda_.19} parent=0 // pred_check_branch
    %268 = sbr.rel (0) target = $region45
  $region44: #{_lambda_.19} parent=0 // pred_region
    _
  $region45: #{_lambda_.19} parent=0 // pred_fallthru
    _

// kernel: _lambda_.21
$region0: #{_lambda_.21}
  #allocation0 [shape = 'u32[]', space=smem, size = 0x4, offset = 0x4, fixed_abs, tag = 'smem constant byte address 0x4 - core index']
  #allocation1 [shape = 'u32[144,128]{1,0:T(1,128)}', space=vmem, size = 0x12000, scoped, tag = 'internal scratch']
  %s0 = inlined_call_operand.vmem [shape: bf16[32,32], index: 0, kind: input, shape index: {}]
  %s1 = inlined_call_operand.vmem [shape: bf16[32,32], index: 1, kind: input, shape index: {}]
  %s2 = inlined_call_operand.vmem [shape: bf16[32,32], index: 2, kind: input, shape index: {}]
  %s3 = inlined_call_operand.vmem [shape: f32[1,32], index: 3, kind: input, shape index: {}]
  %s4 = inlined_call_operand.vmem [shape: bf16[32,32], index: 4, kind: output, shape index: {}]
  %s5 = sld [smem:[#allocation0]]
  $region26: #{_lambda_.21} parent=0
    _
  %s7 = ssub.s32 1, %s5
  %s8 = scalar_select 0, %s7, %s5
  // Predicated region
  $region2: #{_lambda_.21} parent=0 // pred_check
    _
  $region3: #{_lambda_.21} parent=0 // pred_check_branch
    %10 = sbr.rel (0) target = $region5
  $region4: #{_lambda_.21} parent=0 // pred_region
    _
  $region5: #{_lambda_.21} parent=0 // pred_fallthru
    _
  // Predicated region
  $region6: #{_lambda_.21} parent=0 // pred_check
    _
  $region7: #{_lambda_.21} parent=0 // pred_check_branch
    %12 = sbr.rel (0) target = $region9
  $region8: #{_lambda_.21} parent=0 // pred_region
    _
  $region9: #{_lambda_.21} parent=0 // pred_fallthru
    _
  // Predicated region
  $region10: #{_lambda_.21} parent=0 // pred_check
    _
  $region11: #{_lambda_.21} parent=0 // pred_check_branch
    %14 = sbr.rel (0) target = $region13
  $region12: #{_lambda_.21} parent=0 // pred_region
    _
  $region13: #{_lambda_.21} parent=0 // pred_fallthru
    _
  // Predicated region
  $region14: #{_lambda_.21} parent=0 // pred_check
    _
  $region15: #{_lambda_.21} parent=0 // pred_check_branch
    %16 = sbr.rel (0) target = $region17
  $region16: #{_lambda_.21} parent=0 // pred_region
    _
  $region17: #{_lambda_.21} parent=0 // pred_fallthru
    _
  %v18 = vld [vmem:[%s1] sm:$0xf]
  %v19 = vld [vmem:[%s1 + $0x4] sm:$0xf]
  %v20 = vld [vmem:[%s1 + $0x8] sm:$0xf]
  %v21 = vld [vmem:[%s1 + $0xc] sm:$0xf]
  %v22 = vunpack.c.l.bf16 %v18
  %v23 = vunpack.c.l.bf16 %v19
  %v24 = vunpack.c.l.bf16 %v20
  %v25 = vunpack.c.l.bf16 %v21
  %v26 = vld [vmem:[%s0] sm:$0xf]
  %v27 = vld [vmem:[%s0 + $0x4] sm:$0xf]
  %v28 = vld [vmem:[%s0 + $0x8] sm:$0xf]
  %v29 = vld [vmem:[%s0 + $0xc] sm:$0xf]
  %v30 = vld [vmem:[%s2] sm:$0xf]
  %v31 = vld [vmem:[%s2 + $0x4] sm:$0xf]
  %v32 = vld [vmem:[%s2 + $0x8] sm:$0xf]
  %v33 = vld [vmem:[%s2 + $0xc] sm:$0xf]
  %v38 = vunpack.c.l.b16 %v26
  %v39 = vunpack.c.l.b16 %v27
  %v40 = vunpack.c.l.b16 %v28
  %v41 = vunpack.c.l.b16 %v29
  %v42 = vpack.c.b16 %v39, %v38
  %v43 = vpack.c.b16 %v41, %v40
  %v48 = vunpack.c.l.b16 %v30
  %v49 = vunpack.c.l.b16 %v31
  %v50 = vunpack.c.l.b16 %v32
  %v51 = vunpack.c.l.b16 %v33
  %v52 = vpack.c.b16 %v49, %v48
  %v53 = vpack.c.b16 %v51, %v50
  %vm56 = vcmask 261120
  %v58 = vsel %vm56, %v42, 0
  %v61 = vsel %vm56, %v43, 0
  %63 = vmatprep.subr.bf16.mxu0 0
  %64 = vmatpush1.bf16.msra.mxu0 %v52
  %65 = vmatprep.subr.bf16.mxu0 0
  %66 = vmatpush1.bf16.msra.mxu0 %v53
  %67 = vmatprep.subr.bf16.mxu0 0
  %68 = vmatpush1.bf16.msra.mxu0 0
  %69 = vmatprep.subr.bf16.mxu0 0
  %70 = vmatpush1.bf16.msra.mxu0 0
  %71 = vmatprep.subr.bf16.mxu0 0
  %72 = vmatpush1.bf16.msra.mxu0 0
  %73 = vmatprep.subr.bf16.mxu0 0
  %74 = vmatpush1.bf16.msra.mxu0 0
  %75 = vmatprep.subr.bf16.mxu0 0
  %76 = vmatpush1.bf16.msra.mxu0 0
  %77 = vmatprep.subr.bf16.mxu0 0
  %78 = vmatpush1.bf16.msra.mxu0 0
  %79 = vmatprep.subr.bf16.mxu0 0
  %80 = vmatpush1.bf16.msra.mxu0 0
  %81 = vmatprep.subr.bf16.mxu0 0
  %82 = vmatpush1.bf16.msra.mxu0 0
  %83 = vmatprep.subr.bf16.mxu0 0
  %84 = vmatpush1.bf16.msra.mxu0 0
  %85 = vmatprep.subr.bf16.mxu0 0
  %86 = vmatpush1.bf16.msra.mxu0 0
  %87 = vmatprep.subr.bf16.mxu0 0
  %88 = vmatpush1.bf16.msra.mxu0 0
  %89 = vmatprep.subr.bf16.mxu0 0
  %90 = vmatpush1.bf16.msra.mxu0 0
  %91 = vmatprep.subr.bf16.mxu0 0
  %92 = vmatpush1.bf16.msra.mxu0 0
  %93 = vmatprep.subr.bf16.mxu0 0
  %94 = vmatpush1.bf16.msra.mxu0 0
  %95 = vmatprep.mubr.bf16.mxu0 0
  %96 = vmatmul.mubr.bf16.gmra.mrb[0].mxu0 %v58
  %v97 = vpop.f32.mrb[0].mxu0
  %v98 = vadd.f32 0.0, %v97
  %v99 = vpop.f32.mrb[0].mxu0
  %v100 = vpop.f32.mrb[0].mxu0
  %v101 = vadd.f32 0.0, %v100
  %v102 = vpop.f32.mrb[0].mxu0
  %103 = vmatprep.mubr.bf16.mxu0 0
  %104 = vmatmul.mubr.bf16.gmra.mrb[0].mxu0 %v61
  %v105 = vpop.f32.mrb[0].mxu0
  %v106 = vadd.f32 0.0, %v105
  %v107 = vpop.f32.mrb[0].mxu0
  %v108 = vpop.f32.mrb[0].mxu0
  %v109 = vadd.f32 0.0, %v108
  %v110 = vpop.f32.mrb[0].mxu0
  %111 = vdwg.mxu0
  %v112 = vadd.f32 %v22, %v98
  %v113 = vadd.f32 %v23, %v101
  %v114 = vadd.f32 %v24, %v106
  %v115 = vadd.f32 %v25, %v109
  %v116 = vld [vmem:[%s3] sm:$0x1]
  %v118 = vlaneseq
  %v119 = vshrl.u32 %v118, 7
  %v120 = vsub.s32 0, %v119
  %v121 = vrot.slane %v116, %v120
  %v123 = vadd.f32 %v112, %v121
  %v124 = vadd.f32 %v113, %v121
  %v125 = vadd.f32 %v114, %v121
  %v126 = vadd.f32 %v115, %v121
  %v127 = vpack.c.bf16 %v124, %v123
  %v128 = vpack.c.bf16 %v126, %v125
  %v131 = vunpack.c.l.b16 %v127
  %v132 = vunpack.c.h.b16 %v127
  %v133 = vunpack.c.l.b16 %v128
  %v134 = vunpack.c.h.b16 %v128
  %v135 = vpack.c.b16 %v131, %v131
  %v136 = vpack.c.b16 %v132, %v132
  %v137 = vpack.c.b16 %v133, %v133
  %v138 = vpack.c.b16 %v134, %v134
  %vm143 = vcmask 257024
  %144 = vst.msk [vmem:[%s4] sm:$0xf] %vm143, %v135
  %145 = vst.msk [vmem:[%s4 + $0x4] sm:$0xf] %vm143, %v136
  %146 = vst.msk [vmem:[%s4 + $0x8] sm:$0xf] %vm143, %v137
  %147 = vst.msk [vmem:[%s4 + $0xc] sm:$0xf] %vm143, %v138
  // Predicated region
  $region18: #{_lambda_.21} parent=0 // pred_check
    _
  $region19: #{_lambda_.21} parent=0 // pred_check_branch
    %149 = sbr.rel (0) target = $region21
  $region20: #{_lambda_.21} parent=0 // pred_region
    _
  $region21: #{_lambda_.21} parent=0 // pred_fallthru
    _
  // Predicated region
  $region22: #{_lambda_.21} parent=0 // pred_check
    _
  $region23: #{_lambda_.21} parent=0 // pred_check_branch
    %151 = sbr.rel (0) target = $region25
  $region24: #{_lambda_.21} parent=0 // pred_region
    _
  $region25: #{_lambda_.21} parent=0 // pred_fallthru
    _

// kernel: _lambda_.23
$region0: #{_lambda_.23}
  #allocation0 [shape = 'u32[]', space=smem, size = 0x4, offset = 0x4, fixed_abs, tag = 'smem constant byte address 0x4 - core index']
  #allocation1 [shape = 'u32[144,128]{1,0:T(1,128)}', space=vmem, size = 0x12000, scoped, tag = 'internal scratch']
  %s0 = inlined_call_operand.vmem [shape: bf16[32,32], index: 0, kind: input, shape index: {}]
  %s1 = inlined_call_operand.vmem [shape: f32[1,32], index: 1, kind: input, shape index: {}]
  %s2 = inlined_call_operand.vmem [shape: f32[1,32], index: 2, kind: input, shape index: {}]
  %s3 = inlined_call_operand.vmem [shape: bf16[32,32], index: 3, kind: output, shape index: {}]
  %s4 = sld [smem:[#allocation0]]
  $region22: #{_lambda_.23} parent=0
    _
  %s6 = ssub.s32 1, %s4
  %s7 = scalar_select 0, %s6, %s4
  // Predicated region
  $region2: #{_lambda_.23} parent=0 // pred_check
    _
  $region3: #{_lambda_.23} parent=0 // pred_check_branch
    %9 = sbr.rel (0) target = $region5
  $region4: #{_lambda_.23} parent=0 // pred_region
    _
  $region5: #{_lambda_.23} parent=0 // pred_fallthru
    _
  // Predicated region
  $region6: #{_lambda_.23} parent=0 // pred_check
    _
  $region7: #{_lambda_.23} parent=0 // pred_check_branch
    %11 = sbr.rel (0) target = $region9
  $region8: #{_lambda_.23} parent=0 // pred_region
    _
  $region9: #{_lambda_.23} parent=0 // pred_fallthru
    _
  // Predicated region
  $region10: #{_lambda_.23} parent=0 // pred_check
    _
  $region11: #{_lambda_.23} parent=0 // pred_check_branch
    %13 = sbr.rel (0) target = $region13
  $region12: #{_lambda_.23} parent=0 // pred_region
    _
  $region13: #{_lambda_.23} parent=0 // pred_fallthru
    _
  %v14 = vld [vmem:[%s0] sm:$0xf]
  %v15 = vld [vmem:[%s0 + $0x4] sm:$0xf]
  %v16 = vld [vmem:[%s0 + $0x8] sm:$0xf]
  %v17 = vld [vmem:[%s0 + $0xc] sm:$0xf]
  %v18 = vld [vmem:[%s1] sm:$0x1]
  %v19 = vld [vmem:[%s2] sm:$0x1]
  %v20 = vunpack.c.l.bf16 %v14
  %v21 = vunpack.c.l.bf16 %v15
  %v22 = vunpack.c.l.bf16 %v16
  %v23 = vunpack.c.l.bf16 %v17
  %vm24 = vcmask 261120
  %v25 = vsel %vm24, %v20, 0.0
  %26 = vadd.xlane.f32.xlu0 %v25
  %v27 = vpop.xlane.xlu0 %26
  %v28 = vsel %vm24, %v21, 0.0
  %29 = vadd.xlane.f32.xlu0 %v28
  %v30 = vpop.xlane.xlu0 %29
  %v31 = vsel %vm24, %v22, 0.0
  %32 = vadd.xlane.f32.xlu0 %v31
  %v33 = vpop.xlane.xlu0 %32
  %v34 = vsel %vm24, %v23, 0.0
  %35 = vadd.xlane.f32.xlu0 %v34
  %v36 = vpop.xlane.xlu0 %35
  %v37 = vrcp.pop 32.0
  %v38 = vmul.f32 %v27, %v37
  %v39 = vmul.f32 %v30, %v37
  %v40 = vmul.f32 %v33, %v37
  %v41 = vmul.f32 %v36, %v37
  %v42 = vsub.f32 %v20, %v38
  %v43 = vsub.f32 %v21, %v39
  %v44 = vsub.f32 %v22, %v40
  %v45 = vsub.f32 %v23, %v41
  %v46 = vmul.f32 %v42, %v42
  %v47 = vmul.f32 %v43, %v43
  %v48 = vmul.f32 %v44, %v44
  %v49 = vmul.f32 %v45, %v45
  %v50 = vsel %vm24, %v46, 0.0
  %51 = vadd.xlane.f32.xlu0 %v50
  %v52 = vpop.xlane.xlu0 %51
  %v53 = vsel %vm24, %v47, 0.0
  %54 = vadd.xlane.f32.xlu0 %v53
  %v55 = vpop.xlane.xlu0 %54
  %v56 = vsel %vm24, %v48, 0.0
  %57 = vadd.xlane.f32.xlu0 %v56
  %v58 = vpop.xlane.xlu0 %57
  %v59 = vsel %vm24, %v49, 0.0
  %60 = vadd.xlane.f32.xlu0 %v59
  %v61 = vpop.xlane.xlu0 %60
  %v62 = vmul.f32 %v52, %v37
  %v63 = vmul.f32 %v55, %v37
  %v64 = vmul.f32 %v58, %v37
  %v65 = vmul.f32 %v61, %v37
  %v66 = vadd.f32 %v62, 1e-12
  %v67 = vadd.f32 %v63, 1e-12
  %v68 = vadd.f32 %v64, 1e-12
  %v69 = vadd.f32 %v65, 1e-12
  %v70 = vrsqrt.pop %v66
  %v71 = vrsqrt.pop %v67
  %v72 = vrsqrt.pop %v68
  %v73 = vrsqrt.pop %v69
  %v74 = vmul.f32 %v42, %v70
  %v75 = vmul.f32 %v43, %v71
  %v76 = vmul.f32 %v44, %v72
  %v77 = vmul.f32 %v45, %v73
  %v79 = vlaneseq
  %v80 = vshrl.u32 %v79, 7
  %v81 = vsub.s32 0, %v80
  %v82 = vrot.slane %v18, %v81
  %v84 = vmul.f32 %v74, %v82
  %v85 = vmul.f32 %v75, %v82
  %v86 = vmul.f32 %v76, %v82
  %v87 = vmul.f32 %v77, %v82
  %v89 = vlaneseq
  %v90 = vshrl.u32 %v89, 7
  %v91 = vsub.s32 0, %v90
  %v92 = vrot.slane %v19, %v91
  %v94 = vadd.f32 %v84, %v92
  %v95 = vadd.f32 %v85, %v92
  %v96 = vadd.f32 %v86, %v92
  %v97 = vadd.f32 %v87, %v92
  %v98 = vpack.c.bf16 %v95, %v94
  %v99 = vpack.c.bf16 %v97, %v96
  %v102 = vunpack.c.l.b16 %v98
  %v103 = vunpack.c.h.b16 %v98
  %v104 = vunpack.c.l.b16 %v99
  %v105 = vunpack.c.h.b16 %v99
  %v106 = vpack.c.b16 %v102, %v102
  %v107 = vpack.c.b16 %v103, %v103
  %v108 = vpack.c.b16 %v104, %v104
  %v109 = vpack.c.b16 %v105, %v105
  %vm114 = vcmask 257024
  %115 = vst.msk [vmem:[%s3] sm:$0xf] %vm114, %v106
  %116 = vst.msk [vmem:[%s3 + $0x4] sm:$0xf] %vm114, %v107
  %117 = vst.msk [vmem:[%s3 + $0x8] sm:$0xf] %vm114, %v108
  %118 = vst.msk [vmem:[%s3 + $0xc] sm:$0xf] %vm114, %v109
  // Predicated region
  $region14: #{_lambda_.23} parent=0 // pred_check
    _
  $region15: #{_lambda_.23} parent=0 // pred_check_branch
    %120 = sbr.rel (0) target = $region17
  $region16: #{_lambda_.23} parent=0 // pred_region
    _
  $region17: #{_lambda_.23} parent=0 // pred_fallthru
    _
  // Predicated region
  $region18: #{_lambda_.23} parent=0 // pred_check
    _
  $region19: #{_lambda_.23} parent=0 // pred_check_branch
    %122 = sbr.rel (0) target = $region21
  $region20: #{_lambda_.23} parent=0 // pred_region
    _
  $region21: #{_lambda_.23} parent=0 // pred_fallthru
    _

// kernel: _lambda_.24
$region0: #{_lambda_.24}
  #allocation0 [shape = 'u32[]', space=smem, size = 0x4, offset = 0x4, fixed_abs, tag = 'smem constant byte address 0x4 - core index']
  #allocation1 [shape = 'u32[144,128]{1,0:T(1,128)}', space=vmem, size = 0x12000, scoped, tag = 'internal scratch']
  #allocation2 [shape = 'f32[1,1]{1,0:T(1,128)S(1)}', space=vmem, size = 0x200, scoped, tag = 'scoped memory for _lambda_.24']
  %s0 = inlined_call_operand.vmem [shape: f32[2,24,32], index: 0, kind: input, shape index: {}]
  %s1 = inlined_call_operand.vmem [shape: bf16[3,32,32], index: 1, kind: input, shape index: {}]
  %s2 = inlined_call_operand.vmem [shape: f32[1,32], index: 2, kind: input, shape index: {}]
  %s3 = inlined_call_operand.vmem [shape: f32[1,32], index: 3, kind: input, shape index: {}]
  %s4 = inlined_call_operand.<no memory space> [shape: f32[1,1], index: 4, kind: input, shape index: {}]
  %s5 = inlined_call_operand.vmem [shape: f32[2,1,16], index: 5, kind: input, shape index: {}]
  %s6 = inlined_call_operand.vmem [shape: f32[2,1,16], index: 6, kind: output, shape index: {}]
  %s7 = sld [smem:[#allocation0]]
  $region57: #{_lambda_.24} parent=0
    _
  %s9 = ssub.s32 1, %s7
  %s10 = scalar_select 0, %s9, %s7
  %v11 = vstv %s4
  %12 = vst [vmem:[#allocation2] sm:$0x1] %v11
  loop: start=0, step=1, limit=4
  $region2: #{_lambda_.24} parent=0 // loop_pre_header
    _
  $region3: #{_lambda_.24} parent=0 // loop_header
    %s14 = sphi 0, %s18
    %p15 = scmp.ge.s32.totalorder %s14, 4
    %s24 = sphi 0, %s26
    %s27 = sphi 0, %s24
    %s28 = sphi 0, %s27
    %s44 = sphi 0, %s28
    %s48 = sphi 0, %s48
    %s50 = sphi 0, %s48
    %s51 = sphi 0, %s50
    %s65 = sphi 0, %s51
    %s69 = sphi 0, %s69
    %s71 = sphi 0, %s69
    %s72 = sphi 0, %s71
    %s86 = sphi 0, %s72
    %s90 = sphi 0, %s90
    %s92 = sphi 0, %s90
    %s93 = sphi 0, %s92
    %s107 = sphi 0, %s93
    %s111 = sphi 0, %s111
    %s113 = sphi 0, %s111
    %s114 = sphi 0, %s113
    %s128 = sphi 0, %s114
    %s134 = sphi 0, %s136
    %s137 = sphi 0, %s134
    %s138 = sphi 0, %s137
    %s154 = sphi 0, %s138
    %s160 = sphi 0, %s162
    %s163 = sphi 0, %s160
    %s164 = sphi 0, %s163
    %s180 = sphi 0, %s164
  $region4: #{_lambda_.24} parent=0 // loop_header_branch
    %17 = sbr.rel (%p15) target = $region8
  $region5: #{_lambda_.24} parent=0 // loop_body
    %s19 = ssub.s32 %s14, 1
    %s20 = ssub.s32 %s14, 2
    %s21 = sadd.s32 %s14, 1
    %s22 = ssub.s32 %s14, %s21
    %p23 = scmp.eq.s32.totalorder %s22, 0
    %s25 = sadd.s32 %s24, 1
    %s26 = scalar_select %p23, %s24, %s25
    %p29 = pneg %p23
    %p30 = scmp.eq.s32.totalorder %s14, 1
    %p31 = por %p29, %p30
    %p32 = scmp.ne.s32.totalorder %s24, %s27
    %p33 = scmp.eq.s32.totalorder %s14, 0
    %p34 = por %p32, %p33
    %p35 = scmp.ne.s32.totalorder %s24, %s27
    %p36 = scmp.eq.s32.totalorder %s19, 1
    %p37 = por %p35, %p36
    %p38 = scmp.ne.s32.totalorder %s27, %s28
    %p39 = scmp.eq.s32.totalorder %s19, 0
    %p40 = por %p38, %p39
    %p41 = scmp.ne.s32.totalorder %s27, %s28
    %p42 = scmp.eq.s32.totalorder %s20, 1
    %p43 = por %p41, %p42
    %p45 = scmp.ne.s32.totalorder %s28, %s44
    %p46 = scmp.eq.s32.totalorder %s20, 0
    %p47 = por %p45, %p46
    %s49 = sadd.s32 %s48, 1
    %p52 = scmp.eq.s32.totalorder %s14, 1
    %p53 = scmp.ne.s32.totalorder %s48, %s50
    %p54 = scmp.eq.s32.totalorder %s14, 0
    %p55 = por %p53, %p54
    %p56 = scmp.ne.s32.totalorder %s48, %s50
    %p57 = scmp.eq.s32.totalorder %s19, 1
    %p58 = por %p56, %p57
    %p59 = scmp.ne.s32.totalorder %s50, %s51
    %p60 = scmp.eq.s32.totalorder %s19, 0
    %p61 = por %p59, %p60
    %p62 = scmp.ne.s32.totalorder %s50, %s51
    %p63 = scmp.eq.s32.totalorder %s20, 1
    %p64 = por %p62, %p63
    %p66 = scmp.ne.s32.totalorder %s51, %s65
    %p67 = scmp.eq.s32.totalorder %s20, 0
    %p68 = por %p66, %p67
    %s70 = sadd.s32 %s69, 1
    %p73 = scmp.eq.s32.totalorder %s14, 1
    %p74 = scmp.ne.s32.totalorder %s69, %s71
    %p75 = scmp.eq.s32.totalorder %s14, 0
    %p76 = por %p74, %p75
    %p77 = scmp.ne.s32.totalorder %s69, %s71
    %p78 = scmp.eq.s32.totalorder %s19, 1
    %p79 = por %p77, %p78
    %p80 = scmp.ne.s32.totalorder %s71, %s72
    %p81 = scmp.eq.s32.totalorder %s19, 0
    %p82 = por %p80, %p81
    %p83 = scmp.ne.s32.totalorder %s71, %s72
    %p84 = scmp.eq.s32.totalorder %s20, 1
    %p85 = por %p83, %p84
    %p87 = scmp.ne.s32.totalorder %s72, %s86
    %p88 = scmp.eq.s32.totalorder %s20, 0
    %p89 = por %p87, %p88
    %s91 = sadd.s32 %s90, 1
    %p94 = scmp.eq.s32.totalorder %s14, 1
    %p95 = scmp.ne.s32.totalorder %s90, %s92
    %p96 = scmp.eq.s32.totalorder %s14, 0
    %p97 = por %p95, %p96
    %p98 = scmp.ne.s32.totalorder %s90, %s92
    %p99 = scmp.eq.s32.totalorder %s19, 1
    %p100 = por %p98, %p99
    %p101 = scmp.ne.s32.totalorder %s92, %s93
    %p102 = scmp.eq.s32.totalorder %s19, 0
    %p103 = por %p101, %p102
    %p104 = scmp.ne.s32.totalorder %s92, %s93
    %p105 = scmp.eq.s32.totalorder %s20, 1
    %p106 = por %p104, %p105
    %p108 = scmp.ne.s32.totalorder %s93, %s107
    %p109 = scmp.eq.s32.totalorder %s20, 0
    %p110 = por %p108, %p109
    %s112 = sadd.s32 %s111, 1
    %p115 = scmp.eq.s32.totalorder %s14, 1
    %p116 = scmp.ne.s32.totalorder %s111, %s113
    %p117 = scmp.eq.s32.totalorder %s14, 0
    %p118 = por %p116, %p117
    %p119 = scmp.ne.s32.totalorder %s111, %s113
    %p120 = scmp.eq.s32.totalorder %s19, 1
    %p121 = por %p119, %p120
    %p122 = scmp.ne.s32.totalorder %s113, %s114
    %p123 = scmp.eq.s32.totalorder %s19, 0
    %p124 = por %p122, %p123
    %p125 = scmp.ne.s32.totalorder %s113, %s114
    %p126 = scmp.eq.s32.totalorder %s20, 1
    %p127 = por %p125, %p126
    %p129 = scmp.ne.s32.totalorder %s114, %s128
    %p130 = scmp.eq.s32.totalorder %s20, 0
    %p131 = por %p129, %p130
    %s132 = ssub.s32 %s14, %s21
    %p133 = scmp.eq.s32.totalorder %s132, 0
    %s135 = sadd.s32 %s134, 1
    %s136 = scalar_select %p133, %s134, %s135
    %p139 = pneg %p133
    %p140 = scmp.eq.s32.totalorder %s14, 1
    %p141 = por %p139, %p140
    %p142 = scmp.ne.s32.totalorder %s134, %s137
    %p143 = scmp.eq.s32.totalorder %s14, 0
    %p144 = por %p142, %p143
    %p145 = scmp.ne.s32.totalorder %s134, %s137
    %p146 = scmp.eq.s32.totalorder %s19, 1
    %p147 = por %p145, %p146
    %p148 = scmp.ne.s32.totalorder %s137, %s138
    %p149 = scmp.eq.s32.totalorder %s19, 0
    %p150 = por %p148, %p149
    %p151 = scmp.ne.s32.totalorder %s137, %s138
    %p152 = scmp.eq.s32.totalorder %s20, 1
    %p153 = por %p151, %p152
    %p155 = scmp.ne.s32.totalorder %s138, %s154
    %p156 = scmp.eq.s32.totalorder %s20, 0
    %p157 = por %p155, %p156
    %s158 = ssub.s32 %s14, %s21
    %p159 = scmp.eq.s32.totalorder %s158, 0
    %s161 = sadd.s32 %s160, 1
    %s162 = scalar_select %p159, %s160, %s161
    %p165 = pneg %p159
    %p166 = scmp.eq.s32.totalorder %s14, 1
    %p167 = por %p165, %p166
    %p168 = scmp.ne.s32.totalorder %s160, %s163
    %p169 = scmp.eq.s32.totalorder %s14, 0
    %p170 = por %p168, %p169
    %p171 = scmp.ne.s32.totalorder %s160, %s163
    %p172 = scmp.eq.s32.totalorder %s19, 1
    %p173 = por %p171, %p172
    %p174 = scmp.ne.s32.totalorder %s163, %s164
    %p175 = scmp.eq.s32.totalorder %s19, 0
    %p176 = por %p174, %p175
    %p177 = scmp.ne.s32.totalorder %s163, %s164
    %p178 = scmp.eq.s32.totalorder %s20, 1
    %p179 = por %p177, %p178
    %p181 = scmp.ne.s32.totalorder %s164, %s180
    %p182 = scmp.eq.s32.totalorder %s20, 0
    %p183 = por %p181, %p182
    %p184 = scmp.le.s32.totalorder 1, %s14
    %p185 = scmp.lt.s32.totalorder %s14, 3
    %p186 = pnand %p184, %p185
    %p187 = pneg %p186
    // Predicated region
    $region9: #{_lambda_.24} parent=5 // pred_check
      _
    $region10: #{_lambda_.24} parent=5 // pred_check_branch
      %189 = sbr.rel (%p186) target = $region12
    $region11: #{_lambda_.24} parent=5 // pred_region
      %s190 = ssub.s32 %s14, 1
      // Predicated region
      $region13: #{_lambda_.24} parent=11 // pred_check
        %p191 = pneg %p61
      $region14: #{_lambda_.24} parent=11 // pred_check_branch
        %193 = sbr.rel (%p191) target = $region16
      $region15: #{_lambda_.24} parent=11 // pred_region
        _
      $region16: #{_lambda_.24} parent=11 // pred_fallthru
        _
      // Predicated region
      $region17: #{_lambda_.24} parent=11 // pred_check
        %p194 = pneg %p82
      $region18: #{_lambda_.24} parent=11 // pred_check_branch
        %196 = sbr.rel (%p194) target = $region20
      $region19: #{_lambda_.24} parent=11 // pred_region
        _
      $region20: #{_lambda_.24} parent=11 // pred_fallthru
        _
      // Predicated region
      $region21: #{_lambda_.24} parent=11 // pred_check
        %p197 = pneg %p103
      $region22: #{_lambda_.24} parent=11 // pred_check_branch
        %199 = sbr.rel (%p197) target = $region24
      $region23: #{_lambda_.24} parent=11 // pred_region
        _
      $region24: #{_lambda_.24} parent=11 // pred_fallthru
        _
      // Predicated region
      $region25: #{_lambda_.24} parent=11 // pred_check
        %p200 = pneg %p124
      $region26: #{_lambda_.24} parent=11 // pred_check_branch
        %202 = sbr.rel (%p200) target = $region28
      $region27: #{_lambda_.24} parent=11 // pred_region
        _
      $region28: #{_lambda_.24} parent=11 // pred_fallthru
        _
    $region12: #{_lambda_.24} parent=5 // pred_fallthru
      _
    %p203 = scmp.lt.s32.totalorder %s14, 2
    // Predicated region
    $region29: #{_lambda_.24} parent=5 // pred_check
      %p204 = pneg %p203
    $region30: #{_lambda_.24} parent=5 // pred_check_branch
      %206 = sbr.rel (%p204) target = $region32
    $region31: #{_lambda_.24} parent=5 // pred_region
      // Predicated region
      $region33: #{_lambda_.24} parent=31 // pred_check
        %p207 = pneg %p34
      $region34: #{_lambda_.24} parent=31 // pred_check_branch
        %209 = sbr.rel (%p207) target = $region36
      $region35: #{_lambda_.24} parent=31 // pred_region
        %p210 = scmp.lt.s32.totalorder %s14, 1
        %s211 = scalar_select %p210, %s14, 1
        %s212 = smul.addr %s211, 3
        %s213 = smul.addr %s212, 8
        %s214 = scalar_lea.vmem %s0, %s213
      $region36: #{_lambda_.24} parent=31 // pred_fallthru
        _
      // Predicated region
      $region37: #{_lambda_.24} parent=31 // pred_check
        %p215 = pneg %p144
      $region38: #{_lambda_.24} parent=31 // pred_check_branch
        %217 = sbr.rel (%p215) target = $region40
      $region39: #{_lambda_.24} parent=31 // pred_region
        %p218 = scmp.lt.s32.totalorder %s14, 1
        %s219 = scalar_select %p218, %s14, 1
        %s220 = scalar_lea.vmem %s5, %s219
      $region40: #{_lambda_.24} parent=31 // pred_fallthru
        _
    $region32: #{_lambda_.24} parent=5 // pred_fallthru
      _
    %p221 = scmp.le.s32.totalorder 1, %s14
    %p222 = scmp.lt.s32.totalorder %s14, 3
    %p223 = pnand %p221, %p222
    %p224 = pneg %p223
    // Predicated region
    $region41: #{_lambda_.24} parent=5 // pred_check
      _
    $region42: #{_lambda_.24} parent=5 // pred_check_branch
      %226 = sbr.rel (%p223) target = $region44
    $region43: #{_lambda_.24} parent=5 // pred_region
      %s227 = ssub.s32 %s14, 1
      %p228 = scmp.lt.s32.totalorder %s19, 1
      %s229 = scalar_select %p228, %s19, 1
      %s230 = smul.addr %s229, 3
      %s231 = smul.addr %s230, 8
      %s232 = scalar_lea.vmem %s0, %s231
      %p233 = pneg %p40
      %p234 = pneg %p37
      %p235 = pneg %p61
      %p236 = pneg %p58
      %p237 = pneg %p82
      %p238 = pneg %p79
      %p239 = pneg %p103
      %p240 = pneg %p100
      %p241 = pneg %p124
      %p242 = pneg %p121
      %p243 = scmp.lt.s32.totalorder %s19, 1
      %s244 = scalar_select %p243, %s19, 1
      %s245 = scalar_lea.vmem %s5, %s244
      %p246 = pneg %p150
      %p247 = pneg %p147
      %p248 = pneg %p176
      %p249 = pneg %p173
      %p250 = scmp.lt.s32.totalorder %s19, 1
      %s251 = scalar_select %p250, %s19, 1
      %s252 = scalar_lea.vmem %s6, %s251
      %p253 = scmp.lt.s32.totalorder %s19, 1
      %s254 = scalar_select %p253, %s19, 1
      %s255 = smul.addr %s254, 3
      %s256 = smul.addr %s255, 8
      %s257 = scalar_lea.vmem %s0, %s256
      %p258 = scmp.lt.s32.totalorder %s19, 1
      %s259 = scalar_select %p258, %s19, 1
      %s260 = scalar_lea.vmem %s5, %s259
      %p261 = scmp.lt.s32.totalorder %s19, 1
      %s262 = scalar_select %p261, %s19, 1
      %s263 = scalar_lea.vmem %s6, %s262
      %v265 = vld [vmem:[%s257 + $0x1] sm:$0xff]
      %v266 = vld [vmem:[%s257 + $0x9] sm:$0xff]
      %v267 = vld [vmem:[%s257] sm:$0xff]
      %v268 = vld [vmem:[%s257 + $0x8] sm:$0xff]
      %v269 = vpack.c.bf16 %v268, %v267
      %v270 = vld [vmem:[%s1] sm:$0xf]
      %v271 = vld [vmem:[%s1 + $0x4] sm:$0xf]
      %v272 = vld [vmem:[%s1 + $0x8] sm:$0xf]
      %v273 = vld [vmem:[%s1 + $0xc] sm:$0xf]
      %v274 = vpack.c.bf16 %v266, %v265
      %s275 = scalar_lea.vmem %s1, 16
      %v276 = vld [vmem:[%s275] sm:$0xf]
      %v277 = vld [vmem:[%s275 + $0x4] sm:$0xf]
      %v278 = vld [vmem:[%s275 + $0x8] sm:$0xf]
      %v279 = vld [vmem:[%s275 + $0xc] sm:$0xf]
      %v284 = vunpack.c.l.b16 %v276
      %v285 = vunpack.c.l.b16 %v277
      %v286 = vunpack.c.l.b16 %v278
      %v287 = vunpack.c.l.b16 %v279
      %v288 = vpack.c.b16 %v285, %v284
      %v289 = vpack.c.b16 %v287, %v286
      %vm292 = vcmask 261120
      %v294 = vsel %vm292, %v274, 0
      %296 = vmatprep.subr.bf16.mxu0 0
      %297 = vmatpush1.bf16.msra.mxu0 %v288
      %298 = vmatprep.subr.bf16.mxu0 0
      %299 = vmatpush1.bf16.msra.mxu0 %v289
      %300 = vmatprep.subr.bf16.mxu0 0
      %301 = vmatpush1.bf16.msra.mxu0 0
      %302 = vmatprep.subr.bf16.mxu0 0
      %303 = vmatpush1.bf16.msra.mxu0 0
      %304 = vmatprep.subr.bf16.mxu0 0
      %305 = vmatpush1.bf16.msra.mxu0 0
      %306 = vmatprep.subr.bf16.mxu0 0
      %307 = vmatpush1.bf16.msra.mxu0 0
      %308 = vmatprep.subr.bf16.mxu0 0
      %309 = vmatpush1.bf16.msra.mxu0 0
      %310 = vmatprep.subr.bf16.mxu0 0
      %311 = vmatpush1.bf16.msra.mxu0 0
      %312 = vmatprep.subr.bf16.mxu0 0
      %313 = vmatpush1.bf16.msra.mxu0 0
      %314 = vmatprep.subr.bf16.mxu0 0
      %315 = vmatpush1.bf16.msra.mxu0 0
      %316 = vmatprep.subr.bf16.mxu0 0
      %317 = vmatpush1.bf16.msra.mxu0 0
      %318 = vmatprep.subr.bf16.mxu0 0
      %319 = vmatpush1.bf16.msra.mxu0 0
      %320 = vmatprep.subr.bf16.mxu0 0
      %321 = vmatpush1.bf16.msra.mxu0 0
      %322 = vmatprep.subr.bf16.mxu0 0
      %323 = vmatpush1.bf16.msra.mxu0 0
      %324 = vmatprep.subr.bf16.mxu0 0
      %325 = vmatpush1.bf16.msra.mxu0 0
      %326 = vmatprep.subr.bf16.mxu0 0
      %327 = vmatpush1.bf16.msra.mxu0 0
      %328 = vmatprep.mubr.bf16.mxu0 0
      %329 = vmatmul.mubr.bf16.gmra.mrb[0].mxu0 %v294
      %v330 = vpop.f32.mrb[0].mxu0
      %v331 = vadd.f32 0.0, %v330
      %v332 = vpop.f32.mrb[0].mxu0
      %v333 = vpop.f32.mrb[0].mxu0
      %v334 = vadd.f32 0.0, %v333
      %v335 = vpop.f32.mrb[0].mxu0
      %336 = vdwg.mxu0
      %v341 = vunpack.c.l.b16 %v270
      %v342 = vunpack.c.l.b16 %v271
      %v343 = vunpack.c.l.b16 %v272
      %v344 = vunpack.c.l.b16 %v273
      %v345 = vpack.c.b16 %v342, %v341
      %v346 = vpack.c.b16 %v344, %v343
      %v350 = vsel %vm292, %v269, 0
      %352 = vmatprep.subr.bf16.mxu0 0
      %353 = vmatpush1.bf16.msra.mxu0 %v345
      %354 = vmatprep.subr.bf16.mxu0 0
      %355 = vmatpush1.bf16.msra.mxu0 %v346
      %356 = vmatprep.subr.bf16.mxu0 0
      %357 = vmatpush1.bf16.msra.mxu0 0
      %358 = vmatprep.subr.bf16.mxu0 0
      %359 = vmatpush1.bf16.msra.mxu0 0
      %360 = vmatprep.subr.bf16.mxu0 0
      %361 = vmatpush1.bf16.msra.mxu0 0
      %362 = vmatprep.subr.bf16.mxu0 0
      %363 = vmatpush1.bf16.msra.mxu0 0
      %364 = vmatprep.subr.bf16.mxu0 0
      %365 = vmatpush1.bf16.msra.mxu0 0
      %366 = vmatprep.subr.bf16.mxu0 0
      %367 = vmatpush1.bf16.msra.mxu0 0
      %368 = vmatprep.subr.bf16.mxu0 0
      %369 = vmatpush1.bf16.msra.mxu0 0
      %370 = vmatprep.subr.bf16.mxu0 0
      %371 = vmatpush1.bf16.msra.mxu0 0
      %372 = vmatprep.subr.bf16.mxu0 0
      %373 = vmatpush1.bf16.msra.mxu0 0
      %374 = vmatprep.subr.bf16.mxu0 0
      %375 = vmatpush1.bf16.msra.mxu0 0
      %376 = vmatprep.subr.bf16.mxu0 0
      %377 = vmatpush1.bf16.msra.mxu0 0
      %378 = vmatprep.subr.bf16.mxu0 0
      %379 = vmatpush1.bf16.msra.mxu0 0
      %380 = vmatprep.subr.bf16.mxu0 0
      %381 = vmatpush1.bf16.msra.mxu0 0
      %382 = vmatprep.subr.bf16.mxu0 0
      %383 = vmatpush1.bf16.msra.mxu0 0
      %384 = vmatprep.mubr.bf16.mxu0 0
      %385 = vmatmul.mubr.bf16.gmra.mrb[0].mxu0 %v350
      %v386 = vpop.f32.mrb[0].mxu0
      %v387 = vadd.f32 %v331, %v386
      %v388 = vpop.f32.mrb[0].mxu0
      %v389 = vpop.f32.mrb[0].mxu0
      %v390 = vadd.f32 %v334, %v389
      %v391 = vpop.f32.mrb[0].mxu0
      %392 = vdwg.mxu0
      %v393 = vld [vmem:[%s257 + $0x2] sm:$0xff]
      %v394 = vld [vmem:[%s257 + $0xa] sm:$0xff]
      %v395 = vpack.c.bf16 %v394, %v393
      %s396 = scalar_lea.vmem %s1, 32
      %v397 = vld [vmem:[%s396] sm:$0xf]
      %v398 = vld [vmem:[%s396 + $0x4] sm:$0xf]
      %v399 = vld [vmem:[%s396 + $0x8] sm:$0xf]
      %v400 = vld [vmem:[%s396 + $0xc] sm:$0xf]
      %v405 = vunpack.c.l.b16 %v397
      %v406 = vunpack.c.l.b16 %v398
      %v407 = vunpack.c.l.b16 %v399
      %v408 = vunpack.c.l.b16 %v400
      %v409 = vpack.c.b16 %v406, %v405
      %v410 = vpack.c.b16 %v408, %v407
      %v414 = vsel %vm292, %v395, 0
      %416 = vmatprep.subr.bf16.mxu0 0
      %417 = vmatpush1.bf16.msra.mxu0 %v409
      %418 = vmatprep.subr.bf16.mxu0 0
      %419 = vmatpush1.bf16.msra.mxu0 %v410
      %420 = vmatprep.subr.bf16.mxu0 0
      %421 = vmatpush1.bf16.msra.mxu0 0
      %422 = vmatprep.subr.bf16.mxu0 0
      %423 = vmatpush1.bf16.msra.mxu0 0
      %424 = vmatprep.subr.bf16.mxu0 0
      %425 = vmatpush1.bf16.msra.mxu0 0
      %426 = vmatprep.subr.bf16.mxu0 0
      %427 = vmatpush1.bf16.msra.mxu0 0
      %428 = vmatprep.subr.bf16.mxu0 0
      %429 = vmatpush1.bf16.msra.mxu0 0
      %430 = vmatprep.subr.bf16.mxu0 0
      %431 = vmatpush1.bf16.msra.mxu0 0
      %432 = vmatprep.subr.bf16.mxu0 0
      %433 = vmatpush1.bf16.msra.mxu0 0
      %434 = vmatprep.subr.bf16.mxu0 0
      %435 = vmatpush1.bf16.msra.mxu0 0
      %436 = vmatprep.subr.bf16.mxu0 0
      %437 = vmatpush1.bf16.msra.mxu0 0
      %438 = vmatprep.subr.bf16.mxu0 0
      %439 = vmatpush1.bf16.msra.mxu0 0
      %440 = vmatprep.subr.bf16.mxu0 0
      %441 = vmatpush1.bf16.msra.mxu0 0
      %442 = vmatprep.subr.bf16.mxu0 0
      %443 = vmatpush1.bf16.msra.mxu0 0
      %444 = vmatprep.subr.bf16.mxu0 0
      %445 = vmatpush1.bf16.msra.mxu0 0
      %446 = vmatprep.subr.bf16.mxu0 0
      %447 = vmatpush1.bf16.msra.mxu0 0
      %448 = vmatprep.mubr.bf16.mxu0 0
      %449 = vmatmul.mubr.bf16.gmra.mrb[0].mxu0 %v414
      %v450 = vpop.f32.mrb[0].mxu0
      %v451 = vadd.f32 0.0, %v450
      %v452 = vpop.f32.mrb[0].mxu0
      %v453 = vpop.f32.mrb[0].mxu0
      %v454 = vadd.f32 0.0, %v453
      %v455 = vpop.f32.mrb[0].mxu0
      %456 = vdwg.mxu0
      %v457 = vadd.f32 %v387, %v451
      %v458 = vadd.f32 %v390, %v454
      %v459 = vld [vmem:[%s2] sm:$0x1]
      %v461 = vlaneseq
      %v462 = vshrl.u32 %v461, 7
      %v463 = vsub.s32 0, %v462
      %v464 = vrot.slane %v459, %v463
      %v466 = vadd.f32 %v457, %v464
      %v467 = vadd.f32 %v458, %v464
      %v468 = vadd.f32 %v466, %v265
      %v469 = vadd.f32 %v467, %v266
      %v470 = vmax.f32 %v468, 0.0
      %v471 = vmax.f32 %v469, 0.0
      %v472 = vld [vmem:[%s3] sm:$0x1]
      %v473 = vld [vmem:[#allocation2] sm:$0x1]
      %475 = vset.pattern.permute.xlu0 0
      %476 = vperm.xlu0 %475, %v473
      %v477 = vpop.permute.xlu0 %476
      %v479 = vlaneseq
      %v480 = vshrl.u32 %v479, 7
      %v481 = vsub.s32 0, %v480
      %v482 = vrot.slane %v477, %v481
      %v484 = vsel %vm292, %v472, 0
      %v487 = vsel %vm292, %v470, 0
      %v490 = vsel %vm292, %v471, 0
      %492 = vmatprep.subr.mxu0 0.0
      %493 = vmatpush1.xpose.msra.mxu0 %v487
      %494 = vmatprep.subr.mxu0 0.0
      %495 = vmatpush1.xpose.msra.mxu0 %v490
      %496 = vmatprep.subr.mxu0 0.0
      %497 = vmatpush1.xpose.msra.mxu0 0.0
      %498 = vmatprep.subr.mxu0 0.0
      %499 = vmatpush1.xpose.msra.mxu0 0.0
      %500 = vmatprep.subr.mxu0 0.0
      %501 = vmatpush1.xpose.msra.mxu0 0.0
      %502 = vmatprep.subr.mxu0 0.0
      %503 = vmatpush1.xpose.msra.mxu0 0.0
      %504 = vmatprep.subr.mxu0 0.0
      %505 = vmatpush1.xpose.msra.mxu0 0.0
      %506 = vmatprep.subr.mxu0 0.0
      %507 = vmatpush1.xpose.msra.mxu0 0.0
      %508 = vmatprep.subr.mxu0 0.0
      %509 = vmatpush1.xpose.msra.mxu0 0.0
      %510 = vmatprep.subr.mxu0 0.0
      %511 = vmatpush1.xpose.msra.mxu0 0.0
      %512 = vmatprep.subr.mxu0 0.0
      %513 = vmatpush1.xpose.msra.mxu0 0.0
      %514 = vmatprep.subr.mxu0 0.0
      %515 = vmatpush1.xpose.msra.mxu0 0.0
      %516 = vmatprep.subr.mxu0 0.0
      %517 = vmatpush1.xpose.msra.mxu0 0.0
      %518 = vmatprep.subr.mxu0 0.0
      %519 = vmatpush1.xpose.msra.mxu0 0.0
      %520 = vmatprep.subr.mxu0 0.0
      %521 = vmatpush1.xpose.msra.mxu0 0.0
      %522 = vmatprep.subr.mxu0 0.0
      %523 = vmatpush1.xpose.msra.mxu0 0.0
      %524 = vmatprep.subr.mxu0 0.0
      %525 = vmatpush1.xpose.msra.mxu0 0.0
      %526 = vmatprep.subr.mxu0 0.0
      %527 = vmatpush1.xpose.msra.mxu0 0.0
      %528 = vmatprep.subr.mxu0 0.0
      %529 = vmatpush1.xpose.msra.mxu0 0.0
      %530 = vmatprep.subr.mxu0 0.0
      %531 = vmatpush1.xpose.msra.mxu0 0.0
      %532 = vmatprep.subr.mxu0 0.0
      %533 = vmatpush1.xpose.msra.mxu0 0.0
      %534 = vmatprep.subr.mxu0 0.0
      %535 = vmatpush1.xpose.msra.mxu0 0.0
      %536 = vmatprep.subr.mxu0 0.0
      %537 = vmatpush1.xpose.msra.mxu0 0.0
      %538 = vmatprep.subr.mxu0 0.0
      %539 = vmatpush1.xpose.msra.mxu0 0.0
      %540 = vmatprep.subr.mxu0 0.0
      %541 = vmatpush1.xpose.msra.mxu0 0.0
      %542 = vmatprep.subr.mxu0 0.0
      %543 = vmatpush1.xpose.msra.mxu0 0.0
      %544 = vmatprep.subr.mxu0 0.0
      %545 = vmatpush1.xpose.msra.mxu0 0.0
      %546 = vmatprep.subr.mxu0 0.0
      %547 = vmatpush1.xpose.msra.mxu0 0.0
      %548 = vmatprep.subr.mxu0 0.0
      %549 = vmatpush1.xpose.msra.mxu0 0.0
      %550 = vmatprep.subr.mxu0 0.0
      %551 = vmatpush1.xpose.msra.mxu0 0.0
      %552 = vmatprep.subr.mxu0 0.0
      %553 = vmatpush1.xpose.msra.mxu0 0.0
      %554 = vmatprep.subr.mxu0 0.0
      %555 = vmatpush1.xpose.msra.mxu0 0.0
      %556 = vmatprep.mubr.f32.mxu0 0.0
      %557 = vmatmul.mubr.f32.gmra.mrb[0].mxu0 %v484
      %v558 = vpop.f32.mrb[0].mxu0
      %v559 = vadd.f32 %v482, %v558
      %v560 = vpop.f32.mrb[0].mxu0
      %561 = vdwg.mxu0
      %v562 = vxor.u32 %v559, 2147483648
      %v563 = vmul.f32 %v562, 1.442695
      %v564 = vpow.pop %v563
      %v565 = vadd.f32 %v564, 1.0
      %v566 = vrcp.pop %v565
      %v567 = vmul.f32 1.0, %v566
      %v568 = vmax.f32 %v567, 0.0
      %v569 = vld [vmem:[%s260] sm:$0x1]
      %v570 = vmul.f32 %v568, %v569
      %vm571 = vcmask 122880
      %572 = vst.msk [vmem:[%s263] sm:$0x1] %vm571, %v570
      %p573 = scmp.lt.s32.totalorder %s19, 1
      %s574 = scalar_select %p573, %s19, 1
      %s575 = scalar_lea.vmem %s6, %s574
      // Predicated region
      $region45: #{_lambda_.24} parent=43 // pred_check
        %p576 = pneg %p173
      $region46: #{_lambda_.24} parent=43 // pred_check_branch
        %578 = sbr.rel (%p576) target = $region48
      $region47: #{_lambda_.24} parent=43 // pred_region
        _
      $region48: #{_lambda_.24} parent=43 // pred_fallthru
        _
    $region44: #{_lambda_.24} parent=5 // pred_fallthru
      _
    %p579 = scmp.le.s32.totalorder 2, %s14
    // Predicated region
    $region49: #{_lambda_.24} parent=5 // pred_check
      %p580 = pneg %p579
    $region50: #{_lambda_.24} parent=5 // pred_check_branch
      %582 = sbr.rel (%p580) target = $region52
    $region51: #{_lambda_.24} parent=5 // pred_region
      %s583 = ssub.s32 %s14, 2
      // Predicated region
      $region53: #{_lambda_.24} parent=51 // pred_check
        %p584 = pneg %p179
      $region54: #{_lambda_.24} parent=51 // pred_check_branch
        %586 = sbr.rel (%p584) target = $region56
      $region55: #{_lambda_.24} parent=51 // pred_region
        %p587 = scmp.lt.s32.totalorder %s20, 1
        %s588 = scalar_select %p587, %s20, 1
        %s589 = scalar_lea.vmem %s6, %s588
      $region56: #{_lambda_.24} parent=51 // pred_fallthru
        _
    $region52: #{_lambda_.24} parent=5 // pred_fallthru
      _
  $region6: #{_lambda_.24} parent=0 // loop_footer
    %s18 = sadd.s32 1, %s14
  $region7: #{_lambda_.24} parent=0 // loop_footer_branch
    %13 = sbr.rel target = $region3
  $region8: #{_lambda_.24} parent=0 // loop_exit
    _

// kernel: custom-call.4
$region0: #{custom-call.4}
  %s0 = inlined_call_operand.vmem [shape: f32[16,2], index: 0, kind: output, shape index: {}]

// kernel: custom-call.5
$region0: #{custom-call.5}
  %s0 = inlined_call_operand.vmem [shape: bf16[16,2,32], index: 0, kind: output, shape index: {}]

// kernel: custom-call.3
$region0: #{custom-call.3}
  %s0 = inlined_call_operand.vmem [shape: f32[2,32], index: 0, kind: output, shape index: {}]

// kernel: custom-call.2
$region0: #{custom-call.2}
  %s0 = inlined_call_operand.vmem [shape: f32[2], index: 0, kind: output, shape index: {}]

// kernel: _lambda_.22
$region0: #{_lambda_.22}
  #allocation0 [shape = 'u32[]', space=smem, size = 0x4, offset = 0x4, fixed_abs, tag = 'smem constant byte address 0x4 - core index']
  #allocation1 [shape = 'u32[144,128]{1,0:T(1,128)}', space=vmem, size = 0x12000, scoped, tag = 'internal scratch']
  %s0 = inlined_call_operand.vmem [shape: bf16[32,32], index: 0, kind: input, shape index: {}]
  %s1 = inlined_call_operand.vmem [shape: f32[1,32], index: 1, kind: input, shape index: {}]
  %s2 = inlined_call_operand.vmem [shape: f32[1,32], index: 2, kind: input, shape index: {}, may-alias: {2,6}]
  %s3 = inlined_call_operand.vmem [shape: bf16[32,64], index: 3, kind: input, shape index: {}]
  %s4 = inlined_call_operand.vmem [shape: f32[1,64], index: 4, kind: input, shape index: {}]
  %s5 = inlined_call_operand.vmem [shape: bf16[64,32], index: 5, kind: input, shape index: {}]
  %s6 = inlined_call_operand.vmem [shape: f32[1,32], index: 6, kind: input, shape index: {}, may-alias: {2,6}]
  %s7 = inlined_call_operand.vmem [shape: bf16[32,32], index: 7, kind: output, shape index: {}]
  %s8 = sld [smem:[#allocation0]]
  $region38: #{_lambda_.22} parent=0
    _
  %s10 = ssub.s32 1, %s8
  %s11 = scalar_select 0, %s10, %s8
  // Predicated region
  $region2: #{_lambda_.22} parent=0 // pred_check
    _
  $region3: #{_lambda_.22} parent=0 // pred_check_branch
    %13 = sbr.rel (0) target = $region5
  $region4: #{_lambda_.22} parent=0 // pred_region
    _
  $region5: #{_lambda_.22} parent=0 // pred_fallthru
    _
  // Predicated region
  $region6: #{_lambda_.22} parent=0 // pred_check
    _
  $region7: #{_lambda_.22} parent=0 // pred_check_branch
    %15 = sbr.rel (0) target = $region9
  $region8: #{_lambda_.22} parent=0 // pred_region
    _
  $region9: #{_lambda_.22} parent=0 // pred_fallthru
    _
  // Predicated region
  $region10: #{_lambda_.22} parent=0 // pred_check
    _
  $region11: #{_lambda_.22} parent=0 // pred_check_branch
    %17 = sbr.rel (0) target = $region13
  $region12: #{_lambda_.22} parent=0 // pred_region
    _
  $region13: #{_lambda_.22} parent=0 // pred_fallthru
    _
  // Predicated region
  $region14: #{_lambda_.22} parent=0 // pred_check
    _
  $region15: #{_lambda_.22} parent=0 // pred_check_branch
    %19 = sbr.rel (0) target = $region17
  $region16: #{_lambda_.22} parent=0 // pred_region
    _
  $region17: #{_lambda_.22} parent=0 // pred_fallthru
    _
  // Predicated region
  $region18: #{_lambda_.22} parent=0 // pred_check
    _
  $region19: #{_lambda_.22} parent=0 // pred_check_branch
    %21 = sbr.rel (0) target = $region21
  $region20: #{_lambda_.22} parent=0 // pred_region
    _
  $region21: #{_lambda_.22} parent=0 // pred_fallthru
    _
  // Predicated region
  $region22: #{_lambda_.22} parent=0 // pred_check
    _
  $region23: #{_lambda_.22} parent=0 // pred_check_branch
    %23 = sbr.rel (0) target = $region25
  $region24: #{_lambda_.22} parent=0 // pred_region
    _
  $region25: #{_lambda_.22} parent=0 // pred_fallthru
    _
  // Predicated region
  $region26: #{_lambda_.22} parent=0 // pred_check
    _
  $region27: #{_lambda_.22} parent=0 // pred_check_branch
    %25 = sbr.rel (0) target = $region29
  $region28: #{_lambda_.22} parent=0 // pred_region
    _
  $region29: #{_lambda_.22} parent=0 // pred_fallthru
    _
  %v27 = vld [vmem:[%s0] sm:$0xf]
  %v28 = vld [vmem:[%s0 + $0x4] sm:$0xf]
  %v29 = vld [vmem:[%s0 + $0x8] sm:$0xf]
  %v30 = vld [vmem:[%s0 + $0xc] sm:$0xf]
  %v31 = vunpack.c.l.bf16 %v27
  %v32 = vunpack.c.l.bf16 %v28
  %v33 = vunpack.c.l.bf16 %v29
  %v34 = vunpack.c.l.bf16 %v30
  %v35 = vld [vmem:[%s1] sm:$0x1]
  %v36 = vld [vmem:[%s2] sm:$0x1]
  %vm37 = vcmask 261120
  %v38 = vsel %vm37, %v31, 0.0
  %39 = vadd.xlane.f32.xlu0 %v38
  %v40 = vpop.xlane.xlu0 %39
  %v41 = vsel %vm37, %v32, 0.0
  %42 = vadd.xlane.f32.xlu0 %v41
  %v43 = vpop.xlane.xlu0 %42
  %v44 = vsel %vm37, %v33, 0.0
  %45 = vadd.xlane.f32.xlu0 %v44
  %v46 = vpop.xlane.xlu0 %45
  %v47 = vsel %vm37, %v34, 0.0
  %48 = vadd.xlane.f32.xlu0 %v47
  %v49 = vpop.xlane.xlu0 %48
  %v50 = vrcp.pop 32.0
  %v51 = vmul.f32 %v40, %v50
  %v52 = vmul.f32 %v43, %v50
  %v53 = vmul.f32 %v46, %v50
  %v54 = vmul.f32 %v49, %v50
  %v55 = vsub.f32 %v31, %v51
  %v56 = vsub.f32 %v32, %v52
  %v57 = vsub.f32 %v33, %v53
  %v58 = vsub.f32 %v34, %v54
  %v59 = vmul.f32 %v55, %v55
  %v60 = vmul.f32 %v56, %v56
  %v61 = vmul.f32 %v57, %v57
  %v62 = vmul.f32 %v58, %v58
  %v63 = vsel %vm37, %v59, 0.0
  %64 = vadd.xlane.f32.xlu0 %v63
  %v65 = vpop.xlane.xlu0 %64
  %v66 = vsel %vm37, %v60, 0.0
  %67 = vadd.xlane.f32.xlu0 %v66
  %v68 = vpop.xlane.xlu0 %67
  %v69 = vsel %vm37, %v61, 0.0
  %70 = vadd.xlane.f32.xlu0 %v69
  %v71 = vpop.xlane.xlu0 %70
  %v72 = vsel %vm37, %v62, 0.0
  %73 = vadd.xlane.f32.xlu0 %v72
  %v74 = vpop.xlane.xlu0 %73
  %v75 = vmul.f32 %v65, %v50
  %v76 = vmul.f32 %v68, %v50
  %v77 = vmul.f32 %v71, %v50
  %v78 = vmul.f32 %v74, %v50
  %v79 = vadd.f32 %v75, 1e-12
  %v80 = vadd.f32 %v76, 1e-12
  %v81 = vadd.f32 %v77, 1e-12
  %v82 = vadd.f32 %v78, 1e-12
  %v83 = vrsqrt.pop %v79
  %v84 = vrsqrt.pop %v80
  %v85 = vrsqrt.pop %v81
  %v86 = vrsqrt.pop %v82
  %v87 = vmul.f32 %v55, %v83
  %v88 = vmul.f32 %v56, %v84
  %v89 = vmul.f32 %v57, %v85
  %v90 = vmul.f32 %v58, %v86
  %v92 = vlaneseq
  %v93 = vshrl.u32 %v92, 7
  %v94 = vsub.s32 0, %v93
  %v95 = vrot.slane %v35, %v94
  %v97 = vmul.f32 %v87, %v95
  %v98 = vmul.f32 %v88, %v95
  %v99 = vmul.f32 %v89, %v95
  %v100 = vmul.f32 %v90, %v95
  %v102 = vlaneseq
  %v103 = vshrl.u32 %v102, 7
  %v104 = vsub.s32 0, %v103
  %v105 = vrot.slane %v36, %v104
  %v107 = vadd.f32 %v97, %v105
  %v108 = vadd.f32 %v98, %v105
  %v109 = vadd.f32 %v99, %v105
  %v110 = vadd.f32 %v100, %v105
  %v111 = vpack.c.bf16 %v108, %v107
  %v112 = vpack.c.bf16 %v110, %v109
  %v113 = vld [vmem:[%s3] sm:$0xf]
  %v114 = vld [vmem:[%s3 + $0x4] sm:$0xf]
  %v115 = vld [vmem:[%s3 + $0x8] sm:$0xf]
  %v116 = vld [vmem:[%s3 + $0xc] sm:$0xf]
  %v117 = vld [vmem:[%s4] sm:$0x1]
  %v119 = vlaneseq
  %v120 = vshrl.u32 %v119, 7
  %v121 = vsub.s32 0, %v120
  %v122 = vrot.slane %v117, %v121
  %v128 = vunpack.c.l.b16 %v113
  %v129 = vunpack.c.l.b16 %v114
  %v130 = vunpack.c.l.b16 %v115
  %v131 = vunpack.c.l.b16 %v116
  %v132 = vpack.c.b16 %v129, %v128
  %v133 = vpack.c.b16 %v131, %v130
  %v137 = vsel %vm37, %v111, 0
  %v140 = vsel %vm37, %v112, 0
  %142 = vmatprep.subr.bf16.mxu0 0
  %143 = vmatpush1.bf16.msra.mxu0 %v132
  %144 = vmatprep.subr.bf16.mxu0 0
  %145 = vmatpush1.bf16.msra.mxu0 %v133
  %146 = vmatprep.subr.bf16.mxu0 0
  %147 = vmatpush1.bf16.msra.mxu0 0
  %148 = vmatprep.subr.bf16.mxu0 0
  %149 = vmatpush1.bf16.msra.mxu0 0
  %150 = vmatprep.subr.bf16.mxu0 0
  %151 = vmatpush1.bf16.msra.mxu0 0
  %152 = vmatprep.subr.bf16.mxu0 0
  %153 = vmatpush1.bf16.msra.mxu0 0
  %154 = vmatprep.subr.bf16.mxu0 0
  %155 = vmatpush1.bf16.msra.mxu0 0
  %156 = vmatprep.subr.bf16.mxu0 0
  %157 = vmatpush1.bf16.msra.mxu0 0
  %158 = vmatprep.subr.bf16.mxu0 0
  %159 = vmatpush1.bf16.msra.mxu0 0
  %160 = vmatprep.subr.bf16.mxu0 0
  %161 = vmatpush1.bf16.msra.mxu0 0
  %162 = vmatprep.subr.bf16.mxu0 0
  %163 = vmatpush1.bf16.msra.mxu0 0
  %164 = vmatprep.subr.bf16.mxu0 0
  %165 = vmatpush1.bf16.msra.mxu0 0
  %166 = vmatprep.subr.bf16.mxu0 0
  %167 = vmatpush1.bf16.msra.mxu0 0
  %168 = vmatprep.subr.bf16.mxu0 0
  %169 = vmatpush1.bf16.msra.mxu0 0
  %170 = vmatprep.subr.bf16.mxu0 0
  %171 = vmatpush1.bf16.msra.mxu0 0
  %172 = vmatprep.subr.bf16.mxu0 0
  %173 = vmatpush1.bf16.msra.mxu0 0
  %174 = vmatprep.mubr.bf16.mxu0 0
  %175 = vmatmul.mubr.bf16.gmra.mrb[0].mxu0 %v137
  %v176 = vpop.f32.mrb[0].mxu0
  %v177 = vadd.f32 %v122, %v176
  %v178 = vpop.f32.mrb[0].mxu0
  %v179 = vpop.f32.mrb[0].mxu0
  %v180 = vadd.f32 %v122, %v179
  %v181 = vpop.f32.mrb[0].mxu0
  %182 = vmatprep.mubr.bf16.mxu0 0
  %183 = vmatmul.mubr.bf16.gmra.mrb[0].mxu0 %v140
  %v184 = vpop.f32.mrb[0].mxu0
  %v185 = vadd.f32 %v122, %v184
  %v186 = vpop.f32.mrb[0].mxu0
  %v187 = vpop.f32.mrb[0].mxu0
  %v188 = vadd.f32 %v122, %v187
  %v189 = vpop.f32.mrb[0].mxu0
  %190 = vdwg.mxu0
  %v191 = vmax.f32 %v177, 0.0
  %v192 = vmax.f32 %v180, 0.0
  %v193 = vmax.f32 %v185, 0.0
  %v194 = vmax.f32 %v188, 0.0
  %v195 = vpack.c.bf16 %v192, %v191
  %v196 = vpack.c.bf16 %v194, %v193
  %v197 = vld [vmem:[%s5] sm:$0xf]
  %v198 = vld [vmem:[%s5 + $0x4] sm:$0xf]
  %v199 = vld [vmem:[%s5 + $0x8] sm:$0xf]
  %v200 = vld [vmem:[%s5 + $0xc] sm:$0xf]
  %v201 = vld [vmem:[%s5 + $0x10] sm:$0xf]
  %v202 = vld [vmem:[%s5 + $0x14] sm:$0xf]
  %v203 = vld [vmem:[%s5 + $0x18] sm:$0xf]
  %v204 = vld [vmem:[%s5 + $0x1c] sm:$0xf]
  %v213 = vunpack.c.l.b16 %v197
  %v214 = vunpack.c.l.b16 %v198
  %v215 = vunpack.c.l.b16 %v199
  %v216 = vunpack.c.l.b16 %v200
  %v217 = vunpack.c.l.b16 %v201
  %v218 = vunpack.c.l.b16 %v202
  %v219 = vunpack.c.l.b16 %v203
  %v220 = vunpack.c.l.b16 %v204
  %v221 = vpack.c.b16 %v214, %v213
  %v222 = vpack.c.b16 %v216, %v215
  %v223 = vpack.c.b16 %v218, %v217
  %v224 = vpack.c.b16 %v220, %v219
  %vm229 = vcmask 523264
  %v231 = vsel %vm229, %v195, 0
  %v234 = vsel %vm229, %v196, 0
  %236 = vmatprep.subr.bf16.mxu0 0
  %237 = vmatpush1.bf16.msra.mxu0 %v221
  %238 = vmatprep.subr.bf16.mxu0 0
  %239 = vmatpush1.bf16.msra.mxu0 %v222
  %240 = vmatprep.subr.bf16.mxu0 0
  %241 = vmatpush1.bf16.msra.mxu0 %v223
  %242 = vmatprep.subr.bf16.mxu0 0
  %243 = vmatpush1.bf16.msra.mxu0 %v224
  %244 = vmatprep.subr.bf16.mxu0 0
  %245 = vmatpush1.bf16.msra.mxu0 0
  %246 = vmatprep.subr.bf16.mxu0 0
  %247 = vmatpush1.bf16.msra.mxu0 0
  %248 = vmatprep.subr.bf16.mxu0 0
  %249 = vmatpush1.bf16.msra.mxu0 0
  %250 = vmatprep.subr.bf16.mxu0 0
  %251 = vmatpush1.bf16.msra.mxu0 0
  %252 = vmatprep.subr.bf16.mxu0 0
  %253 = vmatpush1.bf16.msra.mxu0 0
  %254 = vmatprep.subr.bf16.mxu0 0
  %255 = vmatpush1.bf16.msra.mxu0 0
  %256 = vmatprep.subr.bf16.mxu0 0
  %257 = vmatpush1.bf16.msra.mxu0 0
  %258 = vmatprep.subr.bf16.mxu0 0
  %259 = vmatpush1.bf16.msra.mxu0 0
  %260 = vmatprep.subr.bf16.mxu0 0
  %261 = vmatpush1.bf16.msra.mxu0 0
  %262 = vmatprep.subr.bf16.mxu0 0
  %263 = vmatpush1.bf16.msra.mxu0 0
  %264 = vmatprep.subr.bf16.mxu0 0
  %265 = vmatpush1.bf16.msra.mxu0 0
  %266 = vmatprep.subr.bf16.mxu0 0
  %267 = vmatpush1.bf16.msra.mxu0 0
  %268 = vmatprep.mubr.bf16.mxu0 0
  %269 = vmatmul.mubr.bf16.gmra.mrb[0].mxu0 %v231
  %v270 = vpop.f32.mrb[0].mxu0
  %v271 = vadd.f32 0.0, %v270
  %v272 = vpop.f32.mrb[0].mxu0
  %v273 = vpop.f32.mrb[0].mxu0
  %v274 = vadd.f32 0.0, %v273
  %v275 = vpop.f32.mrb[0].mxu0
  %276 = vmatprep.mubr.bf16.mxu0 0
  %277 = vmatmul.mubr.bf16.gmra.mrb[0].mxu0 %v234
  %v278 = vpop.f32.mrb[0].mxu0
  %v279 = vadd.f32 0.0, %v278
  %v280 = vpop.f32.mrb[0].mxu0
  %v281 = vpop.f32.mrb[0].mxu0
  %v282 = vadd.f32 0.0, %v281
  %v283 = vpop.f32.mrb[0].mxu0
  %284 = vdwg.mxu0
  %v285 = vadd.f32 %v31, %v271
  %v286 = vadd.f32 %v32, %v274
  %v287 = vadd.f32 %v33, %v279
  %v288 = vadd.f32 %v34, %v282
  %v289 = vld [vmem:[%s6] sm:$0x1]
  %v291 = vlaneseq
  %v292 = vshrl.u32 %v291, 7
  %v293 = vsub.s32 0, %v292
  %v294 = vrot.slane %v289, %v293
  %v296 = vadd.f32 %v285, %v294
  %v297 = vadd.f32 %v286, %v294
  %v298 = vadd.f32 %v287, %v294
  %v299 = vadd.f32 %v288, %v294
  %v300 = vpack.c.bf16 %v297, %v296
  %v301 = vpack.c.bf16 %v299, %v298
  %v304 = vunpack.c.l.b16 %v300
  %v305 = vunpack.c.h.b16 %v300
  %v306 = vunpack.c.l.b16 %v301
  %v307 = vunpack.c.h.b16 %v301
  %v308 = vpack.c.b16 %v304, %v304
  %v309 = vpack.c.b16 %v305, %v305
  %v310 = vpack.c.b16 %v306, %v306
  %v311 = vpack.c.b16 %v307, %v307
  %vm316 = vcmask 257024
  %317 = vst.msk [vmem:[%s7] sm:$0xf] %vm316, %v308
  %318 = vst.msk [vmem:[%s7 + $0x4] sm:$0xf] %vm316, %v309
  %319 = vst.msk [vmem:[%s7 + $0x8] sm:$0xf] %vm316, %v310
  %320 = vst.msk [vmem:[%s7 + $0xc] sm:$0xf] %vm316, %v311
  // Predicated region
  $region30: #{_lambda_.22} parent=0 // pred_check
    _
  $region31: #{_lambda_.22} parent=0 // pred_check_branch
    %322 = sbr.rel (0) target = $region33
  $region32: #{_lambda_.22} parent=0 // pred_region
    _
  $region33: #{_lambda_.22} parent=0 // pred_fallthru
    _
  // Predicated region
  $region34: #{_lambda_.22} parent=0 // pred_check
    _
  $region35: #{_lambda_.22} parent=0 // pred_check_branch
    %324 = sbr.rel (0) target = $region37
  $region36: #{_lambda_.22} parent=0 // pred_region
    _
  $region37: #{_lambda_.22} parent=0 // pred_fallthru
    _

// kernel: _lambda_.20
$region0: #{_lambda_.20}
  #allocation0 [shape = 'u32[]', space=smem, size = 0x4, offset = 0x4, fixed_abs, tag = 'smem constant byte address 0x4 - core index']
  #allocation1 [shape = 'u32[144,128]{1,0:T(1,128)}', space=vmem, size = 0x12000, scoped, tag = 'internal scratch']
  #allocation2 [shape = 'f32[4,16,128]{2,1,0:T(8,128)}', space=vmem, size = 0x8000, scoped, tag = 'scratch operand']
  #allocation3 [shape = 'f32[4,16,128]{2,1,0:T(8,128)}', space=vmem, size = 0x8000, scoped, tag = 'scratch operand']
  #allocation4 [shape = 'f32[16,32]{1,0:T(8,128)}', space=vmem, size = 0x2000, scoped, tag = 'scratch operand']
  %s0 = inlined_call_operand.vmem [shape: bf16[2,16,32], index: 0, kind: input, shape index: {}]
  %s1 = inlined_call_operand.vmem [shape: bf16[2,16,32], index: 1, kind: input, shape index: {}]
  %s2 = inlined_call_operand.vmem [shape: bf16[2,16,32], index: 2, kind: input, shape index: {}]
  %s3 = inlined_call_operand.vmem [shape: f32[2,1,16], index: 3, kind: input, shape index: {}]
  %s4 = inlined_call_operand.vmem [shape: bf16[2,16,32], index: 4, kind: output, shape index: {}]
  %s5 = sld [smem:[#allocation0]]
  $region57: #{_lambda_.20} parent=0
    _
  %s7 = ssub.s32 1, %s5
  %s8 = scalar_select 0, %s7, %s5
  loop: start=0, step=1, limit=4
  $region2: #{_lambda_.20} parent=0 // loop_pre_header
    _
  $region3: #{_lambda_.20} parent=0 // loop_header
    %s10 = sphi 0, %s14
    %p11 = scmp.ge.s32.totalorder %s10, 4
    %s17 = sphi 0, %s36
    %s18 = sphi 0, %s32
    %s19 = sphi 0, %s28
    %s20 = sphi 0, %s17
    %s21 = sphi 0, %s18
    %s22 = sphi 0, %s19
    %s23 = sphi 0, %s20
    %s24 = sphi 0, %s21
    %s25 = sphi 0, %s22
    %s41 = sphi 0, %s43
    %s44 = sphi 0, %s41
    %s45 = sphi 0, %s44
    %s61 = sphi 0, %s45
    %s69 = sphi 0, %s71
    %s72 = sphi 0, %s69
    %s73 = sphi 0, %s72
    %s89 = sphi 0, %s73
    %s97 = sphi 0, %s99
    %s100 = sphi 0, %s97
    %s101 = sphi 0, %s100
    %s117 = sphi 0, %s101
    %s125 = sphi 0, %s127
    %s128 = sphi 0, %s125
    %s129 = sphi 0, %s128
    %s145 = sphi 0, %s129
    %s153 = sphi 0, %s155
    %s156 = sphi 0, %s153
    %s157 = sphi 0, %s156
    %s173 = sphi 0, %s157
  $region4: #{_lambda_.20} parent=0 // loop_header_branch
    %13 = sbr.rel (%p11) target = $region8
  $region5: #{_lambda_.20} parent=0 // loop_body
    %s15 = ssub.s32 %s10, 1
    %s16 = ssub.s32 %s10, 2
    %s26 = sadd.s32 1, %s19
    %p27 = scmp.ge.s32.totalorder %s26, 1
    %s28 = scalar_select %p27, 0, %s26
    %s29 = sadd.s32 1, %s18
    %s30 = scalar_select %p27, %s29, %s18
    %p31 = scmp.ge.s32.totalorder %s30, 1
    %s32 = scalar_select %p31, 0, %s30
    %s33 = sadd.s32 1, %s17
    %s34 = scalar_select %p31, %s33, %s17
    %p35 = scmp.ge.s32.totalorder %s34, 2
    %s36 = scalar_select %p35, 0, %s34
    %s37 = ssub.s32 %s17, %s36
    %s38 = ssub.s32 %s18, %s32
    %s39 = sor.u32 %s37, %s38
    %p40 = scmp.eq.s32.totalorder %s39, 0
    %s42 = sadd.s32 %s41, 1
    %s43 = scalar_select %p40, %s41, %s42
    %p46 = pneg %p40
    %p47 = scmp.eq.s32.totalorder %s10, 1
    %p48 = por %p46, %p47
    %p49 = scmp.ne.s32.totalorder %s41, %s44
    %p50 = scmp.eq.s32.totalorder %s10, 0
    %p51 = por %p49, %p50
    %p52 = scmp.ne.s32.totalorder %s41, %s44
    %p53 = scmp.eq.s32.totalorder %s15, 1
    %p54 = por %p52, %p53
    %p55 = scmp.ne.s32.totalorder %s44, %s45
    %p56 = scmp.eq.s32.totalorder %s15, 0
    %p57 = por %p55, %p56
    %p58 = scmp.ne.s32.totalorder %s44, %s45
    %p59 = scmp.eq.s32.totalorder %s16, 1
    %p60 = por %p58, %p59
    %p62 = scmp.ne.s32.totalorder %s45, %s61
    %p63 = scmp.eq.s32.totalorder %s16, 0
    %p64 = por %p62, %p63
    %s65 = ssub.s32 %s17, %s36
    %s66 = ssub.s32 %s19, %s28
    %s67 = sor.u32 %s65, %s66
    %p68 = scmp.eq.s32.totalorder %s67, 0
    %s70 = sadd.s32 %s69, 1
    %s71 = scalar_select %p68, %s69, %s70
    %p74 = pneg %p68
    %p75 = scmp.eq.s32.totalorder %s10, 1
    %p76 = por %p74, %p75
    %p77 = scmp.ne.s32.totalorder %s69, %s72
    %p78 = scmp.eq.s32.totalorder %s10, 0
    %p79 = por %p77, %p78
    %p80 = scmp.ne.s32.totalorder %s69, %s72
    %p81 = scmp.eq.s32.totalorder %s15, 1
    %p82 = por %p80, %p81
    %p83 = scmp.ne.s32.totalorder %s72, %s73
    %p84 = scmp.eq.s32.totalorder %s15, 0
    %p85 = por %p83, %p84
    %p86 = scmp.ne.s32.totalorder %s72, %s73
    %p87 = scmp.eq.s32.totalorder %s16, 1
    %p88 = por %p86, %p87
    %p90 = scmp.ne.s32.totalorder %s73, %s89
    %p91 = scmp.eq.s32.totalorder %s16, 0
    %p92 = por %p90, %p91
    %s93 = ssub.s32 %s17, %s36
    %s94 = ssub.s32 %s19, %s28
    %s95 = sor.u32 %s93, %s94
    %p96 = scmp.eq.s32.totalorder %s95, 0
    %s98 = sadd.s32 %s97, 1
    %s99 = scalar_select %p96, %s97, %s98
    %p102 = pneg %p96
    %p103 = scmp.eq.s32.totalorder %s10, 1
    %p104 = por %p102, %p103
    %p105 = scmp.ne.s32.totalorder %s97, %s100
    %p106 = scmp.eq.s32.totalorder %s10, 0
    %p107 = por %p105, %p106
    %p108 = scmp.ne.s32.totalorder %s97, %s100
    %p109 = scmp.eq.s32.totalorder %s15, 1
    %p110 = por %p108, %p109
    %p111 = scmp.ne.s32.totalorder %s100, %s101
    %p112 = scmp.eq.s32.totalorder %s15, 0
    %p113 = por %p111, %p112
    %p114 = scmp.ne.s32.totalorder %s100, %s101
    %p115 = scmp.eq.s32.totalorder %s16, 1
    %p116 = por %p114, %p115
    %p118 = scmp.ne.s32.totalorder %s101, %s117
    %p119 = scmp.eq.s32.totalorder %s16, 0
    %p120 = por %p118, %p119
    %s121 = ssub.s32 %s17, %s36
    %s122 = ssub.s32 %s19, %s28
    %s123 = sor.u32 %s121, %s122
    %p124 = scmp.eq.s32.totalorder %s123, 0
    %s126 = sadd.s32 %s125, 1
    %s127 = scalar_select %p124, %s125, %s126
    %p130 = pneg %p124
    %p131 = scmp.eq.s32.totalorder %s10, 1
    %p132 = por %p130, %p131
    %p133 = scmp.ne.s32.totalorder %s125, %s128
    %p134 = scmp.eq.s32.totalorder %s10, 0
    %p135 = por %p133, %p134
    %p136 = scmp.ne.s32.totalorder %s125, %s128
    %p137 = scmp.eq.s32.totalorder %s15, 1
    %p138 = por %p136, %p137
    %p139 = scmp.ne.s32.totalorder %s128, %s129
    %p140 = scmp.eq.s32.totalorder %s15, 0
    %p141 = por %p139, %p140
    %p142 = scmp.ne.s32.totalorder %s128, %s129
    %p143 = scmp.eq.s32.totalorder %s16, 1
    %p144 = por %p142, %p143
    %p146 = scmp.ne.s32.totalorder %s129, %s145
    %p147 = scmp.eq.s32.totalorder %s16, 0
    %p148 = por %p146, %p147
    %s149 = ssub.s32 %s17, %s36
    %s150 = ssub.s32 %s18, %s32
    %s151 = sor.u32 %s149, %s150
    %p152 = scmp.eq.s32.totalorder %s151, 0
    %s154 = sadd.s32 %s153, 1
    %s155 = scalar_select %p152, %s153, %s154
    %p158 = pneg %p152
    %p159 = scmp.eq.s32.totalorder %s10, 1
    %p160 = por %p158, %p159
    %p161 = scmp.ne.s32.totalorder %s153, %s156
    %p162 = scmp.eq.s32.totalorder %s10, 0
    %p163 = por %p161, %p162
    %p164 = scmp.ne.s32.totalorder %s153, %s156
    %p165 = scmp.eq.s32.totalorder %s15, 1
    %p166 = por %p164, %p165
    %p167 = scmp.ne.s32.totalorder %s156, %s157
    %p168 = scmp.eq.s32.totalorder %s15, 0
    %p169 = por %p167, %p168
    %p170 = scmp.ne.s32.totalorder %s156, %s157
    %p171 = scmp.eq.s32.totalorder %s16, 1
    %p172 = por %p170, %p171
    %p174 = scmp.ne.s32.totalorder %s157, %s173
    %p175 = scmp.eq.s32.totalorder %s16, 0
    %p176 = por %p174, %p175
    %p177 = scmp.le.s32.totalorder 1, %s10
    %p178 = scmp.lt.s32.totalorder %s10, 3
    %p179 = pnand %p177, %p178
    %p180 = pneg %p179
    // Predicated region
    $region9: #{_lambda_.20} parent=5 // pred_check
      _
    $region10: #{_lambda_.20} parent=5 // pred_check_branch
      %182 = sbr.rel (%p179) target = $region12
    $region11: #{_lambda_.20} parent=5 // pred_region
      %s183 = ssub.s32 %s10, 1
    $region12: #{_lambda_.20} parent=5 // pred_fallthru
      _
    %p184 = scmp.lt.s32.totalorder %s10, 2
    // Predicated region
    $region13: #{_lambda_.20} parent=5 // pred_check
      %p185 = pneg %p184
    $region14: #{_lambda_.20} parent=5 // pred_check_branch
      %187 = sbr.rel (%p185) target = $region16
    $region15: #{_lambda_.20} parent=5 // pred_region
      // Predicated region
      $region17: #{_lambda_.20} parent=15 // pred_check
        %p188 = pneg %p51
      $region18: #{_lambda_.20} parent=15 // pred_check_branch
        %190 = sbr.rel (%p188) target = $region20
      $region19: #{_lambda_.20} parent=15 // pred_region
        %s191 = smul.u32 2, %s18
        %p192 = scmp.lt.s32.totalorder %s17, 1
        %s193 = scalar_select %p192, %s17, 1
        %p194 = scmp.lt.s32.totalorder %s191, 1
        %s195 = scalar_select %p194, %s191, 1
        %s196 = smul.addr %s193, 2
        %s197 = sadd.s32 %s195, %s196
        %s198 = smul.addr %s197, 4
        %s199 = scalar_lea.vmem %s0, %s198
        %s200 = smul.u32 2, %s18
      $region20: #{_lambda_.20} parent=15 // pred_fallthru
        _
      // Predicated region
      $region21: #{_lambda_.20} parent=15 // pred_check
        %p201 = pneg %p79
      $region22: #{_lambda_.20} parent=15 // pred_check_branch
        %203 = sbr.rel (%p201) target = $region24
      $region23: #{_lambda_.20} parent=15 // pred_region
        %s204 = smul.u32 2, %s19
        %p205 = scmp.lt.s32.totalorder %s17, 1
        %s206 = scalar_select %p205, %s17, 1
        %p207 = scmp.lt.s32.totalorder %s204, 1
        %s208 = scalar_select %p207, %s204, 1
        %s209 = smul.addr %s206, 2
        %s210 = sadd.s32 %s208, %s209
        %s211 = smul.addr %s210, 4
        %s212 = scalar_lea.vmem %s1, %s211
        %s213 = smul.u32 2, %s19
      $region24: #{_lambda_.20} parent=15 // pred_fallthru
        _
      // Predicated region
      $region25: #{_lambda_.20} parent=15 // pred_check
        %p214 = pneg %p107
      $region26: #{_lambda_.20} parent=15 // pred_check_branch
        %216 = sbr.rel (%p214) target = $region28
      $region27: #{_lambda_.20} parent=15 // pred_region
        %s217 = smul.u32 2, %s19
        %p218 = scmp.lt.s32.totalorder %s17, 1
        %s219 = scalar_select %p218, %s17, 1
        %p220 = scmp.lt.s32.totalorder %s217, 1
        %s221 = scalar_select %p220, %s217, 1
        %s222 = smul.addr %s219, 2
        %s223 = sadd.s32 %s221, %s222
        %s224 = smul.addr %s223, 4
        %s225 = scalar_lea.vmem %s2, %s224
        %s226 = smul.u32 2, %s19
      $region28: #{_lambda_.20} parent=15 // pred_fallthru
        _
      // Predicated region
      $region29: #{_lambda_.20} parent=15 // pred_check
        %p227 = pneg %p135
      $region30: #{_lambda_.20} parent=15 // pred_check_branch
        %229 = sbr.rel (%p227) target = $region32
      $region31: #{_lambda_.20} parent=15 // pred_region
        %p230 = scmp.lt.s32.totalorder %s17, 1
        %s231 = scalar_select %p230, %s17, 1
        %p232 = scmp.lt.s32.totalorder %s19, 0
        %s233 = scalar_select %p232, %s19, 0
        %s234 = sadd.s32 %s233, %s231
        %s235 = scalar_lea.vmem %s3, %s234
      $region32: #{_lambda_.20} parent=15 // pred_fallthru
        _
    $region16: #{_lambda_.20} parent=5 // pred_fallthru
      _
    %p236 = scmp.le.s32.totalorder 1, %s10
    %p237 = scmp.lt.s32.totalorder %s10, 3
    %p238 = pnand %p236, %p237
    %p239 = pneg %p238
    // Predicated region
    $region33: #{_lambda_.20} parent=5 // pred_check
      _
    $region34: #{_lambda_.20} parent=5 // pred_check_branch
      %241 = sbr.rel (%p238) target = $region36
    $region35: #{_lambda_.20} parent=5 // pred_region
      %s242 = ssub.s32 %s10, 1
      %s243 = smul.u32 2, %s21
      %p244 = scmp.lt.s32.totalorder %s20, 1
      %s245 = scalar_select %p244, %s20, 1
      %p246 = scmp.lt.s32.totalorder %s243, 1
      %s247 = scalar_select %p246, %s243, 1
      %s248 = smul.addr %s245, 2
      %s249 = sadd.s32 %s247, %s248
      %s250 = smul.addr %s249, 4
      %s251 = scalar_lea.vmem %s0, %s250
      %p252 = pneg %p57
      %p253 = pneg %p54
      %s254 = smul.u32 2, %s22
      %p255 = scmp.lt.s32.totalorder %s20, 1
      %s256 = scalar_select %p255, %s20, 1
      %p257 = scmp.lt.s32.totalorder %s254, 1
      %s258 = scalar_select %p257, %s254, 1
      %s259 = smul.addr %s256, 2
      %s260 = sadd.s32 %s258, %s259
      %s261 = smul.addr %s260, 4
      %s262 = scalar_lea.vmem %s1, %s261
      %p263 = pneg %p85
      %p264 = pneg %p82
      %s265 = smul.u32 2, %s22
      %p266 = scmp.lt.s32.totalorder %s20, 1
      %s267 = scalar_select %p266, %s20, 1
      %p268 = scmp.lt.s32.totalorder %s265, 1
      %s269 = scalar_select %p268, %s265, 1
      %s270 = smul.addr %s267, 2
      %s271 = sadd.s32 %s269, %s270
      %s272 = smul.addr %s271, 4
      %s273 = scalar_lea.vmem %s2, %s272
      %p274 = pneg %p113
      %p275 = pneg %p110
      %p276 = scmp.lt.s32.totalorder %s20, 1
      %s277 = scalar_select %p276, %s20, 1
      %p278 = scmp.lt.s32.totalorder %s22, 0
      %s279 = scalar_select %p278, %s22, 0
      %s280 = sadd.s32 %s279, %s277
      %s281 = scalar_lea.vmem %s3, %s280
      %p282 = pneg %p141
      %p283 = pneg %p138
      %p284 = pneg %p169
      %p285 = pneg %p166
      %s286 = smul.u32 2, %s21
      %p287 = scmp.lt.s32.totalorder %s20, 1
      %s288 = scalar_select %p287, %s20, 1
      %p289 = scmp.lt.s32.totalorder %s286, 1
      %s290 = scalar_select %p289, %s286, 1
      %s291 = smul.addr %s288, 2
      %s292 = sadd.s32 %s290, %s291
      %s293 = smul.addr %s292, 4
      %s294 = scalar_lea.vmem %s4, %s293
      %s295 = smul.u32 2, %s21
      %p296 = scmp.lt.s32.totalorder %s20, 1
      %s297 = scalar_select %p296, %s20, 1
      %p298 = scmp.lt.s32.totalorder %s295, 1
      %s299 = scalar_select %p298, %s295, 1
      %s300 = smul.addr %s297, 2
      %s301 = sadd.s32 %s299, %s300
      %s302 = smul.addr %s301, 4
      %s303 = scalar_lea.vmem %s0, %s302
      %s304 = smul.u32 2, %s21
      %s305 = smul.u32 2, %s22
      %p306 = scmp.lt.s32.totalorder %s20, 1
      %s307 = scalar_select %p306, %s20, 1
      %p308 = scmp.lt.s32.totalorder %s305, 1
      %s309 = scalar_select %p308, %s305, 1
      %s310 = smul.addr %s307, 2
      %s311 = sadd.s32 %s309, %s310
      %s312 = smul.addr %s311, 4
      %s313 = scalar_lea.vmem %s1, %s312
      %s314 = smul.u32 2, %s22
      %s315 = smul.u32 2, %s22
      %p316 = scmp.lt.s32.totalorder %s20, 1
      %s317 = scalar_select %p316, %s20, 1
      %p318 = scmp.lt.s32.totalorder %s315, 1
      %s319 = scalar_select %p318, %s315, 1
      %s320 = smul.addr %s317, 2
      %s321 = sadd.s32 %s319, %s320
      %s322 = smul.addr %s321, 4
      %s323 = scalar_lea.vmem %s2, %s322
      %s324 = smul.u32 2, %s22
      %p325 = scmp.lt.s32.totalorder %s20, 1
      %s326 = scalar_select %p325, %s20, 1
      %p327 = scmp.lt.s32.totalorder %s22, 0
      %s328 = scalar_select %p327, %s22, 0
      %s329 = sadd.s32 %s328, %s326
      %s330 = scalar_lea.vmem %s3, %s329
      %s331 = smul.u32 2, %s21
      %p332 = scmp.lt.s32.totalorder %s20, 1
      %s333 = scalar_select %p332, %s20, 1
      %p334 = scmp.lt.s32.totalorder %s331, 1
      %s335 = scalar_select %p334, %s331, 1
      %s336 = smul.addr %s333, 2
      %s337 = sadd.s32 %s335, %s336
      %s338 = smul.addr %s337, 4
      %s339 = scalar_lea.vmem %s4, %s338
      %s340 = smul.u32 2, %s21
      %p342 = scmp.eq.s32.totalorder %s22, 0
      // Predicated region
      $region37: #{_lambda_.20} parent=35 // pred_check
        %p343 = pneg %p342
      $region38: #{_lambda_.20} parent=35 // pred_check_branch
        %345 = sbr.rel (%p343) target = $region40
      $region39: #{_lambda_.20} parent=35 // pred_region
        %346 = vst [vmem:[#allocation2] sm:$0xff] -inf
        %347 = vst [vmem:[#allocation2 + $0x8] sm:$0xff] -inf
        %348 = vst [vmem:[#allocation2 + $0x10] sm:$0xff] -inf
        %349 = vst [vmem:[#allocation2 + $0x18] sm:$0xff] -inf
        %350 = vst [vmem:[#allocation2 + $0x20] sm:$0xff] -inf
        %351 = vst [vmem:[#allocation2 + $0x28] sm:$0xff] -inf
        %352 = vst [vmem:[#allocation2 + $0x30] sm:$0xff] -inf
        %353 = vst [vmem:[#allocation2 + $0x38] sm:$0xff] -inf
        %354 = vst [vmem:[#allocation3] sm:$0xff] 0.0
        %355 = vst [vmem:[#allocation3 + $0x8] sm:$0xff] 0.0
        %356 = vst [vmem:[#allocation3 + $0x10] sm:$0xff] 0.0
        %357 = vst [vmem:[#allocation3 + $0x18] sm:$0xff] 0.0
        %358 = vst [vmem:[#allocation3 + $0x20] sm:$0xff] 0.0
        %359 = vst [vmem:[#allocation3 + $0x28] sm:$0xff] 0.0
        %360 = vst [vmem:[#allocation3 + $0x30] sm:$0xff] 0.0
        %361 = vst [vmem:[#allocation3 + $0x38] sm:$0xff] 0.0
        %vm362 = vcmask 261120
        %363 = vst.msk [vmem:[#allocation4] sm:$0xff] %vm362, 0.0
        %364 = vst.msk [vmem:[#allocation4 + $0x8] sm:$0xff] %vm362, 0.0
      $region40: #{_lambda_.20} parent=35 // pred_fallthru
        _
      %v365 = vld [vmem:[%s330] sm:$0x1]
      %v366 = vld [vmem:[%s303] sm:$0xf]
      %v367 = vld [vmem:[%s303 + $0x4] sm:$0xf]
      %v368 = vld [vmem:[%s313] sm:$0xf]
      %v369 = vld [vmem:[%s313 + $0x4] sm:$0xf]
      %v370 = vld [vmem:[%s323] sm:$0xf]
      %v371 = vld [vmem:[%s323 + $0x4] sm:$0xf]
      %v373 = vlaneseq
      %v374 = vshrl.u32 %v373, 7
      %v375 = vsub.s32 0, %v374
      %v376 = vrot.slane %v365, %v375
      %v380 = vunpack.c.l.b16 %v366
      %v381 = vunpack.c.l.b16 %v367
      %v382 = vpack.c.b16 %v381, %v380
      %v385 = vunpack.c.l.b16 %v368
      %v386 = vunpack.c.l.b16 %v369
      %v387 = vpack.c.b16 %v386, %v385
      %vm388 = vcmask 64512
      %v390 = vsel %vm388, %v382, 0
      %v393 = vsel %vm388, %v387, 0
      %395 = vmatprep.subr.bf16.mxu0 0
      %396 = vmatpush1.bf16.xpose.msra.mxu0 %v393
      %397 = vmatprep.subr.bf16.mxu0 0
      %398 = vmatpush1.bf16.xpose.msra.mxu0 0
      %399 = vmatprep.subr.bf16.mxu0 0
      %400 = vmatpush1.bf16.xpose.msra.mxu0 0
      %401 = vmatprep.subr.bf16.mxu0 0
      %402 = vmatpush1.bf16.xpose.msra.mxu0 0
      %403 = vmatprep.subr.bf16.mxu0 0
      %404 = vmatpush1.bf16.xpose.msra.mxu0 0
      %405 = vmatprep.subr.bf16.mxu0 0
      %406 = vmatpush1.bf16.xpose.msra.mxu0 0
      %407 = vmatprep.subr.bf16.mxu0 0
      %408 = vmatpush1.bf16.xpose.msra.mxu0 0
      %409 = vmatprep.subr.bf16.mxu0 0
      %410 = vmatpush1.bf16.xpose.msra.mxu0 0
      %411 = vmatprep.subr.bf16.mxu0 0
      %412 = vmatpush1.bf16.xpose.msra.mxu0 0
      %413 = vmatprep.subr.bf16.mxu0 0
      %414 = vmatpush1.bf16.xpose.msra.mxu0 0
      %415 = vmatprep.subr.bf16.mxu0 0
      %416 = vmatpush1.bf16.xpose.msra.mxu0 0
      %417 = vmatprep.subr.bf16.mxu0 0
      %418 = vmatpush1.bf16.xpose.msra.mxu0 0
      %419 = vmatprep.subr.bf16.mxu0 0
      %420 = vmatpush1.bf16.xpose.msra.mxu0 0
      %421 = vmatprep.subr.bf16.mxu0 0
      %422 = vmatpush1.bf16.xpose.msra.mxu0 0
      %423 = vmatprep.subr.bf16.mxu0 0
      %424 = vmatpush1.bf16.xpose.msra.mxu0 0
      %425 = vmatprep.subr.bf16.mxu0 0
      %426 = vmatpush1.bf16.xpose.msra.mxu0 0
      %427 = vmatprep.mubr.bf16.mxu0 0
      %428 = vmatmul.mubr.bf16.gmra.mrb[0].mxu0 %v390
      %v429 = vpop.f32.mrb[0].mxu0
      %v430 = vadd.f32 %v376, %v429
      %v431 = vpop.f32.mrb[0].mxu0
      %v432 = vpop.f32.mrb[0].mxu0
      %v433 = vadd.f32 %v376, %v432
      %v434 = vpop.f32.mrb[0].mxu0
      %435 = vdwg.mxu0
      %v436 = vld [vmem:[#allocation2] sm:$0xff]
      %v437 = vld [vmem:[#allocation2 + $0x8] sm:$0xff]
      %vm438 = vcmask 130048
      %v439 = vsel %vm438, %v430, -inf
      %440 = vmax.xlane.f32.xlu0 %v439
      %v441 = vpop.xlane.xlu0 %440
      %v442 = vsel %vm438, %v433, -inf
      %443 = vmax.xlane.f32.xlu0 %v442
      %v444 = vpop.xlane.xlu0 %443
      %v445 = vmax.f32 %v436, %v441
      %v446 = vmax.f32 %v437, %v444
      %v447 = vsub.f32 %v436, %v445
      %v448 = vsub.f32 %v437, %v446
      %v449 = vmul.f32 %v447, 1.442695
      %v450 = vpow.pop %v449
      %v451 = vmul.f32 %v448, 1.442695
      %v452 = vpow.pop %v451
      %454 = vset.pattern.permute.xlu0 0
      %455 = vperm.xlu0 %454, %v445
      %v456 = vpop.permute.xlu0 %455
      %459 = vset.pattern.permute.xlu0 0
      %460 = vperm.xlu0 %459, %v446
      %v461 = vpop.permute.xlu0 %460
      %v463 = vsub.f32 %v430, %v456
      %v464 = vsub.f32 %v433, %v461
      %v465 = vmul.f32 %v463, 1.442695
      %v466 = vpow.pop %v465
      %v467 = vmul.f32 %v464, 1.442695
      %v468 = vpow.pop %v467
      %v469 = vld [vmem:[#allocation3] sm:$0xff]
      %v470 = vld [vmem:[#allocation3 + $0x8] sm:$0xff]
      %472 = vset.pattern.permute.xlu0 0
      %473 = vperm.xlu0 %472, %v450
      %v474 = vpop.permute.xlu0 %473
      %477 = vset.pattern.permute.xlu0 0
      %478 = vperm.xlu0 %477, %v452
      %v479 = vpop.permute.xlu0 %478
      %v481 = vmul.f32 %v474, %v469
      %v482 = vmul.f32 %v479, %v470
      %v483 = vsel %vm438, %v466, 0.0
      %484 = vadd.xlane.f32.xlu0 %v483
      %v485 = vpop.xlane.xlu0 %484
      %v486 = vsel %vm438, %v468, 0.0
      %487 = vadd.xlane.f32.xlu0 %v486
      %v488 = vpop.xlane.xlu0 %487
      %v489 = vadd.f32 %v481, %v485
      %v490 = vadd.f32 %v482, %v488
      %491 = vst [vmem:[#allocation3] sm:$0xff] %v489
      %492 = vst [vmem:[#allocation3 + $0x8] sm:$0xff] %v490
      %v493 = vld [vmem:[#allocation4] sm:$0xff]
      %v494 = vld [vmem:[#allocation4 + $0x8] sm:$0xff]
      %v495 = vmul.f32 %v474, %v493
      %v496 = vmul.f32 %v479, %v494
      %v497 = vpack.c.bf16 %v468, %v466
      %v500 = vunpack.c.l.b16 %v370
      %v501 = vunpack.c.l.b16 %v371
      %v502 = vpack.c.b16 %v501, %v500
      %v505 = vsel %vm438, %v497, 0
      %507 = vmatprep.subr.bf16.mxu0 0
      %508 = vmatpush1.bf16.msra.mxu0 %v502
      %509 = vmatprep.subr.bf16.mxu0 0
      %510 = vmatpush1.bf16.msra.mxu0 0
      %511 = vmatprep.subr.bf16.mxu0 0
      %512 = vmatpush1.bf16.msra.mxu0 0
      %513 = vmatprep.subr.bf16.mxu0 0
      %514 = vmatpush1.bf16.msra.mxu0 0
      %515 = vmatprep.subr.bf16.mxu0 0
      %516 = vmatpush1.bf16.msra.mxu0 0
      %517 = vmatprep.subr.bf16.mxu0 0
      %518 = vmatpush1.bf16.msra.mxu0 0
      %519 = vmatprep.subr.bf16.mxu0 0
      %520 = vmatpush1.bf16.msra.mxu0 0
      %521 = vmatprep.subr.bf16.mxu0 0
      %522 = vmatpush1.bf16.msra.mxu0 0
      %523 = vmatprep.subr.bf16.mxu0 0
      %524 = vmatpush1.bf16.msra.mxu0 0
      %525 = vmatprep.subr.bf16.mxu0 0
      %526 = vmatpush1.bf16.msra.mxu0 0
      %527 = vmatprep.subr.bf16.mxu0 0
      %528 = vmatpush1.bf16.msra.mxu0 0
      %529 = vmatprep.subr.bf16.mxu0 0
      %530 = vmatpush1.bf16.msra.mxu0 0
      %531 = vmatprep.subr.bf16.mxu0 0
      %532 = vmatpush1.bf16.msra.mxu0 0
      %533 = vmatprep.subr.bf16.mxu0 0
      %534 = vmatpush1.bf16.msra.mxu0 0
      %535 = vmatprep.subr.bf16.mxu0 0
      %536 = vmatpush1.bf16.msra.mxu0 0
      %537 = vmatprep.subr.bf16.mxu0 0
      %538 = vmatpush1.bf16.msra.mxu0 0
      %539 = vmatprep.mubr.bf16.mxu0 0
      %540 = vmatmul.mubr.bf16.gmra.mrb[0].mxu0 %v505
      %v541 = vpop.f32.mrb[0].mxu0
      %v542 = vadd.f32 0.0, %v541
      %v543 = vpop.f32.mrb[0].mxu0
      %v544 = vpop.f32.mrb[0].mxu0
      %v545 = vadd.f32 0.0, %v544
      %v546 = vpop.f32.mrb[0].mxu0
      %547 = vdwg.mxu0
      %v548 = vadd.f32 %v495, %v542
      %v549 = vadd.f32 %v496, %v545
      %550 = vst.msk [vmem:[#allocation4] sm:$0xff] %vm388, %v548
      %551 = vst.msk [vmem:[#allocation4 + $0x8] sm:$0xff] %vm388, %v549
      %552 = vst [vmem:[#allocation2] sm:$0xff] %v445
      %553 = vst [vmem:[#allocation2 + $0x8] sm:$0xff] %v446
      %v554 = vld [vmem:[%s303] sm:$0xf]
      %v555 = vld [vmem:[%s303 + $0x4] sm:$0xf]
      %v556 = vld [vmem:[%s313] sm:$0xf]
      %v557 = vld [vmem:[%s313 + $0x4] sm:$0xf]
      %v558 = vld [vmem:[%s323] sm:$0xf]
      %v559 = vld [vmem:[%s323 + $0x4] sm:$0xf]
      %v562 = vunpack.c.l.b16 %v554
      %v563 = vunpack.c.l.b16 %v555
      %v564 = vpack.c.b16 %v563, %v562
      %565 = vrot.lane.b32.xlu0 %v564, 120
      %v566 = vpop.permute.xlu0 %565
      %v569 = vunpack.c.l.b16 %v556
      %v570 = vunpack.c.l.b16 %v557
      %v571 = vpack.c.b16 %v570, %v569
      %572 = vrot.lane.b32.xlu0 %v571, 120
      %v573 = vpop.permute.xlu0 %572
      %v575 = vsel %vm388, %v566, 0
      %v578 = vsel %vm388, %v573, 0
      %580 = vmatprep.subr.bf16.mxu0 0
      %581 = vmatpush1.bf16.xpose.msra.mxu0 %v578
      %582 = vmatprep.subr.bf16.mxu0 0
      %583 = vmatpush1.bf16.xpose.msra.mxu0 0
      %584 = vmatprep.subr.bf16.mxu0 0
      %585 = vmatpush1.bf16.xpose.msra.mxu0 0
      %586 = vmatprep.subr.bf16.mxu0 0
      %587 = vmatpush1.bf16.xpose.msra.mxu0 0
      %588 = vmatprep.subr.bf16.mxu0 0
      %589 = vmatpush1.bf16.xpose.msra.mxu0 0
      %590 = vmatprep.subr.bf16.mxu0 0
      %591 = vmatpush1.bf16.xpose.msra.mxu0 0
      %592 = vmatprep.subr.bf16.mxu0 0
      %593 = vmatpush1.bf16.xpose.msra.mxu0 0
      %594 = vmatprep.subr.bf16.mxu0 0
      %595 = vmatpush1.bf16.xpose.msra.mxu0 0
      %596 = vmatprep.subr.bf16.mxu0 0
      %597 = vmatpush1.bf16.xpose.msra.mxu0 0
      %598 = vmatprep.subr.bf16.mxu0 0
      %599 = vmatpush1.bf16.xpose.msra.mxu0 0
      %600 = vmatprep.subr.bf16.mxu0 0
      %601 = vmatpush1.bf16.xpose.msra.mxu0 0
      %602 = vmatprep.subr.bf16.mxu0 0
      %603 = vmatpush1.bf16.xpose.msra.mxu0 0
      %604 = vmatprep.subr.bf16.mxu0 0
      %605 = vmatpush1.bf16.xpose.msra.mxu0 0
      %606 = vmatprep.subr.bf16.mxu0 0
      %607 = vmatpush1.bf16.xpose.msra.mxu0 0
      %608 = vmatprep.subr.bf16.mxu0 0
      %609 = vmatpush1.bf16.xpose.msra.mxu0 0
      %610 = vmatprep.subr.bf16.mxu0 0
      %611 = vmatpush1.bf16.xpose.msra.mxu0 0
      %612 = vmatprep.mubr.bf16.mxu0 0
      %613 = vmatmul.mubr.bf16.gmra.mrb[0].mxu0 %v575
      %v614 = vpop.f32.mrb[0].mxu0
      %v615 = vadd.f32 %v376, %v614
      %v616 = vpop.f32.mrb[0].mxu0
      %v617 = vpop.f32.mrb[0].mxu0
      %v618 = vadd.f32 %v376, %v617
      %v619 = vpop.f32.mrb[0].mxu0
      %620 = vdwg.mxu0
      %s621 = scalar_lea.vmem [#allocation2], 16
      %v622 = vld [vmem:[%s621] sm:$0xff]
      %v623 = vld [vmem:[%s621 + $0x8] sm:$0xff]
      %v624 = vsel %vm438, %v615, -inf
      %625 = vmax.xlane.f32.xlu0 %v624
      %v626 = vpop.xlane.xlu0 %625
      %v627 = vsel %vm438, %v618, -inf
      %628 = vmax.xlane.f32.xlu0 %v627
      %v629 = vpop.xlane.xlu0 %628
      %v630 = vmax.f32 %v622, %v626
      %v631 = vmax.f32 %v623, %v629
      %v632 = vsub.f32 %v622, %v630
      %v633 = vsub.f32 %v623, %v631
      %v634 = vmul.f32 %v632, 1.442695
      %v635 = vpow.pop %v634
      %v636 = vmul.f32 %v633, 1.442695
      %v637 = vpow.pop %v636
      %639 = vset.pattern.permute.xlu0 0
      %640 = vperm.xlu0 %639, %v630
      %v641 = vpop.permute.xlu0 %640
      %644 = vset.pattern.permute.xlu0 0
      %645 = vperm.xlu0 %644, %v631
      %v646 = vpop.permute.xlu0 %645
      %v648 = vsub.f32 %v615, %v641
      %v649 = vsub.f32 %v618, %v646
      %v650 = vmul.f32 %v648, 1.442695
      %v651 = vpow.pop %v650
      %v652 = vmul.f32 %v649, 1.442695
      %v653 = vpow.pop %v652
      %s654 = scalar_lea.vmem [#allocation3], 16
      %v655 = vld [vmem:[%s654] sm:$0xff]
      %v656 = vld [vmem:[%s654 + $0x8] sm:$0xff]
      %658 = vset.pattern.permute.xlu0 0
      %659 = vperm.xlu0 %658, %v635
      %v660 = vpop.permute.xlu0 %659
      %663 = vset.pattern.permute.xlu0 0
      %664 = vperm.xlu0 %663, %v637
      %v665 = vpop.permute.xlu0 %664
      %v667 = vmul.f32 %v660, %v655
      %v668 = vmul.f32 %v665, %v656
      %v669 = vsel %vm438, %v651, 0.0
      %670 = vadd.xlane.f32.xlu0 %v669
      %v671 = vpop.xlane.xlu0 %670
      %v672 = vsel %vm438, %v653, 0.0
      %673 = vadd.xlane.f32.xlu0 %v672
      %v674 = vpop.xlane.xlu0 %673
      %v675 = vadd.f32 %v667, %v671
      %v676 = vadd.f32 %v668, %v674
      %677 = vst [vmem:[%s654] sm:$0xff] %v675
      %678 = vst [vmem:[%s654 + $0x8] sm:$0xff] %v676
      %v679 = vld [vmem:[#allocation4] sm:$0xff]
      %v680 = vld [vmem:[#allocation4 + $0x8] sm:$0xff]
      %v681 = vmul.f32 %v660, %v679
      %v682 = vmul.f32 %v665, %v680
      %v683 = vpack.c.bf16 %v653, %v651
      %v686 = vunpack.c.l.b16 %v558
      %v687 = vunpack.c.l.b16 %v559
      %v688 = vpack.c.b16 %v687, %v686
      %689 = vrot.lane.b32.xlu0 %v688, 120
      %v690 = vpop.permute.xlu0 %689
      %v693 = vsel %vm438, %v683, 0
      %695 = vmatprep.subr.bf16.mxu0 0
      %696 = vmatpush1.bf16.msra.mxu0 %v690
      %697 = vmatprep.subr.bf16.mxu0 0
      %698 = vmatpush1.bf16.msra.mxu0 0
      %699 = vmatprep.subr.bf16.mxu0 0
      %700 = vmatpush1.bf16.msra.mxu0 0
      %701 = vmatprep.subr.bf16.mxu0 0
      %702 = vmatpush1.bf16.msra.mxu0 0
      %703 = vmatprep.subr.bf16.mxu0 0
      %704 = vmatpush1.bf16.msra.mxu0 0
      %705 = vmatprep.subr.bf16.mxu0 0
      %706 = vmatpush1.bf16.msra.mxu0 0
      %707 = vmatprep.subr.bf16.mxu0 0
      %708 = vmatpush1.bf16.msra.mxu0 0
      %709 = vmatprep.subr.bf16.mxu0 0
      %710 = vmatpush1.bf16.msra.mxu0 0
      %711 = vmatprep.subr.bf16.mxu0 0
      %712 = vmatpush1.bf16.msra.mxu0 0
      %713 = vmatprep.subr.bf16.mxu0 0
      %714 = vmatpush1.bf16.msra.mxu0 0
      %715 = vmatprep.subr.bf16.mxu0 0
      %716 = vmatpush1.bf16.msra.mxu0 0
      %717 = vmatprep.subr.bf16.mxu0 0
      %718 = vmatpush1.bf16.msra.mxu0 0
      %719 = vmatprep.subr.bf16.mxu0 0
      %720 = vmatpush1.bf16.msra.mxu0 0
      %721 = vmatprep.subr.bf16.mxu0 0
      %722 = vmatpush1.bf16.msra.mxu0 0
      %723 = vmatprep.subr.bf16.mxu0 0
      %724 = vmatpush1.bf16.msra.mxu0 0
      %725 = vmatprep.subr.bf16.mxu0 0
      %726 = vmatpush1.bf16.msra.mxu0 0
      %727 = vmatprep.mubr.bf16.mxu0 0
      %728 = vmatmul.mubr.bf16.gmra.mrb[0].mxu0 %v693
      %v729 = vpop.f32.mrb[0].mxu0
      %v730 = vadd.f32 0.0, %v729
      %v731 = vpop.f32.mrb[0].mxu0
      %v732 = vpop.f32.mrb[0].mxu0
      %v733 = vadd.f32 0.0, %v732
      %v734 = vpop.f32.mrb[0].mxu0
      %735 = vdwg.mxu0
      %738 = vrot.lane.b32.xlu0 %v730, 8
      %v739 = vpop.permute.xlu0 %738
      %740 = vrot.lane.b32.xlu0 %v733, 8
      %v741 = vpop.permute.xlu0 %740
      %v744 = vadd.f32 %v681, %v739
      %v745 = vadd.f32 %v682, %v741
      %vm746 = vcmask 130112
      %747 = vst.msk [vmem:[#allocation4] sm:$0xff] %vm746, %v744
      %748 = vst.msk [vmem:[#allocation4 + $0x8] sm:$0xff] %vm746, %v745
      %749 = vst [vmem:[%s621] sm:$0xff] %v630
      %750 = vst [vmem:[%s621 + $0x8] sm:$0xff] %v631
      %v751 = vld [vmem:[%s303] sm:$0xf]
      %v752 = vld [vmem:[%s303 + $0x4] sm:$0xf]
      %v753 = vld [vmem:[%s313] sm:$0xf]
      %v754 = vld [vmem:[%s313 + $0x4] sm:$0xf]
      %v755 = vld [vmem:[%s323] sm:$0xf]
      %v756 = vld [vmem:[%s323 + $0x4] sm:$0xf]
      %v759 = vunpack.c.l.b16 %v751
      %v760 = vunpack.c.l.b16 %v752
      %v761 = vpack.c.b16 %v760, %v759
      %762 = vrot.lane.b32.xlu0 %v761, 112
      %v763 = vpop.permute.xlu0 %762
      %v766 = vunpack.c.l.b16 %v753
      %v767 = vunpack.c.l.b16 %v754
      %v768 = vpack.c.b16 %v767, %v766
      %769 = vrot.lane.b32.xlu0 %v768, 112
      %v770 = vpop.permute.xlu0 %769
      %v772 = vsel %vm388, %v763, 0
      %v775 = vsel %vm388, %v770, 0
      %777 = vmatprep.subr.bf16.mxu0 0
      %778 = vmatpush1.bf16.xpose.msra.mxu0 %v775
      %779 = vmatprep.subr.bf16.mxu0 0
      %780 = vmatpush1.bf16.xpose.msra.mxu0 0
      %781 = vmatprep.subr.bf16.mxu0 0
      %782 = vmatpush1.bf16.xpose.msra.mxu0 0
      %783 = vmatprep.subr.bf16.mxu0 0
      %784 = vmatpush1.bf16.xpose.msra.mxu0 0
      %785 = vmatprep.subr.bf16.mxu0 0
      %786 = vmatpush1.bf16.xpose.msra.mxu0 0
      %787 = vmatprep.subr.bf16.mxu0 0
      %788 = vmatpush1.bf16.xpose.msra.mxu0 0
      %789 = vmatprep.subr.bf16.mxu0 0
      %790 = vmatpush1.bf16.xpose.msra.mxu0 0
      %791 = vmatprep.subr.bf16.mxu0 0
      %792 = vmatpush1.bf16.xpose.msra.mxu0 0
      %793 = vmatprep.subr.bf16.mxu0 0
      %794 = vmatpush1.bf16.xpose.msra.mxu0 0
      %795 = vmatprep.subr.bf16.mxu0 0
      %796 = vmatpush1.bf16.xpose.msra.mxu0 0
      %797 = vmatprep.subr.bf16.mxu0 0
      %798 = vmatpush1.bf16.xpose.msra.mxu0 0
      %799 = vmatprep.subr.bf16.mxu0 0
      %800 = vmatpush1.bf16.xpose.msra.mxu0 0
      %801 = vmatprep.subr.bf16.mxu0 0
      %802 = vmatpush1.bf16.xpose.msra.mxu0 0
      %803 = vmatprep.subr.bf16.mxu0 0
      %804 = vmatpush1.bf16.xpose.msra.mxu0 0
      %805 = vmatprep.subr.bf16.mxu0 0
      %806 = vmatpush1.bf16.xpose.msra.mxu0 0
      %807 = vmatprep.subr.bf16.mxu0 0
      %808 = vmatpush1.bf16.xpose.msra.mxu0 0
      %809 = vmatprep.mubr.bf16.mxu0 0
      %810 = vmatmul.mubr.bf16.gmra.mrb[0].mxu0 %v772
      %v811 = vpop.f32.mrb[0].mxu0
      %v812 = vadd.f32 %v376, %v811
      %v813 = vpop.f32.mrb[0].mxu0
      %v814 = vpop.f32.mrb[0].mxu0
      %v815 = vadd.f32 %v376, %v814
      %v816 = vpop.f32.mrb[0].mxu0
      %817 = vdwg.mxu0
      %s818 = scalar_lea.vmem [#allocation2], 32
      %v819 = vld [vmem:[%s818] sm:$0xff]
      %v820 = vld [vmem:[%s818 + $0x8] sm:$0xff]
      %v821 = vsel %vm438, %v812, -inf
      %822 = vmax.xlane.f32.xlu0 %v821
      %v823 = vpop.xlane.xlu0 %822
      %v824 = vsel %vm438, %v815, -inf
      %825 = vmax.xlane.f32.xlu0 %v824
      %v826 = vpop.xlane.xlu0 %825
      %v827 = vmax.f32 %v819, %v823
      %v828 = vmax.f32 %v820, %v826
      %v829 = vsub.f32 %v819, %v827
      %v830 = vsub.f32 %v820, %v828
      %v831 = vmul.f32 %v829, 1.442695
      %v832 = vpow.pop %v831
      %v833 = vmul.f32 %v830, 1.442695
      %v834 = vpow.pop %v833
      %836 = vset.pattern.permute.xlu0 0
      %837 = vperm.xlu0 %836, %v827
      %v838 = vpop.permute.xlu0 %837
      %841 = vset.pattern.permute.xlu0 0
      %842 = vperm.xlu0 %841, %v828
      %v843 = vpop.permute.xlu0 %842
      %v845 = vsub.f32 %v812, %v838
      %v846 = vsub.f32 %v815, %v843
      %v847 = vmul.f32 %v845, 1.442695
      %v848 = vpow.pop %v847
      %v849 = vmul.f32 %v846, 1.442695
      %v850 = vpow.pop %v849
      %s851 = scalar_lea.vmem [#allocation3], 32
      %v852 = vld [vmem:[%s851] sm:$0xff]
      %v853 = vld [vmem:[%s851 + $0x8] sm:$0xff]
      %855 = vset.pattern.permute.xlu0 0
      %856 = vperm.xlu0 %855, %v832
      %v857 = vpop.permute.xlu0 %856
      %860 = vset.pattern.permute.xlu0 0
      %861 = vperm.xlu0 %860, %v834
      %v862 = vpop.permute.xlu0 %861
      %v864 = vmul.f32 %v857, %v852
      %v865 = vmul.f32 %v862, %v853
      %v866 = vsel %vm438, %v848, 0.0
      %867 = vadd.xlane.f32.xlu0 %v866
      %v868 = vpop.xlane.xlu0 %867
      %v869 = vsel %vm438, %v850, 0.0
      %870 = vadd.xlane.f32.xlu0 %v869
      %v871 = vpop.xlane.xlu0 %870
      %v872 = vadd.f32 %v864, %v868
      %v873 = vadd.f32 %v865, %v871
      %874 = vst [vmem:[%s851] sm:$0xff] %v872
      %875 = vst [vmem:[%s851 + $0x8] sm:$0xff] %v873
      %v876 = vld [vmem:[#allocation4] sm:$0xff]
      %v877 = vld [vmem:[#allocation4 + $0x8] sm:$0xff]
      %v878 = vmul.f32 %v857, %v876
      %v879 = vmul.f32 %v862, %v877
      %v880 = vpack.c.bf16 %v850, %v848
      %v883 = vunpack.c.l.b16 %v755
      %v884 = vunpack.c.l.b16 %v756
      %v885 = vpack.c.b16 %v884, %v883
      %886 = vrot.lane.b32.xlu0 %v885, 112
      %v887 = vpop.permute.xlu0 %886
      %v890 = vsel %vm438, %v880, 0
      %892 = vmatprep.subr.bf16.mxu0 0
      %893 = vmatpush1.bf16.msra.mxu0 %v887
      %894 = vmatprep.subr.bf16.mxu0 0
      %895 = vmatpush1.bf16.msra.mxu0 0
      %896 = vmatprep.subr.bf16.mxu0 0
      %897 = vmatpush1.bf16.msra.mxu0 0
      %898 = vmatprep.subr.bf16.mxu0 0
      %899 = vmatpush1.bf16.msra.mxu0 0
      %900 = vmatprep.subr.bf16.mxu0 0
      %901 = vmatpush1.bf16.msra.mxu0 0
      %902 = vmatprep.subr.bf16.mxu0 0
      %903 = vmatpush1.bf16.msra.mxu0 0
      %904 = vmatprep.subr.bf16.mxu0 0
      %905 = vmatpush1.bf16.msra.mxu0 0
      %906 = vmatprep.subr.bf16.mxu0 0
      %907 = vmatpush1.bf16.msra.mxu0 0
      %908 = vmatprep.subr.bf16.mxu0 0
      %909 = vmatpush1.bf16.msra.mxu0 0
      %910 = vmatprep.subr.bf16.mxu0 0
      %911 = vmatpush1.bf16.msra.mxu0 0
      %912 = vmatprep.subr.bf16.mxu0 0
      %913 = vmatpush1.bf16.msra.mxu0 0
      %914 = vmatprep.subr.bf16.mxu0 0
      %915 = vmatpush1.bf16.msra.mxu0 0
      %916 = vmatprep.subr.bf16.mxu0 0
      %917 = vmatpush1.bf16.msra.mxu0 0
      %918 = vmatprep.subr.bf16.mxu0 0
      %919 = vmatpush1.bf16.msra.mxu0 0
      %920 = vmatprep.subr.bf16.mxu0 0
      %921 = vmatpush1.bf16.msra.mxu0 0
      %922 = vmatprep.subr.bf16.mxu0 0
      %923 = vmatpush1.bf16.msra.mxu0 0
      %924 = vmatprep.mubr.bf16.mxu0 0
      %925 = vmatmul.mubr.bf16.gmra.mrb[0].mxu0 %v890
      %v926 = vpop.f32.mrb[0].mxu0
      %v927 = vadd.f32 0.0, %v926
      %v928 = vpop.f32.mrb[0].mxu0
      %v929 = vpop.f32.mrb[0].mxu0
      %v930 = vadd.f32 0.0, %v929
      %v931 = vpop.f32.mrb[0].mxu0
      %932 = vdwg.mxu0
      %935 = vrot.lane.b32.xlu0 %v927, 16
      %v936 = vpop.permute.xlu0 %935
      %937 = vrot.lane.b32.xlu0 %v930, 16
      %v938 = vpop.permute.xlu0 %937
      %v941 = vadd.f32 %v878, %v936
      %v942 = vadd.f32 %v879, %v938
      %vm943 = vcmask 195712
      %944 = vst.msk [vmem:[#allocation4] sm:$0xff] %vm943, %v941
      %945 = vst.msk [vmem:[#allocation4 + $0x8] sm:$0xff] %vm943, %v942
      %946 = vst [vmem:[%s818] sm:$0xff] %v827
      %947 = vst [vmem:[%s818 + $0x8] sm:$0xff] %v828
      %v948 = vld [vmem:[%s303] sm:$0xf]
      %v949 = vld [vmem:[%s303 + $0x4] sm:$0xf]
      %v950 = vld [vmem:[%s313] sm:$0xf]
      %v951 = vld [vmem:[%s313 + $0x4] sm:$0xf]
      %v952 = vld [vmem:[%s323] sm:$0xf]
      %v953 = vld [vmem:[%s323 + $0x4] sm:$0xf]
      %v956 = vunpack.c.l.b16 %v948
      %v957 = vunpack.c.l.b16 %v949
      %v958 = vpack.c.b16 %v957, %v956
      %959 = vrot.lane.b32.xlu0 %v958, 104
      %v960 = vpop.permute.xlu0 %959
      %v963 = vunpack.c.l.b16 %v950
      %v964 = vunpack.c.l.b16 %v951
      %v965 = vpack.c.b16 %v964, %v963
      %966 = vrot.lane.b32.xlu0 %v965, 104
      %v967 = vpop.permute.xlu0 %966
      %v969 = vsel %vm388, %v960, 0
      %v972 = vsel %vm388, %v967, 0
      %974 = vmatprep.subr.bf16.mxu0 0
      %975 = vmatpush1.bf16.xpose.msra.mxu0 %v972
      %976 = vmatprep.subr.bf16.mxu0 0
      %977 = vmatpush1.bf16.xpose.msra.mxu0 0
      %978 = vmatprep.subr.bf16.mxu0 0
      %979 = vmatpush1.bf16.xpose.msra.mxu0 0
      %980 = vmatprep.subr.bf16.mxu0 0
      %981 = vmatpush1.bf16.xpose.msra.mxu0 0
      %982 = vmatprep.subr.bf16.mxu0 0
      %983 = vmatpush1.bf16.xpose.msra.mxu0 0
      %984 = vmatprep.subr.bf16.mxu0 0
      %985 = vmatpush1.bf16.xpose.msra.mxu0 0
      %986 = vmatprep.subr.bf16.mxu0 0
      %987 = vmatpush1.bf16.xpose.msra.mxu0 0
      %988 = vmatprep.subr.bf16.mxu0 0
      %989 = vmatpush1.bf16.xpose.msra.mxu0 0
      %990 = vmatprep.subr.bf16.mxu0 0
      %991 = vmatpush1.bf16.xpose.msra.mxu0 0
      %992 = vmatprep.subr.bf16.mxu0 0
      %993 = vmatpush1.bf16.xpose.msra.mxu0 0
      %994 = vmatprep.subr.bf16.mxu0 0
      %995 = vmatpush1.bf16.xpose.msra.mxu0 0
      %996 = vmatprep.subr.bf16.mxu0 0
      %997 = vmatpush1.bf16.xpose.msra.mxu0 0
      %998 = vmatprep.subr.bf16.mxu0 0
      %999 = vmatpush1.bf16.xpose.msra.mxu0 0
      %1000 = vmatprep.subr.bf16.mxu0 0
      %1001 = vmatpush1.bf16.xpose.msra.mxu0 0
      %1002 = vmatprep.subr.bf16.mxu0 0
      %1003 = vmatpush1.bf16.xpose.msra.mxu0 0
      %1004 = vmatprep.subr.bf16.mxu0 0
      %1005 = vmatpush1.bf16.xpose.msra.mxu0 0
      %1006 = vmatprep.mubr.bf16.mxu0 0
      %1007 = vmatmul.mubr.bf16.gmra.mrb[0].mxu0 %v969
      %v1008 = vpop.f32.mrb[0].mxu0
      %v1009 = vadd.f32 %v376, %v1008
      %v1010 = vpop.f32.mrb[0].mxu0
      %v1011 = vpop.f32.mrb[0].mxu0
      %v1012 = vadd.f32 %v376, %v1011
      %v1013 = vpop.f32.mrb[0].mxu0
      %1014 = vdwg.mxu0
      %s1015 = scalar_lea.vmem [#allocation2], 48
      %v1016 = vld [vmem:[%s1015] sm:$0xff]
      %v1017 = vld [vmem:[%s1015 + $0x8] sm:$0xff]
      %v1018 = vsel %vm438, %v1009, -inf
      %1019 = vmax.xlane.f32.xlu0 %v1018
      %v1020 = vpop.xlane.xlu0 %1019
      %v1021 = vsel %vm438, %v1012, -inf
      %1022 = vmax.xlane.f32.xlu0 %v1021
      %v1023 = vpop.xlane.xlu0 %1022
      %v1024 = vmax.f32 %v1016, %v1020
      %v1025 = vmax.f32 %v1017, %v1023
      %v1026 = vsub.f32 %v1016, %v1024
      %v1027 = vsub.f32 %v1017, %v1025
      %v1028 = vmul.f32 %v1026, 1.442695
      %v1029 = vpow.pop %v1028
      %v1030 = vmul.f32 %v1027, 1.442695
      %v1031 = vpow.pop %v1030
      %1033 = vset.pattern.permute.xlu0 0
      %1034 = vperm.xlu0 %1033, %v1024
      %v1035 = vpop.permute.xlu0 %1034
      %1038 = vset.pattern.permute.xlu0 0
      %1039 = vperm.xlu0 %1038, %v1025
      %v1040 = vpop.permute.xlu0 %1039
      %v1042 = vsub.f32 %v1009, %v1035
      %v1043 = vsub.f32 %v1012, %v1040
      %v1044 = vmul.f32 %v1042, 1.442695
      %v1045 = vpow.pop %v1044
      %v1046 = vmul.f32 %v1043, 1.442695
      %v1047 = vpow.pop %v1046
      %s1048 = scalar_lea.vmem [#allocation3], 48
      %v1049 = vld [vmem:[%s1048] sm:$0xff]
      %v1050 = vld [vmem:[%s1048 + $0x8] sm:$0xff]
      %1052 = vset.pattern.permute.xlu0 0
      %1053 = vperm.xlu0 %1052, %v1029
      %v1054 = vpop.permute.xlu0 %1053
      %1057 = vset.pattern.permute.xlu0 0
      %1058 = vperm.xlu0 %1057, %v1031
      %v1059 = vpop.permute.xlu0 %1058
      %v1061 = vmul.f32 %v1054, %v1049
      %v1062 = vmul.f32 %v1059, %v1050
      %v1063 = vsel %vm438, %v1045, 0.0
      %1064 = vadd.xlane.f32.xlu0 %v1063
      %v1065 = vpop.xlane.xlu0 %1064
      %v1066 = vsel %vm438, %v1047, 0.0
      %1067 = vadd.xlane.f32.xlu0 %v1066
      %v1068 = vpop.xlane.xlu0 %1067
      %v1069 = vadd.f32 %v1061, %v1065
      %v1070 = vadd.f32 %v1062, %v1068
      %1071 = vst [vmem:[%s1048] sm:$0xff] %v1069
      %1072 = vst [vmem:[%s1048 + $0x8] sm:$0xff] %v1070
      %v1073 = vld [vmem:[#allocation4] sm:$0xff]
      %v1074 = vld [vmem:[#allocation4 + $0x8] sm:$0xff]
      %v1075 = vmul.f32 %v1054, %v1073
      %v1076 = vmul.f32 %v1059, %v1074
      %v1077 = vpack.c.bf16 %v1047, %v1045
      %v1080 = vunpack.c.l.b16 %v952
      %v1081 = vunpack.c.l.b16 %v953
      %v1082 = vpack.c.b16 %v1081, %v1080
      %1083 = vrot.lane.b32.xlu0 %v1082, 104
      %v1084 = vpop.permute.xlu0 %1083
      %v1087 = vsel %vm438, %v1077, 0
      %1089 = vmatprep.subr.bf16.mxu0 0
      %1090 = vmatpush1.bf16.msra.mxu0 %v1084
      %1091 = vmatprep.subr.bf16.mxu0 0
      %1092 = vmatpush1.bf16.msra.mxu0 0
      %1093 = vmatprep.subr.bf16.mxu0 0
      %1094 = vmatpush1.bf16.msra.mxu0 0
      %1095 = vmatprep.subr.bf16.mxu0 0
      %1096 = vmatpush1.bf16.msra.mxu0 0
      %1097 = vmatprep.subr.bf16.mxu0 0
      %1098 = vmatpush1.bf16.msra.mxu0 0
      %1099 = vmatprep.subr.bf16.mxu0 0
      %1100 = vmatpush1.bf16.msra.mxu0 0
      %1101 = vmatprep.subr.bf16.mxu0 0
      %1102 = vmatpush1.bf16.msra.mxu0 0
      %1103 = vmatprep.subr.bf16.mxu0 0
      %1104 = vmatpush1.bf16.msra.mxu0 0
      %1105 = vmatprep.subr.bf16.mxu0 0
      %1106 = vmatpush1.bf16.msra.mxu0 0
      %1107 = vmatprep.subr.bf16.mxu0 0
      %1108 = vmatpush1.bf16.msra.mxu0 0
      %1109 = vmatprep.subr.bf16.mxu0 0
      %1110 = vmatpush1.bf16.msra.mxu0 0
      %1111 = vmatprep.subr.bf16.mxu0 0
      %1112 = vmatpush1.bf16.msra.mxu0 0
      %1113 = vmatprep.subr.bf16.mxu0 0
      %1114 = vmatpush1.bf16.msra.mxu0 0
      %1115 = vmatprep.subr.bf16.mxu0 0
      %1116 = vmatpush1.bf16.msra.mxu0 0
      %1117 = vmatprep.subr.bf16.mxu0 0
      %1118 = vmatpush1.bf16.msra.mxu0 0
      %1119 = vmatprep.subr.bf16.mxu0 0
      %1120 = vmatpush1.bf16.msra.mxu0 0
      %1121 = vmatprep.mubr.bf16.mxu0 0
      %1122 = vmatmul.mubr.bf16.gmra.mrb[0].mxu0 %v1087
      %v1123 = vpop.f32.mrb[0].mxu0
      %v1124 = vadd.f32 0.0, %v1123
      %v1125 = vpop.f32.mrb[0].mxu0
      %v1126 = vpop.f32.mrb[0].mxu0
      %v1127 = vadd.f32 0.0, %v1126
      %v1128 = vpop.f32.mrb[0].mxu0
      %1129 = vdwg.mxu0
      %1132 = vrot.lane.b32.xlu0 %v1124, 24
      %v1133 = vpop.permute.xlu0 %1132
      %1134 = vrot.lane.b32.xlu0 %v1127, 24
      %v1135 = vpop.permute.xlu0 %1134
      %v1138 = vadd.f32 %v1075, %v1133
      %v1139 = vadd.f32 %v1076, %v1135
      %vm1140 = vcmask 261312
      %1141 = vst.msk [vmem:[#allocation4] sm:$0xff] %vm1140, %v1138
      %1142 = vst.msk [vmem:[#allocation4 + $0x8] sm:$0xff] %vm1140, %v1139
      %1143 = vst [vmem:[%s1015] sm:$0xff] %v1024
      %1144 = vst [vmem:[%s1015 + $0x8] sm:$0xff] %v1025
      // Predicated region
      $region41: #{_lambda_.20} parent=35 // pred_check
        %p1145 = pneg %p342
      $region42: #{_lambda_.20} parent=35 // pred_check_branch
        %1147 = sbr.rel (%p1145) target = $region44
      $region43: #{_lambda_.20} parent=35 // pred_region
        %v1148 = vld [vmem:[#allocation3] sm:$0xff]
        %v1149 = vld [vmem:[#allocation3 + $0x8] sm:$0xff]
        %v1150 = vrcp.pop %v1148
        %v1151 = vrcp.pop %v1149
        %v1152 = vld [vmem:[#allocation4] sm:$0xff]
        %v1153 = vld [vmem:[#allocation4 + $0x8] sm:$0xff]
        %1155 = vset.pattern.permute.xlu0 0
        %1156 = vperm.xlu0 %1155, %v1150
        %v1157 = vpop.permute.xlu0 %1156
        %1160 = vset.pattern.permute.xlu0 0
        %1161 = vperm.xlu0 %1160, %v1151
        %v1162 = vpop.permute.xlu0 %1161
        %v1164 = vmul.f32 %v1152, %v1157
        %v1165 = vmul.f32 %v1153, %v1162
        %v1166 = vpack.c.bf16 %v1165, %v1164
        %v1168 = vunpack.c.l.b16 %v1166
        %v1169 = vunpack.c.h.b16 %v1166
        %v1170 = vpack.c.b16 %v1168, %v1168
        %v1171 = vpack.c.b16 %v1169, %v1169
        %vm1174 = vcmask 60416
        %1175 = vst.msk [vmem:[%s339] sm:$0xf] %vm1174, %v1170
        %1176 = vst.msk [vmem:[%s339 + $0x4] sm:$0xf] %vm1174, %v1171
        %v1177 = vld [vmem:[%s654] sm:$0xff]
        %v1178 = vld [vmem:[%s654 + $0x8] sm:$0xff]
        %v1179 = vrcp.pop %v1177
        %v1180 = vrcp.pop %v1178
        %v1181 = vld [vmem:[#allocation4] sm:$0xff]
        %v1182 = vld [vmem:[#allocation4 + $0x8] sm:$0xff]
        %1184 = vset.pattern.permute.xlu0 0
        %1185 = vperm.xlu0 %1184, %v1179
        %v1186 = vpop.permute.xlu0 %1185
        %1189 = vset.pattern.permute.xlu0 0
        %1190 = vperm.xlu0 %1189, %v1180
        %v1191 = vpop.permute.xlu0 %1190
        %v1193 = vmul.f32 %v1181, %v1186
        %v1194 = vmul.f32 %v1182, %v1191
        %v1195 = vpack.c.bf16 %v1194, %v1193
        %v1197 = vunpack.c.l.b16 %v1195
        %v1198 = vunpack.c.h.b16 %v1195
        %v1199 = vpack.c.b16 %v1197, %v1197
        %v1200 = vpack.c.b16 %v1198, %v1198
        %vm1203 = vcmask 126016
        %1204 = vst.msk [vmem:[%s339] sm:$0xf] %vm1203, %v1199
        %1205 = vst.msk [vmem:[%s339 + $0x4] sm:$0xf] %vm1203, %v1200
        %v1206 = vld [vmem:[%s851] sm:$0xff]
        %v1207 = vld [vmem:[%s851 + $0x8] sm:$0xff]
        %v1208 = vrcp.pop %v1206
        %v1209 = vrcp.pop %v1207
        %v1210 = vld [vmem:[#allocation4] sm:$0xff]
        %v1211 = vld [vmem:[#allocation4 + $0x8] sm:$0xff]
        %1213 = vset.pattern.permute.xlu0 0
        %1214 = vperm.xlu0 %1213, %v1208
        %v1215 = vpop.permute.xlu0 %1214
        %1218 = vset.pattern.permute.xlu0 0
        %1219 = vperm.xlu0 %1218, %v1209
        %v1220 = vpop.permute.xlu0 %1219
        %v1222 = vmul.f32 %v1210, %v1215
        %v1223 = vmul.f32 %v1211, %v1220
        %v1224 = vpack.c.bf16 %v1223, %v1222
        %v1226 = vunpack.c.l.b16 %v1224
        %v1227 = vunpack.c.h.b16 %v1224
        %v1228 = vpack.c.b16 %v1226, %v1226
        %v1229 = vpack.c.b16 %v1227, %v1227
        %vm1232 = vcmask 191616
        %1233 = vst.msk [vmem:[%s339] sm:$0xf] %vm1232, %v1228
        %1234 = vst.msk [vmem:[%s339 + $0x4] sm:$0xf] %vm1232, %v1229
        %v1235 = vld [vmem:[%s1048] sm:$0xff]
        %v1236 = vld [vmem:[%s1048 + $0x8] sm:$0xff]
        %v1237 = vrcp.pop %v1235
        %v1238 = vrcp.pop %v1236
        %v1239 = vld [vmem:[#allocation4] sm:$0xff]
        %v1240 = vld [vmem:[#allocation4 + $0x8] sm:$0xff]
        %1242 = vset.pattern.permute.xlu0 0
        %1243 = vperm.xlu0 %1242, %v1237
        %v1244 = vpop.permute.xlu0 %1243
        %1247 = vset.pattern.permute.xlu0 0
        %1248 = vperm.xlu0 %1247, %v1238
        %v1249 = vpop.permute.xlu0 %1248
        %v1251 = vmul.f32 %v1239, %v1244
        %v1252 = vmul.f32 %v1240, %v1249
        %v1253 = vpack.c.bf16 %v1252, %v1251
        %v1255 = vunpack.c.l.b16 %v1253
        %v1256 = vunpack.c.h.b16 %v1253
        %v1257 = vpack.c.b16 %v1255, %v1255
        %v1258 = vpack.c.b16 %v1256, %v1256
        %vm1261 = vcmask 257216
        %1262 = vst.msk [vmem:[%s339] sm:$0xf] %vm1261, %v1257
        %1263 = vst.msk [vmem:[%s339 + $0x4] sm:$0xf] %vm1261, %v1258
      $region44: #{_lambda_.20} parent=35 // pred_fallthru
        _
      %s1264 = smul.u32 2, %s21
      %p1265 = scmp.lt.s32.totalorder %s20, 1
      %s1266 = scalar_select %p1265, %s20, 1
      %p1267 = scmp.lt.s32.totalorder %s1264, 1
      %s1268 = scalar_select %p1267, %s1264, 1
      %s1269 = smul.addr %s1266, 2
      %s1270 = sadd.s32 %s1268, %s1269
      %s1271 = smul.addr %s1270, 4
      %s1272 = scalar_lea.vmem %s4, %s1271
      // Predicated region
      $region45: #{_lambda_.20} parent=35 // pred_check
        %p1273 = pneg %p166
      $region46: #{_lambda_.20} parent=35 // pred_check_branch
        %1275 = sbr.rel (%p1273) target = $region48
      $region47: #{_lambda_.20} parent=35 // pred_region
        %s1276 = smul.u32 2, %s21
      $region48: #{_lambda_.20} parent=35 // pred_fallthru
        _
    $region36: #{_lambda_.20} parent=5 // pred_fallthru
      _
    %p1277 = scmp.le.s32.totalorder 2, %s10
    // Predicated region
    $region49: #{_lambda_.20} parent=5 // pred_check
      %p1278 = pneg %p1277
    $region50: #{_lambda_.20} parent=5 // pred_check_branch
      %1280 = sbr.rel (%p1278) target = $region52
    $region51: #{_lambda_.20} parent=5 // pred_region
      %s1281 = ssub.s32 %s10, 2
      // Predicated region
      $region53: #{_lambda_.20} parent=51 // pred_check
        %p1282 = pneg %p172
      $region54: #{_lambda_.20} parent=51 // pred_check_branch
        %1284 = sbr.rel (%p1282) target = $region56
      $region55: #{_lambda_.20} parent=51 // pred_region
        %s1285 = smul.u32 2, %s24
        %p1286 = scmp.lt.s32.totalorder %s23, 1
        %s1287 = scalar_select %p1286, %s23, 1
        %p1288 = scmp.lt.s32.totalorder %s1285, 1
        %s1289 = scalar_select %p1288, %s1285, 1
        %s1290 = smul.addr %s1287, 2
        %s1291 = sadd.s32 %s1289, %s1290
        %s1292 = smul.addr %s1291, 4
        %s1293 = scalar_lea.vmem %s4, %s1292
      $region56: #{_lambda_.20} parent=51 // pred_fallthru
        _
    $region52: #{_lambda_.20} parent=5 // pred_fallthru
      _
  $region6: #{_lambda_.20} parent=0 // loop_footer
    %s14 = sadd.s32 1, %s10
  $region7: #{_lambda_.20} parent=0 // loop_footer_branch
    %9 = sbr.rel target = $region3
  $region8: #{_lambda_.20} parent=0 // loop_exit
    _

// kernel: _lambda_.34
$region0: #{_lambda_.34}
  #allocation0 [shape = 'u32[]', space=smem, size = 0x4, offset = 0x4, fixed_abs, tag = 'smem constant byte address 0x4 - core index']
  #allocation1 [shape = 'u32[144,128]{1,0:T(1,128)}', space=vmem, size = 0x12000, scoped, tag = 'internal scratch']
  #allocation2 [shape = 'f32[32,128]{1,0:T(8,128)}', space=vmem, size = 0x4000, scoped, tag = 'scratch operand']
  #allocation3 [shape = 'f32[32,128]{1,0:T(8,128)}', space=vmem, size = 0x4000, scoped, tag = 'scratch operand']
  %s0 = inlined_call_operand.vmem [shape: bf16[32,32], index: 0, kind: input, shape index: {}]
  %s1 = inlined_call_operand.vmem [shape: bf16[32,128], index: 1, kind: input, shape index: {}]
  %s2 = inlined_call_operand.vmem [shape: f32[1,128], index: 2, kind: input, shape index: {}]
  %s3 = inlined_call_operand.vmem [shape: bf16[32,128], index: 3, kind: output, shape index: {0}]
  %s4 = inlined_call_operand.vmem [shape: f32[32,1], index: 4, kind: output, shape index: {1}]
  %5 = xla_tuple %s3, %s4
  %s6 = sld [smem:[#allocation0]]
  $region38: #{_lambda_.34} parent=0
    _
  %s8 = ssub.s32 1, %s6
  %s9 = scalar_select 0, %s8, %s6
  // Predicated region
  $region2: #{_lambda_.34} parent=0 // pred_check
    _
  $region3: #{_lambda_.34} parent=0 // pred_check_branch
    %11 = sbr.rel (0) target = $region5
  $region4: #{_lambda_.34} parent=0 // pred_region
    _
  $region5: #{_lambda_.34} parent=0 // pred_fallthru
    _
  // Predicated region
  $region6: #{_lambda_.34} parent=0 // pred_check
    _
  $region7: #{_lambda_.34} parent=0 // pred_check_branch
    %13 = sbr.rel (0) target = $region9
  $region8: #{_lambda_.34} parent=0 // pred_region
    _
  $region9: #{_lambda_.34} parent=0 // pred_fallthru
    _
  // Predicated region
  $region10: #{_lambda_.34} parent=0 // pred_check
    _
  $region11: #{_lambda_.34} parent=0 // pred_check_branch
    %15 = sbr.rel (0) target = $region13
  $region12: #{_lambda_.34} parent=0 // pred_region
    _
  $region13: #{_lambda_.34} parent=0 // pred_fallthru
    _
  %p17 = scmp.eq.s32.totalorder 0, 0
  // Predicated region
  $region14: #{_lambda_.34} parent=0 // pred_check
    %p18 = pneg %p17
  $region15: #{_lambda_.34} parent=0 // pred_check_branch
    %20 = sbr.rel (%p18) target = $region17
  $region16: #{_lambda_.34} parent=0 // pred_region
    %21 = vst [vmem:[#allocation2] sm:$0xff] -inf
    %22 = vst [vmem:[#allocation2 + $0x8] sm:$0xff] -inf
    %23 = vst [vmem:[#allocation2 + $0x10] sm:$0xff] -inf
    %24 = vst [vmem:[#allocation2 + $0x18] sm:$0xff] -inf
    %25 = vst [vmem:[#allocation3] sm:$0xff] 0.0
    %26 = vst [vmem:[#allocation3 + $0x8] sm:$0xff] 0.0
    %27 = vst [vmem:[#allocation3 + $0x10] sm:$0xff] 0.0
    %28 = vst [vmem:[#allocation3 + $0x18] sm:$0xff] 0.0
  $region17: #{_lambda_.34} parent=0 // pred_fallthru
    _
  %v29 = vld [vmem:[%s0] sm:$0xf]
  %v30 = vld [vmem:[%s0 + $0x4] sm:$0xf]
  %v31 = vld [vmem:[%s0 + $0x8] sm:$0xf]
  %v32 = vld [vmem:[%s0 + $0xc] sm:$0xf]
  %v33 = vld [vmem:[%s1] sm:$0xf]
  %v34 = vld [vmem:[%s1 + $0x4] sm:$0xf]
  %v35 = vld [vmem:[%s1 + $0x8] sm:$0xf]
  %v36 = vld [vmem:[%s1 + $0xc] sm:$0xf]
  %v37 = vld [vmem:[%s2] sm:$0x1]
  %v39 = vlaneseq
  %v40 = vshrl.u32 %v39, 7
  %v41 = vsub.s32 0, %v40
  %v42 = vrot.slane %v37, %v41
  %v48 = vunpack.c.l.b16 %v29
  %v49 = vunpack.c.l.b16 %v30
  %v50 = vunpack.c.l.b16 %v31
  %v51 = vunpack.c.l.b16 %v32
  %v52 = vpack.c.b16 %v49, %v48
  %v53 = vpack.c.b16 %v51, %v50
  %v58 = vunpack.c.l.b16 %v33
  %v59 = vunpack.c.l.b16 %v34
  %v60 = vunpack.c.l.b16 %v35
  %v61 = vunpack.c.l.b16 %v36
  %v62 = vpack.c.b16 %v59, %v58
  %v63 = vpack.c.b16 %v61, %v60
  %vm66 = vcmask 261120
  %v68 = vsel %vm66, %v52, 0
  %v71 = vsel %vm66, %v53, 0
  %73 = vmatprep.subr.bf16.mxu0 0
  %74 = vmatpush1.bf16.msra.mxu0 %v62
  %75 = vmatprep.subr.bf16.mxu0 0
  %76 = vmatpush1.bf16.msra.mxu0 %v63
  %77 = vmatprep.subr.bf16.mxu0 0
  %78 = vmatpush1.bf16.msra.mxu0 0
  %79 = vmatprep.subr.bf16.mxu0 0
  %80 = vmatpush1.bf16.msra.mxu0 0
  %81 = vmatprep.subr.bf16.mxu0 0
  %82 = vmatpush1.bf16.msra.mxu0 0
  %83 = vmatprep.subr.bf16.mxu0 0
  %84 = vmatpush1.bf16.msra.mxu0 0
  %85 = vmatprep.subr.bf16.mxu0 0
  %86 = vmatpush1.bf16.msra.mxu0 0
  %87 = vmatprep.subr.bf16.mxu0 0
  %88 = vmatpush1.bf16.msra.mxu0 0
  %89 = vmatprep.subr.bf16.mxu0 0
  %90 = vmatpush1.bf16.msra.mxu0 0
  %91 = vmatprep.subr.bf16.mxu0 0
  %92 = vmatpush1.bf16.msra.mxu0 0
  %93 = vmatprep.subr.bf16.mxu0 0
  %94 = vmatpush1.bf16.msra.mxu0 0
  %95 = vmatprep.subr.bf16.mxu0 0
  %96 = vmatpush1.bf16.msra.mxu0 0
  %97 = vmatprep.subr.bf16.mxu0 0
  %98 = vmatpush1.bf16.msra.mxu0 0
  %99 = vmatprep.subr.bf16.mxu0 0
  %100 = vmatpush1.bf16.msra.mxu0 0
  %101 = vmatprep.subr.bf16.mxu0 0
  %102 = vmatpush1.bf16.msra.mxu0 0
  %103 = vmatprep.subr.bf16.mxu0 0
  %104 = vmatpush1.bf16.msra.mxu0 0
  %105 = vmatprep.mubr.bf16.mxu0 0
  %106 = vmatmul.mubr.bf16.gmra.mrb[0].mxu0 %v68
  %v107 = vpop.f32.mrb[0].mxu0
  %v108 = vadd.f32 %v42, %v107
  %v109 = vpop.f32.mrb[0].mxu0
  %v110 = vpop.f32.mrb[0].mxu0
  %v111 = vadd.f32 %v42, %v110
  %v112 = vpop.f32.mrb[0].mxu0
  %113 = vmatprep.mubr.bf16.mxu0 0
  %114 = vmatmul.mubr.bf16.gmra.mrb[0].mxu0 %v71
  %v115 = vpop.f32.mrb[0].mxu0
  %v116 = vadd.f32 %v42, %v115
  %v117 = vpop.f32.mrb[0].mxu0
  %v118 = vpop.f32.mrb[0].mxu0
  %v119 = vadd.f32 %v42, %v118
  %v120 = vpop.f32.mrb[0].mxu0
  %121 = vdwg.mxu0
  %v122 = vpack.c.bf16 %v111, %v108
  %v123 = vpack.c.bf16 %v119, %v116
  %v126 = vunpack.c.l.b16 %v122
  %v127 = vunpack.c.h.b16 %v122
  %v128 = vunpack.c.l.b16 %v123
  %v129 = vunpack.c.h.b16 %v123
  %v130 = vpack.c.b16 %v126, %v126
  %v131 = vpack.c.b16 %v127, %v127
  %v132 = vpack.c.b16 %v128, %v128
  %v133 = vpack.c.b16 %v129, %v129
  %138 = vst [vmem:[%s3] sm:$0xf] %v130
  %139 = vst [vmem:[%s3 + $0x4] sm:$0xf] %v131
  %140 = vst [vmem:[%s3 + $0x8] sm:$0xf] %v132
  %141 = vst [vmem:[%s3 + $0xc] sm:$0xf] %v133
  %v142 = vunpack.c.l.bf16 %v122
  %v143 = vunpack.c.h.bf16 %v122
  %v144 = vunpack.c.l.bf16 %v123
  %v145 = vunpack.c.h.bf16 %v123
  %v146 = vld [vmem:[#allocation2] sm:$0xff]
  %v147 = vld [vmem:[#allocation2 + $0x8] sm:$0xff]
  %v148 = vld [vmem:[#allocation2 + $0x10] sm:$0xff]
  %v149 = vld [vmem:[#allocation2 + $0x18] sm:$0xff]
  %150 = vmax.xlane.f32.xlu0 %v142
  %v151 = vpop.xlane.xlu0 %150
  %152 = vmax.xlane.f32.xlu0 %v143
  %v153 = vpop.xlane.xlu0 %152
  %154 = vmax.xlane.f32.xlu0 %v144
  %v155 = vpop.xlane.xlu0 %154
  %156 = vmax.xlane.f32.xlu0 %v145
  %v157 = vpop.xlane.xlu0 %156
  %v158 = vmax.f32 %v146, %v151
  %v159 = vmax.f32 %v147, %v153
  %v160 = vmax.f32 %v148, %v155
  %v161 = vmax.f32 %v149, %v157
  %v162 = vld [vmem:[#allocation3] sm:$0xff]
  %v163 = vld [vmem:[#allocation3 + $0x8] sm:$0xff]
  %v164 = vld [vmem:[#allocation3 + $0x10] sm:$0xff]
  %v165 = vld [vmem:[#allocation3 + $0x18] sm:$0xff]
  %v166 = vsub.f32 %v146, %v158
  %v167 = vsub.f32 %v147, %v159
  %v168 = vsub.f32 %v148, %v160
  %v169 = vsub.f32 %v149, %v161
  %v170 = vmul.f32 %v166, 1.442695
  %v171 = vpow.pop %v170
  %v172 = vmul.f32 %v167, 1.442695
  %v173 = vpow.pop %v172
  %v174 = vmul.f32 %v168, 1.442695
  %v175 = vpow.pop %v174
  %v176 = vmul.f32 %v169, 1.442695
  %v177 = vpow.pop %v176
  %v178 = vmul.f32 %v162, %v171
  %v179 = vmul.f32 %v163, %v173
  %v180 = vmul.f32 %v164, %v175
  %v181 = vmul.f32 %v165, %v177
  %183 = vset.pattern.permute.xlu0 0
  %184 = vperm.xlu0 %183, %v158
  %v185 = vpop.permute.xlu0 %184
  %188 = vset.pattern.permute.xlu0 0
  %189 = vperm.xlu0 %188, %v159
  %v190 = vpop.permute.xlu0 %189
  %193 = vset.pattern.permute.xlu0 0
  %194 = vperm.xlu0 %193, %v160
  %v195 = vpop.permute.xlu0 %194
  %198 = vset.pattern.permute.xlu0 0
  %199 = vperm.xlu0 %198, %v161
  %v200 = vpop.permute.xlu0 %199
  %v202 = vsub.f32 %v142, %v185
  %v203 = vsub.f32 %v143, %v190
  %v204 = vsub.f32 %v144, %v195
  %v205 = vsub.f32 %v145, %v200
  %v206 = vmul.f32 %v202, 1.442695
  %v207 = vpow.pop %v206
  %v208 = vmul.f32 %v203, 1.442695
  %v209 = vpow.pop %v208
  %v210 = vmul.f32 %v204, 1.442695
  %v211 = vpow.pop %v210
  %v212 = vmul.f32 %v205, 1.442695
  %v213 = vpow.pop %v212
  %214 = vadd.xlane.f32.xlu0 %v207
  %v215 = vpop.xlane.xlu0 %214
  %216 = vadd.xlane.f32.xlu0 %v209
  %v217 = vpop.xlane.xlu0 %216
  %218 = vadd.xlane.f32.xlu0 %v211
  %v219 = vpop.xlane.xlu0 %218
  %220 = vadd.xlane.f32.xlu0 %v213
  %v221 = vpop.xlane.xlu0 %220
  %v222 = vadd.f32 %v178, %v215
  %v223 = vadd.f32 %v179, %v217
  %v224 = vadd.f32 %v180, %v219
  %v225 = vadd.f32 %v181, %v221
  %226 = vst [vmem:[#allocation3] sm:$0xff] %v222
  %227 = vst [vmem:[#allocation3 + $0x8] sm:$0xff] %v223
  %228 = vst [vmem:[#allocation3 + $0x10] sm:$0xff] %v224
  %229 = vst [vmem:[#allocation3 + $0x18] sm:$0xff] %v225
  %230 = vst [vmem:[#allocation2] sm:$0xff] %v158
  %231 = vst [vmem:[#allocation2 + $0x8] sm:$0xff] %v159
  %232 = vst [vmem:[#allocation2 + $0x10] sm:$0xff] %v160
  %233 = vst [vmem:[#allocation2 + $0x18] sm:$0xff] %v161
  // Predicated region
  $region18: #{_lambda_.34} parent=0 // pred_check
    %p234 = pneg %p17
  $region19: #{_lambda_.34} parent=0 // pred_check_branch
    %236 = sbr.rel (%p234) target = $region21
  $region20: #{_lambda_.34} parent=0 // pred_region
    %v237 = vld [vmem:[#allocation2] sm:$0xff]
    %v238 = vld [vmem:[#allocation2 + $0x8] sm:$0xff]
    %v239 = vld [vmem:[#allocation2 + $0x10] sm:$0xff]
    %v240 = vld [vmem:[#allocation2 + $0x18] sm:$0xff]
    %v241 = vld [vmem:[#allocation3] sm:$0xff]
    %v242 = vld [vmem:[#allocation3 + $0x8] sm:$0xff]
    %v243 = vld [vmem:[#allocation3 + $0x10] sm:$0xff]
    %v244 = vld [vmem:[#allocation3 + $0x18] sm:$0xff]
    %v245 = vlog2.pop %v241
    %v246 = vmul.f32 %v245, 0.6931472
    %v247 = vlog2.pop %v242
    %v248 = vmul.f32 %v247, 0.6931472
    %v249 = vlog2.pop %v243
    %v250 = vmul.f32 %v249, 0.6931472
    %v251 = vlog2.pop %v244
    %v252 = vmul.f32 %v251, 0.6931472
    %v253 = vadd.f32 %v237, %v246
    %v254 = vadd.f32 %v238, %v248
    %v255 = vadd.f32 %v239, %v250
    %v256 = vadd.f32 %v240, %v252
    %vm257 = vcmask 7168
    %258 = vst.msk [vmem:[%s4] sm:$0xff] %vm257, %v253
    %259 = vst.msk [vmem:[%s4 + $0x8] sm:$0xff] %vm257, %v254
    %260 = vst.msk [vmem:[%s4 + $0x10] sm:$0xff] %vm257, %v255
    %261 = vst.msk [vmem:[%s4 + $0x18] sm:$0xff] %vm257, %v256
  $region21: #{_lambda_.34} parent=0 // pred_fallthru
    _
  // Predicated region
  $region22: #{_lambda_.34} parent=0 // pred_check
    _
  $region23: #{_lambda_.34} parent=0 // pred_check_branch
    %263 = sbr.rel (0) target = $region25
  $region24: #{_lambda_.34} parent=0 // pred_region
    _
  $region25: #{_lambda_.34} parent=0 // pred_fallthru
    _
  // Predicated region
  $region26: #{_lambda_.34} parent=0 // pred_check
    _
  $region27: #{_lambda_.34} parent=0 // pred_check_branch
    %265 = sbr.rel (0) target = $region29
  $region28: #{_lambda_.34} parent=0 // pred_region
    _
  $region29: #{_lambda_.34} parent=0 // pred_fallthru
    _
  // Predicated region
  $region30: #{_lambda_.34} parent=0 // pred_check
    _
  $region31: #{_lambda_.34} parent=0 // pred_check_branch
    %267 = sbr.rel (0) target = $region33
  $region32: #{_lambda_.34} parent=0 // pred_region
    _
  $region33: #{_lambda_.34} parent=0 // pred_fallthru
    _
  // Predicated region
  $region34: #{_lambda_.34} parent=0 // pred_check
    _
  $region35: #{_lambda_.34} parent=0 // pred_check_branch
    %269 = sbr.rel (0) target = $region37
  $region36: #{_lambda_.34} parent=0 // pred_region
    _
  $region37: #{_lambda_.34} parent=0 // pred_fallthru
    _

// kernel: _lambda_.35
$region0: #{_lambda_.35}
  #allocation0 [shape = 'u32[]', space=smem, size = 0x4, offset = 0x4, fixed_abs, tag = 'smem constant byte address 0x4 - core index']
  #allocation1 [shape = 'u32[144,128]{1,0:T(1,128)}', space=vmem, size = 0x12000, scoped, tag = 'internal scratch']
  %s0 = inlined_call_operand.vmem [shape: bf16[32,128], index: 0, kind: input, shape index: {}]
  %s1 = inlined_call_operand.vmem [shape: f32[32,1], index: 1, kind: input, shape index: {}]
  %s2 = inlined_call_operand.hbm [shape: f32[32,128], index: 2, kind: output, shape index: {}]
  %s3 = sld [smem:[#allocation0]]
  $region18: #{_lambda_.35} parent=0
    _
  %s5 = ssub.s32 1, %s3
  %s6 = scalar_select 0, %s5, %s3
  $region1: #{_lambda_.35} parent=0
    #allocation2 [shape = 'u8[16384]{0}', space=vmem, size = 0x4000, scoped, tag = 'output window, operand 0, single buffered']
    #allocation3 [shape = 's32[1]{0}', space=sflag, size = 0x4, scoped, tag = 'scoped memory for _lambda_.35']
    %7 = vsyncpa [#allocation3], 0
    // Predicated region
    $region2: #{_lambda_.35} parent=1 // pred_check
      _
    $region3: #{_lambda_.35} parent=1 // pred_check_branch
      %9 = sbr.rel (0) target = $region5
    $region4: #{_lambda_.35} parent=1 // pred_region
      _
    $region5: #{_lambda_.35} parent=1 // pred_fallthru
      _
    // Predicated region
    $region6: #{_lambda_.35} parent=1 // pred_check
      _
    $region7: #{_lambda_.35} parent=1 // pred_check_branch
      %11 = sbr.rel (0) target = $region9
    $region8: #{_lambda_.35} parent=1 // pred_region
      _
    $region9: #{_lambda_.35} parent=1 // pred_fallthru
      _
    %v12 = vld [vmem:[%s0] sm:$0xf]
    %v13 = vld [vmem:[%s0 + $0x4] sm:$0xf]
    %v14 = vld [vmem:[%s0 + $0x8] sm:$0xf]
    %v15 = vld [vmem:[%s0 + $0xc] sm:$0xf]
    %v16 = vunpack.c.l.bf16 %v12
    %v17 = vunpack.c.l.bf16 %v13
    %v18 = vunpack.c.l.bf16 %v14
    %v19 = vunpack.c.l.bf16 %v15
    %v20 = vld [vmem:[%s1] sm:$0xff]
    %v21 = vld [vmem:[%s1 + $0x8] sm:$0xff]
    %v22 = vld [vmem:[%s1 + $0x10] sm:$0xff]
    %v23 = vld [vmem:[%s1 + $0x18] sm:$0xff]
    %25 = vset.pattern.permute.xlu0 0
    %26 = vperm.xlu0 %25, %v20
    %v27 = vpop.permute.xlu0 %26
    %30 = vset.pattern.permute.xlu0 0
    %31 = vperm.xlu0 %30, %v21
    %v32 = vpop.permute.xlu0 %31
    %35 = vset.pattern.permute.xlu0 0
    %36 = vperm.xlu0 %35, %v22
    %v37 = vpop.permute.xlu0 %36
    %40 = vset.pattern.permute.xlu0 0
    %41 = vperm.xlu0 %40, %v23
    %v42 = vpop.permute.xlu0 %41
    %v44 = vsub.f32 %v16, %v27
    %v45 = vsub.f32 %v17, %v32
    %v46 = vsub.f32 %v18, %v37
    %v47 = vsub.f32 %v19, %v42
    %48 = vst [vmem:[#allocation2] sm:$0xff] %v44
    %49 = vst [vmem:[#allocation2 + $0x8] sm:$0xff] %v45
    %50 = vst [vmem:[#allocation2 + $0x10] sm:$0xff] %v46
    %51 = vst [vmem:[#allocation2 + $0x18] sm:$0xff] %v47
    // Predicated region
    $region10: #{_lambda_.35} parent=1 // pred_check
      _
    $region11: #{_lambda_.35} parent=1 // pred_check_branch
      %53 = sbr.rel (0) target = $region13
    $region12: #{_lambda_.35} parent=1 // pred_region
      %s55 = ssub.s32 512, 512
      %56 = vsyncadd [#allocation3], %s55
      %s57 = sshll.u32 [#allocation2], 4
      %s58 = int_to_ptr.vmem [resolvable:$true] %s57
      %63 = dma.vmem_to_hbm [thread:$0]  %s58, 512, %s2, [#allocation3], 128, 128, 8
    $region13: #{_lambda_.35} parent=1 // pred_fallthru
      _
    // Predicated region
    $region14: #{_lambda_.35} parent=1 // pred_check
      _
    $region15: #{_lambda_.35} parent=1 // pred_check_branch
      %65 = sbr.rel (0) target = $region17
    $region16: #{_lambda_.35} parent=1 // pred_region
      %66 = dma.done [#allocation3], 512
    $region17: #{_lambda_.35} parent=1 // pred_fallthru
      _
    %67 = vsyncpa [#allocation3], 1

// kernel: _lambda_.28
$region0: #{_lambda_.28}
  #allocation0 [shape = 'u32[]', space=smem, size = 0x4, offset = 0x4, fixed_abs, tag = 'smem constant byte address 0x4 - core index']
  #allocation1 [shape = 'u32[144,128]{1,0:T(1,128)}', space=vmem, size = 0x12000, scoped, tag = 'internal scratch']
  %s0 = inlined_call_operand.vmem [shape: bf16[32,32], index: 0, kind: input, shape index: {}]
  %s1 = inlined_call_operand.vmem [shape: f32[1,32], index: 1, kind: input, shape index: {}]
  %s2 = inlined_call_operand.vmem [shape: f32[1,32], index: 2, kind: input, shape index: {}, may-alias: {2,4}]
  %s3 = inlined_call_operand.vmem [shape: bf16[32,32], index: 3, kind: input, shape index: {}]
  %s4 = inlined_call_operand.vmem [shape: f32[1,32], index: 4, kind: input, shape index: {}, may-alias: {2,4}]
  %s5 = inlined_call_operand.vmem [shape: bf16[32,32], index: 5, kind: output, shape index: {}]
  %s6 = sld [smem:[#allocation0]]
  $region30: #{_lambda_.28} parent=0
    _
  %s8 = ssub.s32 1, %s6
  %s9 = scalar_select 0, %s8, %s6
  // Predicated region
  $region2: #{_lambda_.28} parent=0 // pred_check
    _
  $region3: #{_lambda_.28} parent=0 // pred_check_branch
    %11 = sbr.rel (0) target = $region5
  $region4: #{_lambda_.28} parent=0 // pred_region
    _
  $region5: #{_lambda_.28} parent=0 // pred_fallthru
    _
  // Predicated region
  $region6: #{_lambda_.28} parent=0 // pred_check
    _
  $region7: #{_lambda_.28} parent=0 // pred_check_branch
    %13 = sbr.rel (0) target = $region9
  $region8: #{_lambda_.28} parent=0 // pred_region
    _
  $region9: #{_lambda_.28} parent=0 // pred_fallthru
    _
  // Predicated region
  $region10: #{_lambda_.28} parent=0 // pred_check
    _
  $region11: #{_lambda_.28} parent=0 // pred_check_branch
    %15 = sbr.rel (0) target = $region13
  $region12: #{_lambda_.28} parent=0 // pred_region
    _
  $region13: #{_lambda_.28} parent=0 // pred_fallthru
    _
  // Predicated region
  $region14: #{_lambda_.28} parent=0 // pred_check
    _
  $region15: #{_lambda_.28} parent=0 // pred_check_branch
    %17 = sbr.rel (0) target = $region17
  $region16: #{_lambda_.28} parent=0 // pred_region
    _
  $region17: #{_lambda_.28} parent=0 // pred_fallthru
    _
  // Predicated region
  $region18: #{_lambda_.28} parent=0 // pred_check
    _
  $region19: #{_lambda_.28} parent=0 // pred_check_branch
    %19 = sbr.rel (0) target = $region21
  $region20: #{_lambda_.28} parent=0 // pred_region
    _
  $region21: #{_lambda_.28} parent=0 // pred_fallthru
    _
  %v21 = vld [vmem:[%s0] sm:$0xf]
  %v22 = vld [vmem:[%s0 + $0x4] sm:$0xf]
  %v23 = vld [vmem:[%s0 + $0x8] sm:$0xf]
  %v24 = vld [vmem:[%s0 + $0xc] sm:$0xf]
  %v25 = vld [vmem:[%s1] sm:$0x1]
  %v26 = vld [vmem:[%s2] sm:$0x1]
  %v27 = vunpack.c.l.bf16 %v21
  %v28 = vunpack.c.l.bf16 %v22
  %v29 = vunpack.c.l.bf16 %v23
  %v30 = vunpack.c.l.bf16 %v24
  %vm31 = vcmask 261120
  %v32 = vsel %vm31, %v27, 0.0
  %33 = vadd.xlane.f32.xlu0 %v32
  %v34 = vpop.xlane.xlu0 %33
  %v35 = vsel %vm31, %v28, 0.0
  %36 = vadd.xlane.f32.xlu0 %v35
  %v37 = vpop.xlane.xlu0 %36
  %v38 = vsel %vm31, %v29, 0.0
  %39 = vadd.xlane.f32.xlu0 %v38
  %v40 = vpop.xlane.xlu0 %39
  %v41 = vsel %vm31, %v30, 0.0
  %42 = vadd.xlane.f32.xlu0 %v41
  %v43 = vpop.xlane.xlu0 %42
  %v44 = vrcp.pop 32.0
  %v45 = vmul.f32 %v34, %v44
  %v46 = vmul.f32 %v37, %v44
  %v47 = vmul.f32 %v40, %v44
  %v48 = vmul.f32 %v43, %v44
  %v49 = vsub.f32 %v27, %v45
  %v50 = vsub.f32 %v28, %v46
  %v51 = vsub.f32 %v29, %v47
  %v52 = vsub.f32 %v30, %v48
  %v53 = vmul.f32 %v49, %v49
  %v54 = vmul.f32 %v50, %v50
  %v55 = vmul.f32 %v51, %v51
  %v56 = vmul.f32 %v52, %v52
  %v57 = vsel %vm31, %v53, 0.0
  %58 = vadd.xlane.f32.xlu0 %v57
  %v59 = vpop.xlane.xlu0 %58
  %v60 = vsel %vm31, %v54, 0.0
  %61 = vadd.xlane.f32.xlu0 %v60
  %v62 = vpop.xlane.xlu0 %61
  %v63 = vsel %vm31, %v55, 0.0
  %64 = vadd.xlane.f32.xlu0 %v63
  %v65 = vpop.xlane.xlu0 %64
  %v66 = vsel %vm31, %v56, 0.0
  %67 = vadd.xlane.f32.xlu0 %v66
  %v68 = vpop.xlane.xlu0 %67
  %v69 = vmul.f32 %v59, %v44
  %v70 = vmul.f32 %v62, %v44
  %v71 = vmul.f32 %v65, %v44
  %v72 = vmul.f32 %v68, %v44
  %v73 = vadd.f32 %v69, 1e-12
  %v74 = vadd.f32 %v70, 1e-12
  %v75 = vadd.f32 %v71, 1e-12
  %v76 = vadd.f32 %v72, 1e-12
  %v77 = vrsqrt.pop %v73
  %v78 = vrsqrt.pop %v74
  %v79 = vrsqrt.pop %v75
  %v80 = vrsqrt.pop %v76
  %v81 = vmul.f32 %v49, %v77
  %v82 = vmul.f32 %v50, %v78
  %v83 = vmul.f32 %v51, %v79
  %v84 = vmul.f32 %v52, %v80
  %v86 = vlaneseq
  %v87 = vshrl.u32 %v86, 7
  %v88 = vsub.s32 0, %v87
  %v89 = vrot.slane %v25, %v88
  %v91 = vmul.f32 %v81, %v89
  %v92 = vmul.f32 %v82, %v89
  %v93 = vmul.f32 %v83, %v89
  %v94 = vmul.f32 %v84, %v89
  %v96 = vlaneseq
  %v97 = vshrl.u32 %v96, 7
  %v98 = vsub.s32 0, %v97
  %v99 = vrot.slane %v26, %v98
  %v101 = vadd.f32 %v91, %v99
  %v102 = vadd.f32 %v92, %v99
  %v103 = vadd.f32 %v93, %v99
  %v104 = vadd.f32 %v94, %v99
  %v105 = vpack.c.bf16 %v102, %v101
  %v106 = vpack.c.bf16 %v104, %v103
  %v107 = vld [vmem:[%s3] sm:$0xf]
  %v108 = vld [vmem:[%s3 + $0x4] sm:$0xf]
  %v109 = vld [vmem:[%s3 + $0x8] sm:$0xf]
  %v110 = vld [vmem:[%s3 + $0xc] sm:$0xf]
  %v111 = vld [vmem:[%s4] sm:$0x1]
  %v113 = vlaneseq
  %v114 = vshrl.u32 %v113, 7
  %v115 = vsub.s32 0, %v114
  %v116 = vrot.slane %v111, %v115
  %v122 = vunpack.c.l.b16 %v107
  %v123 = vunpack.c.l.b16 %v108
  %v124 = vunpack.c.l.b16 %v109
  %v125 = vunpack.c.l.b16 %v110
  %v126 = vpack.c.b16 %v123, %v122
  %v127 = vpack.c.b16 %v125, %v124
  %v131 = vsel %vm31, %v105, 0
  %v134 = vsel %vm31, %v106, 0
  %136 = vmatprep.subr.bf16.mxu0 0
  %137 = vmatpush1.bf16.msra.mxu0 %v126
  %138 = vmatprep.subr.bf16.mxu0 0
  %139 = vmatpush1.bf16.msra.mxu0 %v127
  %140 = vmatprep.subr.bf16.mxu0 0
  %141 = vmatpush1.bf16.msra.mxu0 0
  %142 = vmatprep.subr.bf16.mxu0 0
  %143 = vmatpush1.bf16.msra.mxu0 0
  %144 = vmatprep.subr.bf16.mxu0 0
  %145 = vmatpush1.bf16.msra.mxu0 0
  %146 = vmatprep.subr.bf16.mxu0 0
  %147 = vmatpush1.bf16.msra.mxu0 0
  %148 = vmatprep.subr.bf16.mxu0 0
  %149 = vmatpush1.bf16.msra.mxu0 0
  %150 = vmatprep.subr.bf16.mxu0 0
  %151 = vmatpush1.bf16.msra.mxu0 0
  %152 = vmatprep.subr.bf16.mxu0 0
  %153 = vmatpush1.bf16.msra.mxu0 0
  %154 = vmatprep.subr.bf16.mxu0 0
  %155 = vmatpush1.bf16.msra.mxu0 0
  %156 = vmatprep.subr.bf16.mxu0 0
  %157 = vmatpush1.bf16.msra.mxu0 0
  %158 = vmatprep.subr.bf16.mxu0 0
  %159 = vmatpush1.bf16.msra.mxu0 0
  %160 = vmatprep.subr.bf16.mxu0 0
  %161 = vmatpush1.bf16.msra.mxu0 0
  %162 = vmatprep.subr.bf16.mxu0 0
  %163 = vmatpush1.bf16.msra.mxu0 0
  %164 = vmatprep.subr.bf16.mxu0 0
  %165 = vmatpush1.bf16.msra.mxu0 0
  %166 = vmatprep.subr.bf16.mxu0 0
  %167 = vmatpush1.bf16.msra.mxu0 0
  %168 = vmatprep.mubr.bf16.mxu0 0
  %169 = vmatmul.mubr.bf16.gmra.mrb[0].mxu0 %v131
  %v170 = vpop.f32.mrb[0].mxu0
  %v171 = vadd.f32 %v116, %v170
  %v172 = vpop.f32.mrb[0].mxu0
  %v173 = vpop.f32.mrb[0].mxu0
  %v174 = vadd.f32 %v116, %v173
  %v175 = vpop.f32.mrb[0].mxu0
  %176 = vmatprep.mubr.bf16.mxu0 0
  %177 = vmatmul.mubr.bf16.gmra.mrb[0].mxu0 %v134
  %v178 = vpop.f32.mrb[0].mxu0
  %v179 = vadd.f32 %v116, %v178
  %v180 = vpop.f32.mrb[0].mxu0
  %v181 = vpop.f32.mrb[0].mxu0
  %v182 = vadd.f32 %v116, %v181
  %v183 = vpop.f32.mrb[0].mxu0
  %184 = vdwg.mxu0
  %v185 = vmul.f32 %v171, 0.35355338
  %v186 = vmul.f32 %v174, 0.35355338
  %v187 = vmul.f32 %v179, 0.35355338
  %v188 = vmul.f32 %v182, 0.35355338
  %v189 = vpack.c.bf16 %v186, %v185
  %v190 = vpack.c.bf16 %v188, %v187
  %v193 = vunpack.c.l.b16 %v189
  %v194 = vunpack.c.h.b16 %v189
  %v195 = vunpack.c.l.b16 %v190
  %v196 = vunpack.c.h.b16 %v190
  %v197 = vpack.c.b16 %v193, %v193
  %v198 = vpack.c.b16 %v194, %v194
  %v199 = vpack.c.b16 %v195, %v195
  %v200 = vpack.c.b16 %v196, %v196
  %vm205 = vcmask 257024
  %206 = vst.msk [vmem:[%s5] sm:$0xf] %vm205, %v197
  %207 = vst.msk [vmem:[%s5 + $0x4] sm:$0xf] %vm205, %v198
  %208 = vst.msk [vmem:[%s5 + $0x8] sm:$0xf] %vm205, %v199
  %209 = vst.msk [vmem:[%s5 + $0xc] sm:$0xf] %vm205, %v200
  // Predicated region
  $region22: #{_lambda_.28} parent=0 // pred_check
    _
  $region23: #{_lambda_.28} parent=0 // pred_check_branch
    %211 = sbr.rel (0) target = $region25
  $region24: #{_lambda_.28} parent=0 // pred_region
    _
  $region25: #{_lambda_.28} parent=0 // pred_fallthru
    _
  // Predicated region
  $region26: #{_lambda_.28} parent=0 // pred_check
    _
  $region27: #{_lambda_.28} parent=0 // pred_check_branch
    %213 = sbr.rel (0) target = $region29
  $region28: #{_lambda_.28} parent=0 // pred_region
    _
  $region29: #{_lambda_.28} parent=0 // pred_fallthru
    _

// kernel: _lambda_.29
$region0: #{_lambda_.29}
  #allocation0 [shape = 'u32[]', space=smem, size = 0x4, offset = 0x4, fixed_abs, tag = 'smem constant byte address 0x4 - core index']
  #allocation1 [shape = 'u32[144,128]{1,0:T(1,128)}', space=vmem, size = 0x12000, scoped, tag = 'internal scratch']
  %s0 = inlined_call_operand.vmem [shape: bf16[32,32], index: 0, kind: input, shape index: {}]
  %s1 = inlined_call_operand.vmem [shape: bf16[32,64], index: 1, kind: input, shape index: {}]
  %s2 = inlined_call_operand.vmem [shape: f32[1,64], index: 2, kind: input, shape index: {}]
  %s3 = inlined_call_operand.vmem [shape: bf16[32,32], index: 3, kind: output, shape index: {0}]
  %s4 = inlined_call_operand.vmem [shape: bf16[32,32], index: 4, kind: output, shape index: {1}]
  %5 = xla_tuple %s3, %s4
  %s6 = sld [smem:[#allocation0]]
  $region30: #{_lambda_.29} parent=0
    _
  %s8 = ssub.s32 1, %s6
  %s9 = scalar_select 0, %s8, %s6
  // Predicated region
  $region2: #{_lambda_.29} parent=0 // pred_check
    _
  $region3: #{_lambda_.29} parent=0 // pred_check_branch
    %11 = sbr.rel (0) target = $region5
  $region4: #{_lambda_.29} parent=0 // pred_region
    _
  $region5: #{_lambda_.29} parent=0 // pred_fallthru
    _
  // Predicated region
  $region6: #{_lambda_.29} parent=0 // pred_check
    _
  $region7: #{_lambda_.29} parent=0 // pred_check_branch
    %13 = sbr.rel (0) target = $region9
  $region8: #{_lambda_.29} parent=0 // pred_region
    _
  $region9: #{_lambda_.29} parent=0 // pred_fallthru
    _
  // Predicated region
  $region10: #{_lambda_.29} parent=0 // pred_check
    _
  $region11: #{_lambda_.29} parent=0 // pred_check_branch
    %15 = sbr.rel (0) target = $region13
  $region12: #{_lambda_.29} parent=0 // pred_region
    _
  $region13: #{_lambda_.29} parent=0 // pred_fallthru
    _
  %v17 = vld [vmem:[%s0] sm:$0xf]
  %v18 = vld [vmem:[%s0 + $0x4] sm:$0xf]
  %v19 = vld [vmem:[%s0 + $0x8] sm:$0xf]
  %v20 = vld [vmem:[%s0 + $0xc] sm:$0xf]
  %v21 = vld [vmem:[%s1] sm:$0xf]
  %v22 = vld [vmem:[%s1 + $0x4] sm:$0xf]
  %v23 = vld [vmem:[%s1 + $0x8] sm:$0xf]
  %v24 = vld [vmem:[%s1 + $0xc] sm:$0xf]
  %v25 = vld [vmem:[%s2] sm:$0x1]
  %v27 = vlaneseq
  %v28 = vshrl.u32 %v27, 7
  %v29 = vsub.s32 0, %v28
  %v30 = vrot.slane %v25, %v29
  %v36 = vunpack.c.l.b16 %v17
  %v37 = vunpack.c.l.b16 %v18
  %v38 = vunpack.c.l.b16 %v19
  %v39 = vunpack.c.l.b16 %v20
  %v40 = vpack.c.b16 %v37, %v36
  %v41 = vpack.c.b16 %v39, %v38
  %v46 = vunpack.c.l.b16 %v21
  %v47 = vunpack.c.l.b16 %v22
  %v48 = vunpack.c.l.b16 %v23
  %v49 = vunpack.c.l.b16 %v24
  %v50 = vpack.c.b16 %v47, %v46
  %v51 = vpack.c.b16 %v49, %v48
  %vm54 = vcmask 261120
  %v56 = vsel %vm54, %v40, 0
  %v59 = vsel %vm54, %v41, 0
  %61 = vmatprep.subr.bf16.mxu0 0
  %62 = vmatpush1.bf16.msra.mxu0 %v50
  %63 = vmatprep.subr.bf16.mxu0 0
  %64 = vmatpush1.bf16.msra.mxu0 %v51
  %65 = vmatprep.subr.bf16.mxu0 0
  %66 = vmatpush1.bf16.msra.mxu0 0
  %67 = vmatprep.subr.bf16.mxu0 0
  %68 = vmatpush1.bf16.msra.mxu0 0
  %69 = vmatprep.subr.bf16.mxu0 0
  %70 = vmatpush1.bf16.msra.mxu0 0
  %71 = vmatprep.subr.bf16.mxu0 0
  %72 = vmatpush1.bf16.msra.mxu0 0
  %73 = vmatprep.subr.bf16.mxu0 0
  %74 = vmatpush1.bf16.msra.mxu0 0
  %75 = vmatprep.subr.bf16.mxu0 0
  %76 = vmatpush1.bf16.msra.mxu0 0
  %77 = vmatprep.subr.bf16.mxu0 0
  %78 = vmatpush1.bf16.msra.mxu0 0
  %79 = vmatprep.subr.bf16.mxu0 0
  %80 = vmatpush1.bf16.msra.mxu0 0
  %81 = vmatprep.subr.bf16.mxu0 0
  %82 = vmatpush1.bf16.msra.mxu0 0
  %83 = vmatprep.subr.bf16.mxu0 0
  %84 = vmatpush1.bf16.msra.mxu0 0
  %85 = vmatprep.subr.bf16.mxu0 0
  %86 = vmatpush1.bf16.msra.mxu0 0
  %87 = vmatprep.subr.bf16.mxu0 0
  %88 = vmatpush1.bf16.msra.mxu0 0
  %89 = vmatprep.subr.bf16.mxu0 0
  %90 = vmatpush1.bf16.msra.mxu0 0
  %91 = vmatprep.subr.bf16.mxu0 0
  %92 = vmatpush1.bf16.msra.mxu0 0
  %93 = vmatprep.mubr.bf16.mxu0 0
  %94 = vmatmul.mubr.bf16.gmra.mrb[0].mxu0 %v56
  %v95 = vpop.f32.mrb[0].mxu0
  %v96 = vadd.f32 %v30, %v95
  %v97 = vpop.f32.mrb[0].mxu0
  %v98 = vpop.f32.mrb[0].mxu0
  %v99 = vadd.f32 %v30, %v98
  %v100 = vpop.f32.mrb[0].mxu0
  %101 = vmatprep.mubr.bf16.mxu0 0
  %102 = vmatmul.mubr.bf16.gmra.mrb[0].mxu0 %v59
  %v103 = vpop.f32.mrb[0].mxu0
  %v104 = vadd.f32 %v30, %v103
  %v105 = vpop.f32.mrb[0].mxu0
  %v106 = vpop.f32.mrb[0].mxu0
  %v107 = vadd.f32 %v30, %v106
  %v108 = vpop.f32.mrb[0].mxu0
  %109 = vdwg.mxu0
  %v110 = vpack.c.bf16 %v99, %v96
  %v111 = vpack.c.bf16 %v107, %v104
  %v114 = vunpack.c.l.b16 %v110
  %v115 = vunpack.c.h.b16 %v110
  %v116 = vunpack.c.l.b16 %v111
  %v117 = vunpack.c.h.b16 %v111
  %v118 = vpack.c.b16 %v114, %v114
  %v119 = vpack.c.b16 %v115, %v115
  %v120 = vpack.c.b16 %v116, %v116
  %v121 = vpack.c.b16 %v117, %v117
  %vm126 = vcmask 257024
  %127 = vst.msk [vmem:[%s3] sm:$0xf] %vm126, %v118
  %128 = vst.msk [vmem:[%s3 + $0x4] sm:$0xf] %vm126, %v119
  %129 = vst.msk [vmem:[%s3 + $0x8] sm:$0xf] %vm126, %v120
  %130 = vst.msk [vmem:[%s3 + $0xc] sm:$0xf] %vm126, %v121
  %131 = vrot.lane.b32.xlu0 %v118, 96
  %v132 = vpop.permute.xlu0 %131
  %133 = vrot.lane.b32.xlu0 %v119, 96
  %v134 = vpop.permute.xlu0 %133
  %135 = vrot.lane.b32.xlu0 %v120, 96
  %v136 = vpop.permute.xlu0 %135
  %137 = vrot.lane.b32.xlu0 %v121, 96
  %v138 = vpop.permute.xlu0 %137
  %143 = vst.msk [vmem:[%s4] sm:$0xf] %vm126, %v132
  %144 = vst.msk [vmem:[%s4 + $0x4] sm:$0xf] %vm126, %v134
  %145 = vst.msk [vmem:[%s4 + $0x8] sm:$0xf] %vm126, %v136
  %146 = vst.msk [vmem:[%s4 + $0xc] sm:$0xf] %vm126, %v138
  // Predicated region
  $region14: #{_lambda_.29} parent=0 // pred_check
    _
  $region15: #{_lambda_.29} parent=0 // pred_check_branch
    %148 = sbr.rel (0) target = $region17
  $region16: #{_lambda_.29} parent=0 // pred_region
    _
  $region17: #{_lambda_.29} parent=0 // pred_fallthru
    _
  // Predicated region
  $region18: #{_lambda_.29} parent=0 // pred_check
    _
  $region19: #{_lambda_.29} parent=0 // pred_check_branch
    %150 = sbr.rel (0) target = $region21
  $region20: #{_lambda_.29} parent=0 // pred_region
    _
  $region21: #{_lambda_.29} parent=0 // pred_fallthru
    _
  // Predicated region
  $region22: #{_lambda_.29} parent=0 // pred_check
    _
  $region23: #{_lambda_.29} parent=0 // pred_check_branch
    %152 = sbr.rel (0) target = $region25
  $region24: #{_lambda_.29} parent=0 // pred_region
    _
  $region25: #{_lambda_.29} parent=0 // pred_fallthru
    _
  // Predicated region
  $region26: #{_lambda_.29} parent=0 // pred_check
    _
  $region27: #{_lambda_.29} parent=0 // pred_check_branch
    %154 = sbr.rel (0) target = $region29
  $region28: #{_lambda_.29} parent=0 // pred_region
    _
  $region29: #{_lambda_.29} parent=0 // pred_fallthru
    _

</llo_original>
